<compile_context>
chip_gen: v5e
topology: v5e:2x2
jax: 0.10.0
libtpu: 0.0.40
codegen_flags: <defaults>
</compile_context>

<pallas_src>
import functools

import jax
import jax.numpy as jnp
import numpy as np
from jax.experimental import pallas as pl
from jax.experimental.pallas import tpu as pltpu


def _fourier_pe_kernel(x_ref, tbl_ref, o_ref, *, in_dim):
    # x_ref:   (tm, D)              input rows
    # tbl_ref: (tbl_rows, out_dim)  constant table:
    #            rows 0..D-1 : per-coordinate scale pattern (1.0 on the passthrough
    #                          lane, freq bands on that coord's sin/cos lanes)
    #            row  D      : phase row (pi/2 on cos lanes, 0 elsewhere)
    #            row  D+1    : passthrough-lane mask (1.0 where lane < D)
    # o_ref:   (tm, out_dim)        output tile (unpadded width)
    x = x_ref[...]
    tbl = tbl_ref[...]

    # Dense argument slab: args[:, j] = x[:, coord(j)] * scale(j).
    # Exactly one non-zero term per lane -> exact f32 arithmetic.  VPU only.
    args = x[:, 0:1] * tbl[0:1, :]
    for d in range(1, in_dim):
        args = args + x[:, d:d + 1] * tbl[d:d + 1, :]

    # Single transcendental: cos lanes carry a +pi/2 phase -> sin(args + phase).
    phased = args + tbl[in_dim:in_dim + 1, :]
    pass_mask = tbl[in_dim + 1:in_dim + 2, :] > 0.5
    out = jnp.where(pass_mask, args, jnp.sin(phased))
    o_ref[...] = out.astype(o_ref.dtype)


def fourier_positional_encoding(xyz, *, num_bands=16, max_freq=10.0, tm=4096):
    """xyz: (B, N, D) float32 -> (B, N, D + D*2*num_bands).

    tm: row-tile size (8-aligned).  VMEM cost ~ 2 KiB/row double buffered
    (input and output tiles both lane-pad to 128 in VMEM): tm=4096 ~ 8 MiB,
    tm=8192 ~ 16 MiB, tm=16384 ~ 32 MiB.  Keep tm <= 8192 on v7x (64 MiB
    physical VMEM); 8192-16384 is fine on v5e/v6e with the raised limit below.
    """
    B, N, D = xyz.shape
    NB = num_bands
    out_dim = D + 2 * D * NB
    rows = B * N

    tm_eff = max(8, min(tm, rows))
    tm_eff = (tm_eff // 8) * 8                     # keep the row tile 8-aligned
    grid = (pl.cdiv(rows, tm_eff),)                # ragged last block is masked

    x2 = xyz.reshape(rows, D)

    # Constant table, built once at trace time with the exact torch freq bands:
    # freq_bands = 2 ** linspace(0, log2(max_freq), num_bands)
    tbl_rows = 8 * pl.cdiv(D + 2, 8)               # sublane pad to 8
    freq = (2.0 ** np.linspace(0.0, np.log2(max_freq), NB)).astype(np.float32)
    tbl_np = np.zeros((tbl_rows, out_dim), np.float32)
    half_pi = np.float32(np.pi / 2.0)
    for d in range(D):
        tbl_np[d, d] = 1.0                         # passthrough lane d
        base = D + d * 2 * NB
        tbl_np[d, base:base + NB] = freq           # sin bands for coord d
        tbl_np[d, base + NB:base + 2 * NB] = freq  # cos bands for coord d
        tbl_np[D, base + NB:base + 2 * NB] = half_pi   # phase row: cos lanes
    tbl_np[D + 1, :D] = 1.0                        # passthrough mask
    tbl = jnp.asarray(tbl_np)

    kernel = functools.partial(_fourier_pe_kernel, in_dim=D)

    cost = pl.CostEstimate(
        flops=rows * out_dim * 2 * D,
        transcendentals=rows * (out_dim - D),
        bytes_accessed=4 * rows * (D + out_dim),
    )

    # Scoped-VMEM sizing from the corrected accounting (double-buffered input +
    # output tiles, each lane-padded to 128, plus the tiny constant table).
    vmem_needed = 2 * 2 * tm_eff * 128 * 4 + 2 * tbl_rows * 128 * 4
    vmem_limit = min(max(32 * 1024 * 1024, (vmem_needed * 5) // 4),
                     56 * 1024 * 1024)

    out = pl.pallas_call(
        kernel,
        out_shape=jax.ShapeDtypeStruct((rows, out_dim), xyz.dtype),
        grid_spec=pltpu.PrefetchScalarGridSpec(
            num_scalar_prefetch=0,
            grid=grid,
            in_specs=[
                pl.BlockSpec((tm_eff, D), lambda i: (i, 0)),
                pl.BlockSpec((tbl_rows, out_dim), lambda i: (0, 0)),
            ],
            out_specs=pl.BlockSpec((tm_eff, out_dim), lambda i: (i, 0)),
        ),
        compiler_params=pltpu.CompilerParams(
            dimension_semantics=("parallel",),
            vmem_limit_bytes=int(vmem_limit)),
        cost_estimate=cost,
    )(x2, tbl)

    return out.reshape(B, N, out_dim)


def _reference(xyz, num_bands=16, max_freq=10.0):
    # Pure-JAX mirror of the PyTorch forward.
    freq = jnp.asarray(
        (2.0 ** np.linspace(0.0, np.log2(max_freq), num_bands)).astype(np.float32))
    xb = xyz[..., None] * freq                                  # (B, N, D, NB)
    ff = jnp.concatenate([jnp.sin(xb), jnp.cos(xb)], axis=-1)   # (B, N, D, 2NB)
    ff = ff.reshape(xyz.shape[0], xyz.shape[1], -1)
    return jnp.concatenate([xyz, ff], axis=-1)


if __name__ == "__main__":
    # Module "parameters" (deterministic from __init__): in_dim=3, num_bands=16,
    # max_freq=10.0.  Small ModelNet-like point cloud: B=2, N=1024 points.
    in_dim, num_bands, max_freq = 3, 16, 10.0
    B, N = 2, 1024

    key = jax.random.PRNGKey(0)
    xyz = jax.random.normal(key, (B, N, in_dim), dtype=jnp.float32)

    # tm=256 -> grid=(8,): several tiles per TensorCore even on v7x's 2-TC chip.
    out = fourier_positional_encoding(xyz, num_bands=num_bands,
                                      max_freq=max_freq, tm=256)
    out = jax.block_until_ready(out)

    ref = _reference(xyz, num_bands=num_bands, max_freq=max_freq)
    assert out.shape == (B, N, in_dim + in_dim * 2 * num_bands)
    np.testing.assert_allclose(np.asarray(out), np.asarray(ref),
                               rtol=1e-5, atol=1e-5)
    print("KERNEL_OK")
</pallas_src>

<mosaic_0001>
module attributes {stable_mosaic.version = 11 : i64} {
  func.func @_fourier_pe_kernel(%arg0: i32, %arg1: memref<256x3xf32, #tpu.memory_space<vmem>>, %arg2: memref<8x99xf32, #tpu.memory_space<vmem>>, %arg3: memref<256x99xf32, #tpu.memory_space<vmem>>) attributes {dimension_semantics = [#tpu.dimension_semantics<parallel>], iteration_bounds = array<i64: 8>, scalar_prefetch = 0 : i64, scratch_operands = 0 : i64, tpu.core_type = #tpu.core_type<tc>, window_params = [{transform_indices = @transform_0, window_bounds = array<i64: 256, 3>}, {pipeline_mode = #tpu.pipeline_mode<synchronous>, transform_indices = @transform_1, window_bounds = array<i64: 8, 99>}, {transform_indices = @transform_2, window_bounds = array<i64: 256, 99>}]} {
    %c0 = arith.constant 0 : index
    %c0_0 = arith.constant 0 : index
    %0 = vector.load %arg1[%c0, %c0_0] : memref<256x3xf32, #tpu.memory_space<vmem>>, vector<256x3xf32>
    %c0_1 = arith.constant 0 : index
    %c0_2 = arith.constant 0 : index
    %1 = vector.load %arg2[%c0_1, %c0_2] : memref<8x99xf32, #tpu.memory_space<vmem>>, vector<8x99xf32>
    %2 = vector.extract_strided_slice %0 {offsets = [0, 0], sizes = [256, 1], strides = [1, 1]} : vector<256x3xf32> to vector<256x1xf32>
    %3 = vector.extract_strided_slice %1 {offsets = [0, 0], sizes = [1, 99], strides = [1, 1]} : vector<8x99xf32> to vector<1x99xf32>
    %4 = vector.broadcast %2 : vector<256x1xf32> to vector<256x99xf32>
    %5 = vector.broadcast %3 : vector<1x99xf32> to vector<256x99xf32>
    %6 = arith.mulf %4, %5 : vector<256x99xf32>
    %7 = vector.extract_strided_slice %0 {offsets = [0, 1], sizes = [256, 1], strides = [1, 1]} : vector<256x3xf32> to vector<256x1xf32>
    %8 = vector.extract_strided_slice %1 {offsets = [1, 0], sizes = [1, 99], strides = [1, 1]} : vector<8x99xf32> to vector<1x99xf32>
    %9 = vector.broadcast %7 : vector<256x1xf32> to vector<256x99xf32>
    %10 = vector.broadcast %8 : vector<1x99xf32> to vector<256x99xf32>
    %11 = arith.mulf %9, %10 : vector<256x99xf32>
    %12 = arith.addf %6, %11 : vector<256x99xf32>
    %13 = vector.extract_strided_slice %0 {offsets = [0, 2], sizes = [256, 1], strides = [1, 1]} : vector<256x3xf32> to vector<256x1xf32>
    %14 = vector.extract_strided_slice %1 {offsets = [2, 0], sizes = [1, 99], strides = [1, 1]} : vector<8x99xf32> to vector<1x99xf32>
    %15 = vector.broadcast %13 : vector<256x1xf32> to vector<256x99xf32>
    %16 = vector.broadcast %14 : vector<1x99xf32> to vector<256x99xf32>
    %17 = arith.mulf %15, %16 : vector<256x99xf32>
    %18 = arith.addf %12, %17 : vector<256x99xf32>
    %19 = vector.extract_strided_slice %1 {offsets = [3, 0], sizes = [1, 99], strides = [1, 1]} : vector<8x99xf32> to vector<1x99xf32>
    %20 = vector.broadcast %19 : vector<1x99xf32> to vector<256x99xf32>
    %21 = arith.addf %18, %20 : vector<256x99xf32>
    %22 = vector.extract_strided_slice %1 {offsets = [4, 0], sizes = [1, 99], strides = [1, 1]} : vector<8x99xf32> to vector<1x99xf32>
    %cst = arith.constant 5.000000e-01 : f32
    %23 = vector.broadcast %cst : f32 to vector<1x99xf32>
    %24 = arith.cmpf ogt, %22, %23 : vector<1x99xf32>
    %25 = math.sin %21 : vector<256x99xf32>
    %26 = vector.shape_cast %24 : vector<1x99xi1> to vector<1x99xi1>
    %27 = vector.broadcast %26 : vector<1x99xi1> to vector<256x99xi1>
    %28 = arith.select %27, %18, %25 : vector<256x99xi1>, vector<256x99xf32>
    %c0_3 = arith.constant 0 : index
    %c0_4 = arith.constant 0 : index
    %29 = vector.load %arg3[%c0_3, %c0_4] : memref<256x99xf32, #tpu.memory_space<vmem>>, vector<256x99xf32>
    tpu.vector_store %arg3[%c0_3, %c0_4], %28 {strides = array<i32>} : memref<256x99xf32, #tpu.memory_space<vmem>>, vector<256x99xf32>,
    return
  }
  func.func @transform_0(%arg0: i32) -> (i32, i32) {
    %c0_i32 = arith.constant 0 : i32
    %c0_i32_0 = arith.constant 0 : i32
    return %arg0, %c0_i32 : i32, i32
  }
  func.func @transform_1(%arg0: i32) -> (i32, i32) {
    %c0_i32 = arith.constant 0 : i32
    %c0_i32_0 = arith.constant 0 : i32
    %c0_i32_1 = arith.constant 0 : i32
    return %c0_i32, %c0_i32_0 : i32, i32
  }
  func.func @transform_2(%arg0: i32) -> (i32, i32) {
    %c0_i32 = arith.constant 0 : i32
    %c0_i32_0 = arith.constant 0 : i32
    return %arg0, %c0_i32 : i32, i32
  }
}

</mosaic_0001>

<llo_original>
// kernel: tpu_custom_call.1
$region0: #{tpu_custom_call.1}
  #allocation0 [shape = 'u32[]', space=smem, size = 0x4, offset = 0x4, fixed_abs, tag = 'smem constant byte address 0x4 - core index']
  #allocation1 [shape = 'u32[72,128]{1,0:T(1,128)}', space=vmem, size = 0x9000, scoped, tag = 'internal scratch']
  %s0 = inlined_call_operand.vmem [shape: f32[2048,3], index: 0, kind: input, shape index: {}]
  %s1 = inlined_call_operand.vmem [shape: f32[8,99], index: 1, kind: input, shape index: {}]
  %s2 = inlined_call_operand.vmem [shape: f32[2048,99], index: 2, kind: output, shape index: {}]
  %s3 = sld [smem:[#allocation0]]
  $region41: #{tpu_custom_call.1} parent=0
    _
  %s5 = ssub.s32 1, %s3
  %s6 = scalar_select 0, %s5, %s3
  loop: start=0, step=1, limit=10
  $region2: #{tpu_custom_call.1} parent=0 // loop_pre_header
    _
  $region3: #{tpu_custom_call.1} parent=0 // loop_header
    %s8 = sphi 0, %s12
    %p9 = scmp.ge.s32.totalorder %s8, 10
    %s18 = sphi 0, %s20
    %s21 = sphi 0, %s18
    %s22 = sphi 0, %s21
    %s38 = sphi 0, %s22
    %s42 = sphi 0, %s42
    %s44 = sphi 0, %s42
    %s45 = sphi 0, %s44
    %s59 = sphi 0, %s45
    %s65 = sphi 0, %s67
    %s68 = sphi 0, %s65
    %s69 = sphi 0, %s68
    %s85 = sphi 0, %s69
  $region4: #{tpu_custom_call.1} parent=0 // loop_header_branch
    %11 = sbr.rel (%p9) target = $region8
  $region5: #{tpu_custom_call.1} parent=0 // loop_body
    %s13 = ssub.s32 %s8, 1
    %s14 = ssub.s32 %s8, 2
    %s15 = sadd.s32 %s8, 1
    %s16 = ssub.s32 %s8, %s15
    %p17 = scmp.eq.s32.totalorder %s16, 0
    %s19 = sadd.s32 %s18, 1
    %s20 = scalar_select %p17, %s18, %s19
    %p23 = pneg %p17
    %p24 = scmp.eq.s32.totalorder %s8, 7
    %p25 = por %p23, %p24
    %p26 = scmp.ne.s32.totalorder %s18, %s21
    %p27 = scmp.eq.s32.totalorder %s8, 0
    %p28 = por %p26, %p27
    %p29 = scmp.ne.s32.totalorder %s18, %s21
    %p30 = scmp.eq.s32.totalorder %s13, 7
    %p31 = por %p29, %p30
    %p32 = scmp.ne.s32.totalorder %s21, %s22
    %p33 = scmp.eq.s32.totalorder %s13, 0
    %p34 = por %p32, %p33
    %p35 = scmp.ne.s32.totalorder %s21, %s22
    %p36 = scmp.eq.s32.totalorder %s14, 7
    %p37 = por %p35, %p36
    %p39 = scmp.ne.s32.totalorder %s22, %s38
    %p40 = scmp.eq.s32.totalorder %s14, 0
    %p41 = por %p39, %p40
    %s43 = sadd.s32 %s42, 1
    %p46 = scmp.eq.s32.totalorder %s8, 7
    %p47 = scmp.ne.s32.totalorder %s42, %s44
    %p48 = scmp.eq.s32.totalorder %s8, 0
    %p49 = por %p47, %p48
    %p50 = scmp.ne.s32.totalorder %s42, %s44
    %p51 = scmp.eq.s32.totalorder %s13, 7
    %p52 = por %p50, %p51
    %p53 = scmp.ne.s32.totalorder %s44, %s45
    %p54 = scmp.eq.s32.totalorder %s13, 0
    %p55 = por %p53, %p54
    %p56 = scmp.ne.s32.totalorder %s44, %s45
    %p57 = scmp.eq.s32.totalorder %s14, 7
    %p58 = por %p56, %p57
    %p60 = scmp.ne.s32.totalorder %s45, %s59
    %p61 = scmp.eq.s32.totalorder %s14, 0
    %p62 = por %p60, %p61
    %s63 = ssub.s32 %s8, %s15
    %p64 = scmp.eq.s32.totalorder %s63, 0
    %s66 = sadd.s32 %s65, 1
    %s67 = scalar_select %p64, %s65, %s66
    %p70 = pneg %p64
    %p71 = scmp.eq.s32.totalorder %s8, 7
    %p72 = por %p70, %p71
    %p73 = scmp.ne.s32.totalorder %s65, %s68
    %p74 = scmp.eq.s32.totalorder %s8, 0
    %p75 = por %p73, %p74
    %p76 = scmp.ne.s32.totalorder %s65, %s68
    %p77 = scmp.eq.s32.totalorder %s13, 7
    %p78 = por %p76, %p77
    %p79 = scmp.ne.s32.totalorder %s68, %s69
    %p80 = scmp.eq.s32.totalorder %s13, 0
    %p81 = por %p79, %p80
    %p82 = scmp.ne.s32.totalorder %s68, %s69
    %p83 = scmp.eq.s32.totalorder %s14, 7
    %p84 = por %p82, %p83
    %p86 = scmp.ne.s32.totalorder %s69, %s85
    %p87 = scmp.eq.s32.totalorder %s14, 0
    %p88 = por %p86, %p87
    %p89 = scmp.le.s32.totalorder 1, %s8
    %p90 = scmp.lt.s32.totalorder %s8, 9
    %p91 = pnand %p89, %p90
    %p92 = pneg %p91
    // Predicated region
    $region9: #{tpu_custom_call.1} parent=5 // pred_check
      _
    $region10: #{tpu_custom_call.1} parent=5 // pred_check_branch
      %94 = sbr.rel (%p91) target = $region12
    $region11: #{tpu_custom_call.1} parent=5 // pred_region
      %s95 = ssub.s32 %s8, 1
      // Predicated region
      $region13: #{tpu_custom_call.1} parent=11 // pred_check
        %p96 = pneg %p55
      $region14: #{tpu_custom_call.1} parent=11 // pred_check_branch
        %98 = sbr.rel (%p96) target = $region16
      $region15: #{tpu_custom_call.1} parent=11 // pred_region
        _
      $region16: #{tpu_custom_call.1} parent=11 // pred_fallthru
        _
    $region12: #{tpu_custom_call.1} parent=5 // pred_fallthru
      _
    %p99 = scmp.lt.s32.totalorder %s8, 8
    // Predicated region
    $region17: #{tpu_custom_call.1} parent=5 // pred_check
      %p100 = pneg %p99
    $region18: #{tpu_custom_call.1} parent=5 // pred_check_branch
      %102 = sbr.rel (%p100) target = $region20
    $region19: #{tpu_custom_call.1} parent=5 // pred_region
      // Predicated region
      $region21: #{tpu_custom_call.1} parent=19 // pred_check
        %p103 = pneg %p28
      $region22: #{tpu_custom_call.1} parent=19 // pred_check_branch
        %105 = sbr.rel (%p103) target = $region24
      $region23: #{tpu_custom_call.1} parent=19 // pred_region
        %s106 = smul.u32 32, %s8
        %p107 = scmp.lt.s32.totalorder %s106, 255
        %s108 = scalar_select %p107, %s106, 255
        %s109 = smul.addr %s108, 8
        %s110 = scalar_lea.vmem %s0, %s109
        %s111 = smul.u32 32, %s8
      $region24: #{tpu_custom_call.1} parent=19 // pred_fallthru
        _
    $region20: #{tpu_custom_call.1} parent=5 // pred_fallthru
      _
    %p112 = scmp.le.s32.totalorder 1, %s8
    %p113 = scmp.lt.s32.totalorder %s8, 9
    %p114 = pnand %p112, %p113
    %p115 = pneg %p114
    // Predicated region
    $region25: #{tpu_custom_call.1} parent=5 // pred_check
      _
    $region26: #{tpu_custom_call.1} parent=5 // pred_check_branch
      %117 = sbr.rel (%p114) target = $region28
    $region27: #{tpu_custom_call.1} parent=5 // pred_region
      %s118 = ssub.s32 %s8, 1
      %s119 = smul.u32 32, %s13
      %p120 = scmp.lt.s32.totalorder %s119, 255
      %s121 = scalar_select %p120, %s119, 255
      %s122 = smul.addr %s121, 8
      %s123 = scalar_lea.vmem %s0, %s122
      %p124 = pneg %p34
      %p125 = pneg %p31
      %p126 = pneg %p55
      %p127 = pneg %p52
      %p128 = pneg %p81
      %p129 = pneg %p78
      %s130 = smul.u32 32, %s13
      %p131 = scmp.lt.s32.totalorder %s130, 255
      %s132 = scalar_select %p131, %s130, 255
      %s133 = smul.addr %s132, 8
      %s134 = scalar_lea.vmem %s2, %s133
      %s135 = smul.u32 32, %s13
      %p136 = scmp.lt.s32.totalorder %s135, 255
      %s137 = scalar_select %p136, %s135, 255
      %s138 = smul.addr %s137, 8
      %s139 = scalar_lea.vmem %s0, %s138
      %s140 = smul.u32 32, %s13
      %s141 = smul.u32 32, %s13
      %p142 = scmp.lt.s32.totalorder %s141, 255
      %s143 = scalar_select %p142, %s141, 255
      %s144 = smul.addr %s143, 8
      %s145 = scalar_lea.vmem %s2, %s144
      %s146 = smul.u32 32, %s13
      %v147 = vld [vmem:[%s139] sm:$0xff]
      %v148 = vld [vmem:[%s139 + $0x8] sm:$0xff]
      %v149 = vld [vmem:[%s139 + $0x10] sm:$0xff]
      %v150 = vld [vmem:[%s139 + $0x18] sm:$0xff]
      %v151 = vld [vmem:[%s139 + $0x20] sm:$0xff]
      %v152 = vld [vmem:[%s139 + $0x28] sm:$0xff]
      %v153 = vld [vmem:[%s139 + $0x30] sm:$0xff]
      %v154 = vld [vmem:[%s139 + $0x38] sm:$0xff]
      %v155 = vld [vmem:[%s139 + $0x40] sm:$0xff]
      %v156 = vld [vmem:[%s139 + $0x48] sm:$0xff]
      %v157 = vld [vmem:[%s139 + $0x50] sm:$0xff]
      %v158 = vld [vmem:[%s139 + $0x58] sm:$0xff]
      %v159 = vld [vmem:[%s139 + $0x60] sm:$0xff]
      %v160 = vld [vmem:[%s139 + $0x68] sm:$0xff]
      %v161 = vld [vmem:[%s139 + $0x70] sm:$0xff]
      %v162 = vld [vmem:[%s139 + $0x78] sm:$0xff]
      %v163 = vld [vmem:[%s139 + $0x80] sm:$0xff]
      %v164 = vld [vmem:[%s139 + $0x88] sm:$0xff]
      %v165 = vld [vmem:[%s139 + $0x90] sm:$0xff]
      %v166 = vld [vmem:[%s139 + $0x98] sm:$0xff]
      %v167 = vld [vmem:[%s139 + $0xa0] sm:$0xff]
      %v168 = vld [vmem:[%s139 + $0xa8] sm:$0xff]
      %v169 = vld [vmem:[%s139 + $0xb0] sm:$0xff]
      %v170 = vld [vmem:[%s139 + $0xb8] sm:$0xff]
      %v171 = vld [vmem:[%s139 + $0xc0] sm:$0xff]
      %v172 = vld [vmem:[%s139 + $0xc8] sm:$0xff]
      %v173 = vld [vmem:[%s139 + $0xd0] sm:$0xff]
      %v174 = vld [vmem:[%s139 + $0xd8] sm:$0xff]
      %v175 = vld [vmem:[%s139 + $0xe0] sm:$0xff]
      %v176 = vld [vmem:[%s139 + $0xe8] sm:$0xff]
      %v177 = vld [vmem:[%s139 + $0xf0] sm:$0xff]
      %v178 = vld [vmem:[%s139 + $0xf8] sm:$0xff]
      %v179 = vld [vmem:[%s1] sm:$0xff]
      %181 = vset.pattern.permute.xlu0 0
      %182 = vperm.xlu0 %181, %v147
      %v183 = vpop.permute.xlu0 %182
      %186 = vset.pattern.permute.xlu0 0
      %187 = vperm.xlu0 %186, %v148
      %v188 = vpop.permute.xlu0 %187
      %191 = vset.pattern.permute.xlu0 0
      %192 = vperm.xlu0 %191, %v149
      %v193 = vpop.permute.xlu0 %192
      %196 = vset.pattern.permute.xlu0 0
      %197 = vperm.xlu0 %196, %v150
      %v198 = vpop.permute.xlu0 %197
      %201 = vset.pattern.permute.xlu0 0
      %202 = vperm.xlu0 %201, %v151
      %v203 = vpop.permute.xlu0 %202
      %206 = vset.pattern.permute.xlu0 0
      %207 = vperm.xlu0 %206, %v152
      %v208 = vpop.permute.xlu0 %207
      %211 = vset.pattern.permute.xlu0 0
      %212 = vperm.xlu0 %211, %v153
      %v213 = vpop.permute.xlu0 %212
      %216 = vset.pattern.permute.xlu0 0
      %217 = vperm.xlu0 %216, %v154
      %v218 = vpop.permute.xlu0 %217
      %221 = vset.pattern.permute.xlu0 0
      %222 = vperm.xlu0 %221, %v155
      %v223 = vpop.permute.xlu0 %222
      %226 = vset.pattern.permute.xlu0 0
      %227 = vperm.xlu0 %226, %v156
      %v228 = vpop.permute.xlu0 %227
      %231 = vset.pattern.permute.xlu0 0
      %232 = vperm.xlu0 %231, %v157
      %v233 = vpop.permute.xlu0 %232
      %236 = vset.pattern.permute.xlu0 0
      %237 = vperm.xlu0 %236, %v158
      %v238 = vpop.permute.xlu0 %237
      %241 = vset.pattern.permute.xlu0 0
      %242 = vperm.xlu0 %241, %v159
      %v243 = vpop.permute.xlu0 %242
      %246 = vset.pattern.permute.xlu0 0
      %247 = vperm.xlu0 %246, %v160
      %v248 = vpop.permute.xlu0 %247
      %251 = vset.pattern.permute.xlu0 0
      %252 = vperm.xlu0 %251, %v161
      %v253 = vpop.permute.xlu0 %252
      %256 = vset.pattern.permute.xlu0 0
      %257 = vperm.xlu0 %256, %v162
      %v258 = vpop.permute.xlu0 %257
      %261 = vset.pattern.permute.xlu0 0
      %262 = vperm.xlu0 %261, %v163
      %v263 = vpop.permute.xlu0 %262
      %266 = vset.pattern.permute.xlu0 0
      %267 = vperm.xlu0 %266, %v164
      %v268 = vpop.permute.xlu0 %267
      %271 = vset.pattern.permute.xlu0 0
      %272 = vperm.xlu0 %271, %v165
      %v273 = vpop.permute.xlu0 %272
      %276 = vset.pattern.permute.xlu0 0
      %277 = vperm.xlu0 %276, %v166
      %v278 = vpop.permute.xlu0 %277
      %281 = vset.pattern.permute.xlu0 0
      %282 = vperm.xlu0 %281, %v167
      %v283 = vpop.permute.xlu0 %282
      %286 = vset.pattern.permute.xlu0 0
      %287 = vperm.xlu0 %286, %v168
      %v288 = vpop.permute.xlu0 %287
      %291 = vset.pattern.permute.xlu0 0
      %292 = vperm.xlu0 %291, %v169
      %v293 = vpop.permute.xlu0 %292
      %296 = vset.pattern.permute.xlu0 0
      %297 = vperm.xlu0 %296, %v170
      %v298 = vpop.permute.xlu0 %297
      %301 = vset.pattern.permute.xlu0 0
      %302 = vperm.xlu0 %301, %v171
      %v303 = vpop.permute.xlu0 %302
      %306 = vset.pattern.permute.xlu0 0
      %307 = vperm.xlu0 %306, %v172
      %v308 = vpop.permute.xlu0 %307
      %311 = vset.pattern.permute.xlu0 0
      %312 = vperm.xlu0 %311, %v173
      %v313 = vpop.permute.xlu0 %312
      %316 = vset.pattern.permute.xlu0 0
      %317 = vperm.xlu0 %316, %v174
      %v318 = vpop.permute.xlu0 %317
      %321 = vset.pattern.permute.xlu0 0
      %322 = vperm.xlu0 %321, %v175
      %v323 = vpop.permute.xlu0 %322
      %326 = vset.pattern.permute.xlu0 0
      %327 = vperm.xlu0 %326, %v176
      %v328 = vpop.permute.xlu0 %327
      %331 = vset.pattern.permute.xlu0 0
      %332 = vperm.xlu0 %331, %v177
      %v333 = vpop.permute.xlu0 %332
      %336 = vset.pattern.permute.xlu0 0
      %337 = vperm.xlu0 %336, %v178
      %v338 = vpop.permute.xlu0 %337
      %v340 = vperm.slane %v179, 0
      %v341 = vmul.f32 %v183, %v340
      %v342 = vmul.f32 %v188, %v340
      %v343 = vmul.f32 %v193, %v340
      %v344 = vmul.f32 %v198, %v340
      %v345 = vmul.f32 %v203, %v340
      %v346 = vmul.f32 %v208, %v340
      %v347 = vmul.f32 %v213, %v340
      %v348 = vmul.f32 %v218, %v340
      %v349 = vmul.f32 %v223, %v340
      %v350 = vmul.f32 %v228, %v340
      %v351 = vmul.f32 %v233, %v340
      %v352 = vmul.f32 %v238, %v340
      %v353 = vmul.f32 %v243, %v340
      %v354 = vmul.f32 %v248, %v340
      %v355 = vmul.f32 %v253, %v340
      %v356 = vmul.f32 %v258, %v340
      %v357 = vmul.f32 %v263, %v340
      %v358 = vmul.f32 %v268, %v340
      %v359 = vmul.f32 %v273, %v340
      %v360 = vmul.f32 %v278, %v340
      %v361 = vmul.f32 %v283, %v340
      %v362 = vmul.f32 %v288, %v340
      %v363 = vmul.f32 %v293, %v340
      %v364 = vmul.f32 %v298, %v340
      %v365 = vmul.f32 %v303, %v340
      %v366 = vmul.f32 %v308, %v340
      %v367 = vmul.f32 %v313, %v340
      %v368 = vmul.f32 %v318, %v340
      %v369 = vmul.f32 %v323, %v340
      %v370 = vmul.f32 %v328, %v340
      %v371 = vmul.f32 %v333, %v340
      %v372 = vmul.f32 %v338, %v340
      %373 = vset.pattern.permute.xlu0 1
      %374 = vperm.xlu0 %373, %v147
      %v375 = vpop.permute.xlu0 %374
      %377 = vset.pattern.permute.xlu0 1
      %378 = vperm.xlu0 %377, %v148
      %v379 = vpop.permute.xlu0 %378
      %381 = vset.pattern.permute.xlu0 1
      %382 = vperm.xlu0 %381, %v149
      %v383 = vpop.permute.xlu0 %382
      %385 = vset.pattern.permute.xlu0 1
      %386 = vperm.xlu0 %385, %v150
      %v387 = vpop.permute.xlu0 %386
      %389 = vset.pattern.permute.xlu0 1
      %390 = vperm.xlu0 %389, %v151
      %v391 = vpop.permute.xlu0 %390
      %393 = vset.pattern.permute.xlu0 1
      %394 = vperm.xlu0 %393, %v152
      %v395 = vpop.permute.xlu0 %394
      %397 = vset.pattern.permute.xlu0 1
      %398 = vperm.xlu0 %397, %v153
      %v399 = vpop.permute.xlu0 %398
      %401 = vset.pattern.permute.xlu0 1
      %402 = vperm.xlu0 %401, %v154
      %v403 = vpop.permute.xlu0 %402
      %405 = vset.pattern.permute.xlu0 1
      %406 = vperm.xlu0 %405, %v155
      %v407 = vpop.permute.xlu0 %406
      %409 = vset.pattern.permute.xlu0 1
      %410 = vperm.xlu0 %409, %v156
      %v411 = vpop.permute.xlu0 %410
      %413 = vset.pattern.permute.xlu0 1
      %414 = vperm.xlu0 %413, %v157
      %v415 = vpop.permute.xlu0 %414
      %417 = vset.pattern.permute.xlu0 1
      %418 = vperm.xlu0 %417, %v158
      %v419 = vpop.permute.xlu0 %418
      %421 = vset.pattern.permute.xlu0 1
      %422 = vperm.xlu0 %421, %v159
      %v423 = vpop.permute.xlu0 %422
      %425 = vset.pattern.permute.xlu0 1
      %426 = vperm.xlu0 %425, %v160
      %v427 = vpop.permute.xlu0 %426
      %429 = vset.pattern.permute.xlu0 1
      %430 = vperm.xlu0 %429, %v161
      %v431 = vpop.permute.xlu0 %430
      %433 = vset.pattern.permute.xlu0 1
      %434 = vperm.xlu0 %433, %v162
      %v435 = vpop.permute.xlu0 %434
      %437 = vset.pattern.permute.xlu0 1
      %438 = vperm.xlu0 %437, %v163
      %v439 = vpop.permute.xlu0 %438
      %441 = vset.pattern.permute.xlu0 1
      %442 = vperm.xlu0 %441, %v164
      %v443 = vpop.permute.xlu0 %442
      %445 = vset.pattern.permute.xlu0 1
      %446 = vperm.xlu0 %445, %v165
      %v447 = vpop.permute.xlu0 %446
      %449 = vset.pattern.permute.xlu0 1
      %450 = vperm.xlu0 %449, %v166
      %v451 = vpop.permute.xlu0 %450
      %453 = vset.pattern.permute.xlu0 1
      %454 = vperm.xlu0 %453, %v167
      %v455 = vpop.permute.xlu0 %454
      %457 = vset.pattern.permute.xlu0 1
      %458 = vperm.xlu0 %457, %v168
      %v459 = vpop.permute.xlu0 %458
      %461 = vset.pattern.permute.xlu0 1
      %462 = vperm.xlu0 %461, %v169
      %v463 = vpop.permute.xlu0 %462
      %465 = vset.pattern.permute.xlu0 1
      %466 = vperm.xlu0 %465, %v170
      %v467 = vpop.permute.xlu0 %466
      %469 = vset.pattern.permute.xlu0 1
      %470 = vperm.xlu0 %469, %v171
      %v471 = vpop.permute.xlu0 %470
      %473 = vset.pattern.permute.xlu0 1
      %474 = vperm.xlu0 %473, %v172
      %v475 = vpop.permute.xlu0 %474
      %477 = vset.pattern.permute.xlu0 1
      %478 = vperm.xlu0 %477, %v173
      %v479 = vpop.permute.xlu0 %478
      %481 = vset.pattern.permute.xlu0 1
      %482 = vperm.xlu0 %481, %v174
      %v483 = vpop.permute.xlu0 %482
      %485 = vset.pattern.permute.xlu0 1
      %486 = vperm.xlu0 %485, %v175
      %v487 = vpop.permute.xlu0 %486
      %489 = vset.pattern.permute.xlu0 1
      %490 = vperm.xlu0 %489, %v176
      %v491 = vpop.permute.xlu0 %490
      %493 = vset.pattern.permute.xlu0 1
      %494 = vperm.xlu0 %493, %v177
      %v495 = vpop.permute.xlu0 %494
      %497 = vset.pattern.permute.xlu0 1
      %498 = vperm.xlu0 %497, %v178
      %v499 = vpop.permute.xlu0 %498
      %v501 = vperm.slane %v179, 1
      %v502 = vmul.f32 %v375, %v501
      %v503 = vmul.f32 %v379, %v501
      %v504 = vmul.f32 %v383, %v501
      %v505 = vmul.f32 %v387, %v501
      %v506 = vmul.f32 %v391, %v501
      %v507 = vmul.f32 %v395, %v501
      %v508 = vmul.f32 %v399, %v501
      %v509 = vmul.f32 %v403, %v501
      %v510 = vmul.f32 %v407, %v501
      %v511 = vmul.f32 %v411, %v501
      %v512 = vmul.f32 %v415, %v501
      %v513 = vmul.f32 %v419, %v501
      %v514 = vmul.f32 %v423, %v501
      %v515 = vmul.f32 %v427, %v501
      %v516 = vmul.f32 %v431, %v501
      %v517 = vmul.f32 %v435, %v501
      %v518 = vmul.f32 %v439, %v501
      %v519 = vmul.f32 %v443, %v501
      %v520 = vmul.f32 %v447, %v501
      %v521 = vmul.f32 %v451, %v501
      %v522 = vmul.f32 %v455, %v501
      %v523 = vmul.f32 %v459, %v501
      %v524 = vmul.f32 %v463, %v501
      %v525 = vmul.f32 %v467, %v501
      %v526 = vmul.f32 %v471, %v501
      %v527 = vmul.f32 %v475, %v501
      %v528 = vmul.f32 %v479, %v501
      %v529 = vmul.f32 %v483, %v501
      %v530 = vmul.f32 %v487, %v501
      %v531 = vmul.f32 %v491, %v501
      %v532 = vmul.f32 %v495, %v501
      %v533 = vmul.f32 %v499, %v501
      %v534 = vadd.f32 %v341, %v502
      %v535 = vadd.f32 %v342, %v503
      %v536 = vadd.f32 %v343, %v504
      %v537 = vadd.f32 %v344, %v505
      %v538 = vadd.f32 %v345, %v506
      %v539 = vadd.f32 %v346, %v507
      %v540 = vadd.f32 %v347, %v508
      %v541 = vadd.f32 %v348, %v509
      %v542 = vadd.f32 %v349, %v510
      %v543 = vadd.f32 %v350, %v511
      %v544 = vadd.f32 %v351, %v512
      %v545 = vadd.f32 %v352, %v513
      %v546 = vadd.f32 %v353, %v514
      %v547 = vadd.f32 %v354, %v515
      %v548 = vadd.f32 %v355, %v516
      %v549 = vadd.f32 %v356, %v517
      %v550 = vadd.f32 %v357, %v518
      %v551 = vadd.f32 %v358, %v519
      %v552 = vadd.f32 %v359, %v520
      %v553 = vadd.f32 %v360, %v521
      %v554 = vadd.f32 %v361, %v522
      %v555 = vadd.f32 %v362, %v523
      %v556 = vadd.f32 %v363, %v524
      %v557 = vadd.f32 %v364, %v525
      %v558 = vadd.f32 %v365, %v526
      %v559 = vadd.f32 %v366, %v527
      %v560 = vadd.f32 %v367, %v528
      %v561 = vadd.f32 %v368, %v529
      %v562 = vadd.f32 %v369, %v530
      %v563 = vadd.f32 %v370, %v531
      %v564 = vadd.f32 %v371, %v532
      %v565 = vadd.f32 %v372, %v533
      %566 = vset.pattern.permute.xlu0 2
      %567 = vperm.xlu0 %566, %v147
      %v568 = vpop.permute.xlu0 %567
      %570 = vset.pattern.permute.xlu0 2
      %571 = vperm.xlu0 %570, %v148
      %v572 = vpop.permute.xlu0 %571
      %574 = vset.pattern.permute.xlu0 2
      %575 = vperm.xlu0 %574, %v149
      %v576 = vpop.permute.xlu0 %575
      %578 = vset.pattern.permute.xlu0 2
      %579 = vperm.xlu0 %578, %v150
      %v580 = vpop.permute.xlu0 %579
      %582 = vset.pattern.permute.xlu0 2
      %583 = vperm.xlu0 %582, %v151
      %v584 = vpop.permute.xlu0 %583
      %586 = vset.pattern.permute.xlu0 2
      %587 = vperm.xlu0 %586, %v152
      %v588 = vpop.permute.xlu0 %587
      %590 = vset.pattern.permute.xlu0 2
      %591 = vperm.xlu0 %590, %v153
      %v592 = vpop.permute.xlu0 %591
      %594 = vset.pattern.permute.xlu0 2
      %595 = vperm.xlu0 %594, %v154
      %v596 = vpop.permute.xlu0 %595
      %598 = vset.pattern.permute.xlu0 2
      %599 = vperm.xlu0 %598, %v155
      %v600 = vpop.permute.xlu0 %599
      %602 = vset.pattern.permute.xlu0 2
      %603 = vperm.xlu0 %602, %v156
      %v604 = vpop.permute.xlu0 %603
      %606 = vset.pattern.permute.xlu0 2
      %607 = vperm.xlu0 %606, %v157
      %v608 = vpop.permute.xlu0 %607
      %610 = vset.pattern.permute.xlu0 2
      %611 = vperm.xlu0 %610, %v158
      %v612 = vpop.permute.xlu0 %611
      %614 = vset.pattern.permute.xlu0 2
      %615 = vperm.xlu0 %614, %v159
      %v616 = vpop.permute.xlu0 %615
      %618 = vset.pattern.permute.xlu0 2
      %619 = vperm.xlu0 %618, %v160
      %v620 = vpop.permute.xlu0 %619
      %622 = vset.pattern.permute.xlu0 2
      %623 = vperm.xlu0 %622, %v161
      %v624 = vpop.permute.xlu0 %623
      %626 = vset.pattern.permute.xlu0 2
      %627 = vperm.xlu0 %626, %v162
      %v628 = vpop.permute.xlu0 %627
      %630 = vset.pattern.permute.xlu0 2
      %631 = vperm.xlu0 %630, %v163
      %v632 = vpop.permute.xlu0 %631
      %634 = vset.pattern.permute.xlu0 2
      %635 = vperm.xlu0 %634, %v164
      %v636 = vpop.permute.xlu0 %635
      %638 = vset.pattern.permute.xlu0 2
      %639 = vperm.xlu0 %638, %v165
      %v640 = vpop.permute.xlu0 %639
      %642 = vset.pattern.permute.xlu0 2
      %643 = vperm.xlu0 %642, %v166
      %v644 = vpop.permute.xlu0 %643
      %646 = vset.pattern.permute.xlu0 2
      %647 = vperm.xlu0 %646, %v167
      %v648 = vpop.permute.xlu0 %647
      %650 = vset.pattern.permute.xlu0 2
      %651 = vperm.xlu0 %650, %v168
      %v652 = vpop.permute.xlu0 %651
      %654 = vset.pattern.permute.xlu0 2
      %655 = vperm.xlu0 %654, %v169
      %v656 = vpop.permute.xlu0 %655
      %658 = vset.pattern.permute.xlu0 2
      %659 = vperm.xlu0 %658, %v170
      %v660 = vpop.permute.xlu0 %659
      %662 = vset.pattern.permute.xlu0 2
      %663 = vperm.xlu0 %662, %v171
      %v664 = vpop.permute.xlu0 %663
      %666 = vset.pattern.permute.xlu0 2
      %667 = vperm.xlu0 %666, %v172
      %v668 = vpop.permute.xlu0 %667
      %670 = vset.pattern.permute.xlu0 2
      %671 = vperm.xlu0 %670, %v173
      %v672 = vpop.permute.xlu0 %671
      %674 = vset.pattern.permute.xlu0 2
      %675 = vperm.xlu0 %674, %v174
      %v676 = vpop.permute.xlu0 %675
      %678 = vset.pattern.permute.xlu0 2
      %679 = vperm.xlu0 %678, %v175
      %v680 = vpop.permute.xlu0 %679
      %682 = vset.pattern.permute.xlu0 2
      %683 = vperm.xlu0 %682, %v176
      %v684 = vpop.permute.xlu0 %683
      %686 = vset.pattern.permute.xlu0 2
      %687 = vperm.xlu0 %686, %v177
      %v688 = vpop.permute.xlu0 %687
      %690 = vset.pattern.permute.xlu0 2
      %691 = vperm.xlu0 %690, %v178
      %v692 = vpop.permute.xlu0 %691
      %v694 = vperm.slane %v179, 2
      %v695 = vmul.f32 %v568, %v694
      %v696 = vmul.f32 %v572, %v694
      %v697 = vmul.f32 %v576, %v694
      %v698 = vmul.f32 %v580, %v694
      %v699 = vmul.f32 %v584, %v694
      %v700 = vmul.f32 %v588, %v694
      %v701 = vmul.f32 %v592, %v694
      %v702 = vmul.f32 %v596, %v694
      %v703 = vmul.f32 %v600, %v694
      %v704 = vmul.f32 %v604, %v694
      %v705 = vmul.f32 %v608, %v694
      %v706 = vmul.f32 %v612, %v694
      %v707 = vmul.f32 %v616, %v694
      %v708 = vmul.f32 %v620, %v694
      %v709 = vmul.f32 %v624, %v694
      %v710 = vmul.f32 %v628, %v694
      %v711 = vmul.f32 %v632, %v694
      %v712 = vmul.f32 %v636, %v694
      %v713 = vmul.f32 %v640, %v694
      %v714 = vmul.f32 %v644, %v694
      %v715 = vmul.f32 %v648, %v694
      %v716 = vmul.f32 %v652, %v694
      %v717 = vmul.f32 %v656, %v694
      %v718 = vmul.f32 %v660, %v694
      %v719 = vmul.f32 %v664, %v694
      %v720 = vmul.f32 %v668, %v694
      %v721 = vmul.f32 %v672, %v694
      %v722 = vmul.f32 %v676, %v694
      %v723 = vmul.f32 %v680, %v694
      %v724 = vmul.f32 %v684, %v694
      %v725 = vmul.f32 %v688, %v694
      %v726 = vmul.f32 %v692, %v694
      %v727 = vadd.f32 %v534, %v695
      %v728 = vadd.f32 %v535, %v696
      %v729 = vadd.f32 %v536, %v697
      %v730 = vadd.f32 %v537, %v698
      %v731 = vadd.f32 %v538, %v699
      %v732 = vadd.f32 %v539, %v700
      %v733 = vadd.f32 %v540, %v701
      %v734 = vadd.f32 %v541, %v702
      %v735 = vadd.f32 %v542, %v703
      %v736 = vadd.f32 %v543, %v704
      %v737 = vadd.f32 %v544, %v705
      %v738 = vadd.f32 %v545, %v706
      %v739 = vadd.f32 %v546, %v707
      %v740 = vadd.f32 %v547, %v708
      %v741 = vadd.f32 %v548, %v709
      %v742 = vadd.f32 %v549, %v710
      %v743 = vadd.f32 %v550, %v711
      %v744 = vadd.f32 %v551, %v712
      %v745 = vadd.f32 %v552, %v713
      %v746 = vadd.f32 %v553, %v714
      %v747 = vadd.f32 %v554, %v715
      %v748 = vadd.f32 %v555, %v716
      %v749 = vadd.f32 %v556, %v717
      %v750 = vadd.f32 %v557, %v718
      %v751 = vadd.f32 %v558, %v719
      %v752 = vadd.f32 %v559, %v720
      %v753 = vadd.f32 %v560, %v721
      %v754 = vadd.f32 %v561, %v722
      %v755 = vadd.f32 %v562, %v723
      %v756 = vadd.f32 %v563, %v724
      %v757 = vadd.f32 %v564, %v725
      %v758 = vadd.f32 %v565, %v726
      %v759 = vperm.slane %v179, 3
      %v760 = vadd.f32 %v727, %v759
      %v761 = vadd.f32 %v728, %v759
      %v762 = vadd.f32 %v729, %v759
      %v763 = vadd.f32 %v730, %v759
      %v764 = vadd.f32 %v731, %v759
      %v765 = vadd.f32 %v732, %v759
      %v766 = vadd.f32 %v733, %v759
      %v767 = vadd.f32 %v734, %v759
      %v768 = vadd.f32 %v735, %v759
      %v769 = vadd.f32 %v736, %v759
      %v770 = vadd.f32 %v737, %v759
      %v771 = vadd.f32 %v738, %v759
      %v772 = vadd.f32 %v739, %v759
      %v773 = vadd.f32 %v740, %v759
      %v774 = vadd.f32 %v741, %v759
      %v775 = vadd.f32 %v742, %v759
      %v776 = vadd.f32 %v743, %v759
      %v777 = vadd.f32 %v744, %v759
      %v778 = vadd.f32 %v745, %v759
      %v779 = vadd.f32 %v746, %v759
      %v780 = vadd.f32 %v747, %v759
      %v781 = vadd.f32 %v748, %v759
      %v782 = vadd.f32 %v749, %v759
      %v783 = vadd.f32 %v750, %v759
      %v784 = vadd.f32 %v751, %v759
      %v785 = vadd.f32 %v752, %v759
      %v786 = vadd.f32 %v753, %v759
      %v787 = vadd.f32 %v754, %v759
      %v788 = vadd.f32 %v755, %v759
      %v789 = vadd.f32 %v756, %v759
      %v790 = vadd.f32 %v757, %v759
      %v791 = vadd.f32 %v758, %v759
      %vm792 = vcmp.gt.f32.partialorder %v179, 0.5
      %v793 = vand.u32 2147483647, %v760
      %vm794 = vcmp.le.f32.partialorder %v793, 0.7853982
      %vm795 = vcmp.lt.s32.totalorder %v760, 0
      %v796 = vand.u32 %v760, 2139095040
      %v797 = vshrl.u32 %v796, 23
      %v798 = vsub.s32 %v797, 127
      %v799 = vand.u32 2147483647, %v760
      %v800 = vand.u32 %v799, 8388607
      %v801 = vor.u32 %v800, 8388608
      %v802 = vsub.s32 0, %v801
      %v803 = vadd.s32 %v798, 1
      %vm804 = vcmp.gt.s32.totalorder %v803, 0
      %v805 = vsel %vm804, %v803, 0
      %v806 = vshrl.u32 %v805, 5
      %v807 = vand.u32 %v805, 31
      %v808 = vsub.s32 32, %v807
      %v809 = vshrl.u32 683565275, %v808
      %v810 = vshll.u32 683565275, %v807
      %v811 = vshrl.u32 2475754826, %v808
      %v812 = vor.u32 %v810, %v811
      %v813 = vshll.u32 2475754826, %v807
      %v814 = vshrl.u32 2131351028, %v808
      %v815 = vor.u32 %v813, %v814
      %v816 = vshll.u32 2131351028, %v807
      %v817 = vshrl.u32 2102212464, %v808
      %v818 = vor.u32 %v816, %v817
      %v819 = vshll.u32 2102212464, %v807
      %v820 = vshrl.u32 920167782, %v808
      %v821 = vor.u32 %v819, %v820
      %v822 = vshll.u32 920167782, %v807
      %v823 = vshrl.u32 1326507024, %v808
      %v824 = vor.u32 %v822, %v823
      %vm825 = vcmp.lt.s32.totalorder %v806, 1
      %vm826 = vcmp.lt.s32.totalorder %v806, 2
      %vm827 = vcmp.lt.s32.totalorder %v806, 3
      %vm828 = vcmp.lt.s32.totalorder %v806, 4
      %v829 = vsel %vm825, %v809, %v812
      %v830 = vsel %vm828, %v818, 2102212464
      %v831 = vsel %vm827, %v815, %v830
      %v832 = vsel %vm826, %v829, %v831
      %v833 = vsel %vm825, %v812, %v815
      %v834 = vsel %vm828, %v821, 920167782
      %v835 = vsel %vm827, %v818, %v834
      %v836 = vsel %vm826, %v833, %v835
      %v837 = vsel %vm825, %v815, %v818
      %v838 = vsel %vm828, %v824, 1326507024
      %v839 = vsel %vm827, %v821, %v838
      %v840 = vsel %vm826, %v837, %v839
      %v841 = vshll.u32 %v801, 8
      %v842 = vand.u32 %v841, 65535
      %v843 = vshrl.u32 %v841, 16
      %v844 = vand.u32 %v840, 65535
      %v845 = vshrl.u32 %v840, 16
      %v846 = vmul.u32 %v842, %v844
      %v847 = vmul.u32 %v842, %v845
      %v848 = vmul.u32 %v843, %v844
      %v849 = vmul.u32 %v843, %v845
      %v850 = vshll.u32 %v847, 16
      %v851 = vshrl.u32 %v847, 16
      %v852 = vshll.u32 %v848, 16
      %v853 = vshrl.u32 %v848, 16
      %vm854 = vc.u32 %v846, %v850
      %v855 = vsel %vm854, 1, 0
      %v856 = vadd.s32 %v846, %v850
      %v857 = vadd.s32 %v849, %v855
      %vm858 = vc.u32 %v856, %v852
      %v859 = vsel %vm858, 1, 0
      %v860 = vadd.s32 %v856, %v852
      %v861 = vadd.s32 %v857, %v859
      %v862 = vadd.s32 %v861, %v851
      %v863 = vadd.s32 %v862, %v853
      %v864 = vand.u32 %v841, 65535
      %v865 = vshrl.u32 %v841, 16
      %v866 = vand.u32 %v836, 65535
      %v867 = vshrl.u32 %v836, 16
      %v868 = vmul.u32 %v864, %v866
      %v869 = vmul.u32 %v864, %v867
      %v870 = vmul.u32 %v865, %v866
      %v871 = vmul.u32 %v865, %v867
      %v872 = vshll.u32 %v869, 16
      %v873 = vshrl.u32 %v869, 16
      %v874 = vshll.u32 %v870, 16
      %v875 = vshrl.u32 %v870, 16
      %vm876 = vc.u32 %v868, %v872
      %v877 = vsel %vm876, 1, 0
      %v878 = vadd.s32 %v868, %v872
      %v879 = vadd.s32 %v871, %v877
      %vm880 = vc.u32 %v878, %v874
      %v881 = vsel %vm880, 1, 0
      %v882 = vadd.s32 %v878, %v874
      %v883 = vadd.s32 %v879, %v881
      %v884 = vadd.s32 %v883, %v873
      %v885 = vadd.s32 %v884, %v875
      %v886 = vmul.u32 %v841, %v832
      %v887 = vadd.s32 %v863, %v882
      %vm888 = vc.u32 %v863, %v882
      %v889 = vadd.s32 %v885, 1
      %v890 = vsel %vm888, %v889, %v885
      %v891 = vadd.s32 %v886, %v890
      %v892 = vadd.s32 %v891, 536870912
      %v893 = vshrl.u32 %v892, 30
      %v894 = vshll.u32 %v893, 30
      %v895 = vsub.s32 %v891, %v894
      %vm896 = vcmp.lt.s32.totalorder %v895, 0
      %v897 = vsub.s32 0, %v895
      %v898 = vsel %vm896, %v897, %v895
      %v899 = vclz %v898
      %v900 = vsub.s32 %v899, 2
      %vm901 = vcmp.gt.s32.totalorder 0, %v900
      %v902 = vsel %vm901, 0, %v900
      %v903 = vsub.s32 32, %v902
      %v904 = vshll.u32 %v895, %v902
      %v905 = vshrl.u32 %v887, %v903
      %v906 = vor.u32 %v904, %v905
      %v907 = vsub.s32 4294967266, %v902
      %v908 = vadd.s32 %v907, 127
      %v909 = vshll.u32 %v908, 23
      %v910 = vor.u32 4788187, %v909
      %v911 = vand.u32 2147483647, %v910
      %v913 = vcvt.s32.f32 %v906
      %v914 = vmul.f32 %v913, %v911
      %v915 = vxor.u32 %v914, 2147483648
      %v916 = vsel %vm795, %v915, %v914
      %v917 = vsub.s32 4, %v893
      %v918 = vsel %vm795, %v917, %v893
      %v919 = vsel %vm794, %v760, %v916
      %v920 = vsel %vm794, 0, %v918
      %v921 = vmul.f32 %v919, %v919
      %v922 = vmul.f32 %v921, -0.001358992
      %v923 = vadd.f32 %v922, 0.041655596
      %v924 = vmul.f32 %v921, %v923
      %v925 = vadd.f32 %v924, -0.4999988
      %v926 = vmul.f32 %v921, %v925
      %v927 = vadd.f32 1.0, %v926
      %v928 = vmul.f32 %v919, %v919
      %v929 = vmul.f32 %v928, -0.00019511016
      %v930 = vadd.f32 %v929, 0.008332121
      %v931 = vmul.f32 %v928, %v930
      %v932 = vadd.f32 %v931, -0.16666654
      %v933 = vmul.f32 %v928, %v932
      %v934 = vadd.f32 %v933, 1.0
      %v935 = vmul.f32 %v934, %v919
      %vm936 = vweird.f32 %v760
      %v937 = vadd.s32 %v920, 3
      %v938 = vand.u32 %v937, 3
      %vm939 = vcmp.lt.s32.totalorder %v938, 2
      %vm940 = vcmp.eq.s32.totalorder %v938, 0
      %v941 = vxor.u32 %v935, 2147483648
      %v942 = vsel %vm940, %v927, %v941
      %vm943 = vcmp.eq.s32.totalorder %v938, 2
      %v944 = vxor.u32 %v927, 2147483648
      %v945 = vsel %vm943, %v944, %v935
      %v946 = vsel %vm939, %v942, %v945
      %v947 = vsel %vm936, nan, %v946
      %v948 = vand.u32 2147483647, %v761
      %vm949 = vcmp.le.f32.partialorder %v948, 0.7853982
      %vm950 = vcmp.lt.s32.totalorder %v761, 0
      %v951 = vand.u32 %v761, 2139095040
      %v952 = vshrl.u32 %v951, 23
      %v953 = vsub.s32 %v952, 127
      %v954 = vand.u32 2147483647, %v761
      %v955 = vand.u32 %v954, 8388607
      %v956 = vor.u32 %v955, 8388608
      %v957 = vsub.s32 0, %v956
      %v958 = vadd.s32 %v953, 1
      %vm959 = vcmp.gt.s32.totalorder %v958, 0
      %v960 = vsel %vm959, %v958, 0
      %v961 = vshrl.u32 %v960, 5
      %v962 = vand.u32 %v960, 31
      %v963 = vsub.s32 32, %v962
      %v964 = vshrl.u32 683565275, %v963
      %v965 = vshll.u32 683565275, %v962
      %v966 = vshrl.u32 2475754826, %v963
      %v967 = vor.u32 %v965, %v966
      %v968 = vshll.u32 2475754826, %v962
      %v969 = vshrl.u32 2131351028, %v963
      %v970 = vor.u32 %v968, %v969
      %v971 = vshll.u32 2131351028, %v962
      %v972 = vshrl.u32 2102212464, %v963
      %v973 = vor.u32 %v971, %v972
      %v974 = vshll.u32 2102212464, %v962
      %v975 = vshrl.u32 920167782, %v963
      %v976 = vor.u32 %v974, %v975
      %v977 = vshll.u32 920167782, %v962
      %v978 = vshrl.u32 1326507024, %v963
      %v979 = vor.u32 %v977, %v978
      %vm980 = vcmp.lt.s32.totalorder %v961, 1
      %vm981 = vcmp.lt.s32.totalorder %v961, 2
      %vm982 = vcmp.lt.s32.totalorder %v961, 3
      %vm983 = vcmp.lt.s32.totalorder %v961, 4
      %v984 = vsel %vm980, %v964, %v967
      %v985 = vsel %vm983, %v973, 2102212464
      %v986 = vsel %vm982, %v970, %v985
      %v987 = vsel %vm981, %v984, %v986
      %v988 = vsel %vm980, %v967, %v970
      %v989 = vsel %vm983, %v976, 920167782
      %v990 = vsel %vm982, %v973, %v989
      %v991 = vsel %vm981, %v988, %v990
      %v992 = vsel %vm980, %v970, %v973
      %v993 = vsel %vm983, %v979, 1326507024
      %v994 = vsel %vm982, %v976, %v993
      %v995 = vsel %vm981, %v992, %v994
      %v996 = vshll.u32 %v956, 8
      %v997 = vand.u32 %v996, 65535
      %v998 = vshrl.u32 %v996, 16
      %v999 = vand.u32 %v995, 65535
      %v1000 = vshrl.u32 %v995, 16
      %v1001 = vmul.u32 %v997, %v999
      %v1002 = vmul.u32 %v997, %v1000
      %v1003 = vmul.u32 %v998, %v999
      %v1004 = vmul.u32 %v998, %v1000
      %v1005 = vshll.u32 %v1002, 16
      %v1006 = vshrl.u32 %v1002, 16
      %v1007 = vshll.u32 %v1003, 16
      %v1008 = vshrl.u32 %v1003, 16
      %vm1009 = vc.u32 %v1001, %v1005
      %v1010 = vsel %vm1009, 1, 0
      %v1011 = vadd.s32 %v1001, %v1005
      %v1012 = vadd.s32 %v1004, %v1010
      %vm1013 = vc.u32 %v1011, %v1007
      %v1014 = vsel %vm1013, 1, 0
      %v1015 = vadd.s32 %v1011, %v1007
      %v1016 = vadd.s32 %v1012, %v1014
      %v1017 = vadd.s32 %v1016, %v1006
      %v1018 = vadd.s32 %v1017, %v1008
      %v1019 = vand.u32 %v996, 65535
      %v1020 = vshrl.u32 %v996, 16
      %v1021 = vand.u32 %v991, 65535
      %v1022 = vshrl.u32 %v991, 16
      %v1023 = vmul.u32 %v1019, %v1021
      %v1024 = vmul.u32 %v1019, %v1022
      %v1025 = vmul.u32 %v1020, %v1021
      %v1026 = vmul.u32 %v1020, %v1022
      %v1027 = vshll.u32 %v1024, 16
      %v1028 = vshrl.u32 %v1024, 16
      %v1029 = vshll.u32 %v1025, 16
      %v1030 = vshrl.u32 %v1025, 16
      %vm1031 = vc.u32 %v1023, %v1027
      %v1032 = vsel %vm1031, 1, 0
      %v1033 = vadd.s32 %v1023, %v1027
      %v1034 = vadd.s32 %v1026, %v1032
      %vm1035 = vc.u32 %v1033, %v1029
      %v1036 = vsel %vm1035, 1, 0
      %v1037 = vadd.s32 %v1033, %v1029
      %v1038 = vadd.s32 %v1034, %v1036
      %v1039 = vadd.s32 %v1038, %v1028
      %v1040 = vadd.s32 %v1039, %v1030
      %v1041 = vmul.u32 %v996, %v987
      %v1042 = vadd.s32 %v1018, %v1037
      %vm1043 = vc.u32 %v1018, %v1037
      %v1044 = vadd.s32 %v1040, 1
      %v1045 = vsel %vm1043, %v1044, %v1040
      %v1046 = vadd.s32 %v1041, %v1045
      %v1047 = vadd.s32 %v1046, 536870912
      %v1048 = vshrl.u32 %v1047, 30
      %v1049 = vshll.u32 %v1048, 30
      %v1050 = vsub.s32 %v1046, %v1049
      %vm1051 = vcmp.lt.s32.totalorder %v1050, 0
      %v1052 = vsub.s32 0, %v1050
      %v1053 = vsel %vm1051, %v1052, %v1050
      %v1054 = vclz %v1053
      %v1055 = vsub.s32 %v1054, 2
      %vm1056 = vcmp.gt.s32.totalorder 0, %v1055
      %v1057 = vsel %vm1056, 0, %v1055
      %v1058 = vsub.s32 32, %v1057
      %v1059 = vshll.u32 %v1050, %v1057
      %v1060 = vshrl.u32 %v1042, %v1058
      %v1061 = vor.u32 %v1059, %v1060
      %v1062 = vsub.s32 4294967266, %v1057
      %v1063 = vadd.s32 %v1062, 127
      %v1064 = vshll.u32 %v1063, 23
      %v1065 = vor.u32 4788187, %v1064
      %v1066 = vand.u32 2147483647, %v1065
      %v1068 = vcvt.s32.f32 %v1061
      %v1069 = vmul.f32 %v1068, %v1066
      %v1070 = vxor.u32 %v1069, 2147483648
      %v1071 = vsel %vm950, %v1070, %v1069
      %v1072 = vsub.s32 4, %v1048
      %v1073 = vsel %vm950, %v1072, %v1048
      %v1074 = vsel %vm949, %v761, %v1071
      %v1075 = vsel %vm949, 0, %v1073
      %v1076 = vmul.f32 %v1074, %v1074
      %v1077 = vmul.f32 %v1076, -0.001358992
      %v1078 = vadd.f32 %v1077, 0.041655596
      %v1079 = vmul.f32 %v1076, %v1078
      %v1080 = vadd.f32 %v1079, -0.4999988
      %v1081 = vmul.f32 %v1076, %v1080
      %v1082 = vadd.f32 1.0, %v1081
      %v1083 = vmul.f32 %v1074, %v1074
      %v1084 = vmul.f32 %v1083, -0.00019511016
      %v1085 = vadd.f32 %v1084, 0.008332121
      %v1086 = vmul.f32 %v1083, %v1085
      %v1087 = vadd.f32 %v1086, -0.16666654
      %v1088 = vmul.f32 %v1083, %v1087
      %v1089 = vadd.f32 %v1088, 1.0
      %v1090 = vmul.f32 %v1089, %v1074
      %vm1091 = vweird.f32 %v761
      %v1092 = vadd.s32 %v1075, 3
      %v1093 = vand.u32 %v1092, 3
      %vm1094 = vcmp.lt.s32.totalorder %v1093, 2
      %vm1095 = vcmp.eq.s32.totalorder %v1093, 0
      %v1096 = vxor.u32 %v1090, 2147483648
      %v1097 = vsel %vm1095, %v1082, %v1096
      %vm1098 = vcmp.eq.s32.totalorder %v1093, 2
      %v1099 = vxor.u32 %v1082, 2147483648
      %v1100 = vsel %vm1098, %v1099, %v1090
      %v1101 = vsel %vm1094, %v1097, %v1100
      %v1102 = vsel %vm1091, nan, %v1101
      %v1103 = vand.u32 2147483647, %v762
      %vm1104 = vcmp.le.f32.partialorder %v1103, 0.7853982
      %vm1105 = vcmp.lt.s32.totalorder %v762, 0
      %v1106 = vand.u32 %v762, 2139095040
      %v1107 = vshrl.u32 %v1106, 23
      %v1108 = vsub.s32 %v1107, 127
      %v1109 = vand.u32 2147483647, %v762
      %v1110 = vand.u32 %v1109, 8388607
      %v1111 = vor.u32 %v1110, 8388608
      %v1112 = vsub.s32 0, %v1111
      %v1113 = vadd.s32 %v1108, 1
      %vm1114 = vcmp.gt.s32.totalorder %v1113, 0
      %v1115 = vsel %vm1114, %v1113, 0
      %v1116 = vshrl.u32 %v1115, 5
      %v1117 = vand.u32 %v1115, 31
      %v1118 = vsub.s32 32, %v1117
      %v1119 = vshrl.u32 683565275, %v1118
      %v1120 = vshll.u32 683565275, %v1117
      %v1121 = vshrl.u32 2475754826, %v1118
      %v1122 = vor.u32 %v1120, %v1121
      %v1123 = vshll.u32 2475754826, %v1117
      %v1124 = vshrl.u32 2131351028, %v1118
      %v1125 = vor.u32 %v1123, %v1124
      %v1126 = vshll.u32 2131351028, %v1117
      %v1127 = vshrl.u32 2102212464, %v1118
      %v1128 = vor.u32 %v1126, %v1127
      %v1129 = vshll.u32 2102212464, %v1117
      %v1130 = vshrl.u32 920167782, %v1118
      %v1131 = vor.u32 %v1129, %v1130
      %v1132 = vshll.u32 920167782, %v1117
      %v1133 = vshrl.u32 1326507024, %v1118
      %v1134 = vor.u32 %v1132, %v1133
      %vm1135 = vcmp.lt.s32.totalorder %v1116, 1
      %vm1136 = vcmp.lt.s32.totalorder %v1116, 2
      %vm1137 = vcmp.lt.s32.totalorder %v1116, 3
      %vm1138 = vcmp.lt.s32.totalorder %v1116, 4
      %v1139 = vsel %vm1135, %v1119, %v1122
      %v1140 = vsel %vm1138, %v1128, 2102212464
      %v1141 = vsel %vm1137, %v1125, %v1140
      %v1142 = vsel %vm1136, %v1139, %v1141
      %v1143 = vsel %vm1135, %v1122, %v1125
      %v1144 = vsel %vm1138, %v1131, 920167782
      %v1145 = vsel %vm1137, %v1128, %v1144
      %v1146 = vsel %vm1136, %v1143, %v1145
      %v1147 = vsel %vm1135, %v1125, %v1128
      %v1148 = vsel %vm1138, %v1134, 1326507024
      %v1149 = vsel %vm1137, %v1131, %v1148
      %v1150 = vsel %vm1136, %v1147, %v1149
      %v1151 = vshll.u32 %v1111, 8
      %v1152 = vand.u32 %v1151, 65535
      %v1153 = vshrl.u32 %v1151, 16
      %v1154 = vand.u32 %v1150, 65535
      %v1155 = vshrl.u32 %v1150, 16
      %v1156 = vmul.u32 %v1152, %v1154
      %v1157 = vmul.u32 %v1152, %v1155
      %v1158 = vmul.u32 %v1153, %v1154
      %v1159 = vmul.u32 %v1153, %v1155
      %v1160 = vshll.u32 %v1157, 16
      %v1161 = vshrl.u32 %v1157, 16
      %v1162 = vshll.u32 %v1158, 16
      %v1163 = vshrl.u32 %v1158, 16
      %vm1164 = vc.u32 %v1156, %v1160
      %v1165 = vsel %vm1164, 1, 0
      %v1166 = vadd.s32 %v1156, %v1160
      %v1167 = vadd.s32 %v1159, %v1165
      %vm1168 = vc.u32 %v1166, %v1162
      %v1169 = vsel %vm1168, 1, 0
      %v1170 = vadd.s32 %v1166, %v1162
      %v1171 = vadd.s32 %v1167, %v1169
      %v1172 = vadd.s32 %v1171, %v1161
      %v1173 = vadd.s32 %v1172, %v1163
      %v1174 = vand.u32 %v1151, 65535
      %v1175 = vshrl.u32 %v1151, 16
      %v1176 = vand.u32 %v1146, 65535
      %v1177 = vshrl.u32 %v1146, 16
      %v1178 = vmul.u32 %v1174, %v1176
      %v1179 = vmul.u32 %v1174, %v1177
      %v1180 = vmul.u32 %v1175, %v1176
      %v1181 = vmul.u32 %v1175, %v1177
      %v1182 = vshll.u32 %v1179, 16
      %v1183 = vshrl.u32 %v1179, 16
      %v1184 = vshll.u32 %v1180, 16
      %v1185 = vshrl.u32 %v1180, 16
      %vm1186 = vc.u32 %v1178, %v1182
      %v1187 = vsel %vm1186, 1, 0
      %v1188 = vadd.s32 %v1178, %v1182
      %v1189 = vadd.s32 %v1181, %v1187
      %vm1190 = vc.u32 %v1188, %v1184
      %v1191 = vsel %vm1190, 1, 0
      %v1192 = vadd.s32 %v1188, %v1184
      %v1193 = vadd.s32 %v1189, %v1191
      %v1194 = vadd.s32 %v1193, %v1183
      %v1195 = vadd.s32 %v1194, %v1185
      %v1196 = vmul.u32 %v1151, %v1142
      %v1197 = vadd.s32 %v1173, %v1192
      %vm1198 = vc.u32 %v1173, %v1192
      %v1199 = vadd.s32 %v1195, 1
      %v1200 = vsel %vm1198, %v1199, %v1195
      %v1201 = vadd.s32 %v1196, %v1200
      %v1202 = vadd.s32 %v1201, 536870912
      %v1203 = vshrl.u32 %v1202, 30
      %v1204 = vshll.u32 %v1203, 30
      %v1205 = vsub.s32 %v1201, %v1204
      %vm1206 = vcmp.lt.s32.totalorder %v1205, 0
      %v1207 = vsub.s32 0, %v1205
      %v1208 = vsel %vm1206, %v1207, %v1205
      %v1209 = vclz %v1208
      %v1210 = vsub.s32 %v1209, 2
      %vm1211 = vcmp.gt.s32.totalorder 0, %v1210
      %v1212 = vsel %vm1211, 0, %v1210
      %v1213 = vsub.s32 32, %v1212
      %v1214 = vshll.u32 %v1205, %v1212
      %v1215 = vshrl.u32 %v1197, %v1213
      %v1216 = vor.u32 %v1214, %v1215
      %v1217 = vsub.s32 4294967266, %v1212
      %v1218 = vadd.s32 %v1217, 127
      %v1219 = vshll.u32 %v1218, 23
      %v1220 = vor.u32 4788187, %v1219
      %v1221 = vand.u32 2147483647, %v1220
      %v1223 = vcvt.s32.f32 %v1216
      %v1224 = vmul.f32 %v1223, %v1221
      %v1225 = vxor.u32 %v1224, 2147483648
      %v1226 = vsel %vm1105, %v1225, %v1224
      %v1227 = vsub.s32 4, %v1203
      %v1228 = vsel %vm1105, %v1227, %v1203
      %v1229 = vsel %vm1104, %v762, %v1226
      %v1230 = vsel %vm1104, 0, %v1228
      %v1231 = vmul.f32 %v1229, %v1229
      %v1232 = vmul.f32 %v1231, -0.001358992
      %v1233 = vadd.f32 %v1232, 0.041655596
      %v1234 = vmul.f32 %v1231, %v1233
      %v1235 = vadd.f32 %v1234, -0.4999988
      %v1236 = vmul.f32 %v1231, %v1235
      %v1237 = vadd.f32 1.0, %v1236
      %v1238 = vmul.f32 %v1229, %v1229
      %v1239 = vmul.f32 %v1238, -0.00019511016
      %v1240 = vadd.f32 %v1239, 0.008332121
      %v1241 = vmul.f32 %v1238, %v1240
      %v1242 = vadd.f32 %v1241, -0.16666654
      %v1243 = vmul.f32 %v1238, %v1242
      %v1244 = vadd.f32 %v1243, 1.0
      %v1245 = vmul.f32 %v1244, %v1229
      %vm1246 = vweird.f32 %v762
      %v1247 = vadd.s32 %v1230, 3
      %v1248 = vand.u32 %v1247, 3
      %vm1249 = vcmp.lt.s32.totalorder %v1248, 2
      %vm1250 = vcmp.eq.s32.totalorder %v1248, 0
      %v1251 = vxor.u32 %v1245, 2147483648
      %v1252 = vsel %vm1250, %v1237, %v1251
      %vm1253 = vcmp.eq.s32.totalorder %v1248, 2
      %v1254 = vxor.u32 %v1237, 2147483648
      %v1255 = vsel %vm1253, %v1254, %v1245
      %v1256 = vsel %vm1249, %v1252, %v1255
      %v1257 = vsel %vm1246, nan, %v1256
      %v1258 = vand.u32 2147483647, %v763
      %vm1259 = vcmp.le.f32.partialorder %v1258, 0.7853982
      %vm1260 = vcmp.lt.s32.totalorder %v763, 0
      %v1261 = vand.u32 %v763, 2139095040
      %v1262 = vshrl.u32 %v1261, 23
      %v1263 = vsub.s32 %v1262, 127
      %v1264 = vand.u32 2147483647, %v763
      %v1265 = vand.u32 %v1264, 8388607
      %v1266 = vor.u32 %v1265, 8388608
      %v1267 = vsub.s32 0, %v1266
      %v1268 = vadd.s32 %v1263, 1
      %vm1269 = vcmp.gt.s32.totalorder %v1268, 0
      %v1270 = vsel %vm1269, %v1268, 0
      %v1271 = vshrl.u32 %v1270, 5
      %v1272 = vand.u32 %v1270, 31
      %v1273 = vsub.s32 32, %v1272
      %v1274 = vshrl.u32 683565275, %v1273
      %v1275 = vshll.u32 683565275, %v1272
      %v1276 = vshrl.u32 2475754826, %v1273
      %v1277 = vor.u32 %v1275, %v1276
      %v1278 = vshll.u32 2475754826, %v1272
      %v1279 = vshrl.u32 2131351028, %v1273
      %v1280 = vor.u32 %v1278, %v1279
      %v1281 = vshll.u32 2131351028, %v1272
      %v1282 = vshrl.u32 2102212464, %v1273
      %v1283 = vor.u32 %v1281, %v1282
      %v1284 = vshll.u32 2102212464, %v1272
      %v1285 = vshrl.u32 920167782, %v1273
      %v1286 = vor.u32 %v1284, %v1285
      %v1287 = vshll.u32 920167782, %v1272
      %v1288 = vshrl.u32 1326507024, %v1273
      %v1289 = vor.u32 %v1287, %v1288
      %vm1290 = vcmp.lt.s32.totalorder %v1271, 1
      %vm1291 = vcmp.lt.s32.totalorder %v1271, 2
      %vm1292 = vcmp.lt.s32.totalorder %v1271, 3
      %vm1293 = vcmp.lt.s32.totalorder %v1271, 4
      %v1294 = vsel %vm1290, %v1274, %v1277
      %v1295 = vsel %vm1293, %v1283, 2102212464
      %v1296 = vsel %vm1292, %v1280, %v1295
      %v1297 = vsel %vm1291, %v1294, %v1296
      %v1298 = vsel %vm1290, %v1277, %v1280
      %v1299 = vsel %vm1293, %v1286, 920167782
      %v1300 = vsel %vm1292, %v1283, %v1299
      %v1301 = vsel %vm1291, %v1298, %v1300
      %v1302 = vsel %vm1290, %v1280, %v1283
      %v1303 = vsel %vm1293, %v1289, 1326507024
      %v1304 = vsel %vm1292, %v1286, %v1303
      %v1305 = vsel %vm1291, %v1302, %v1304
      %v1306 = vshll.u32 %v1266, 8
      %v1307 = vand.u32 %v1306, 65535
      %v1308 = vshrl.u32 %v1306, 16
      %v1309 = vand.u32 %v1305, 65535
      %v1310 = vshrl.u32 %v1305, 16
      %v1311 = vmul.u32 %v1307, %v1309
      %v1312 = vmul.u32 %v1307, %v1310
      %v1313 = vmul.u32 %v1308, %v1309
      %v1314 = vmul.u32 %v1308, %v1310
      %v1315 = vshll.u32 %v1312, 16
      %v1316 = vshrl.u32 %v1312, 16
      %v1317 = vshll.u32 %v1313, 16
      %v1318 = vshrl.u32 %v1313, 16
      %vm1319 = vc.u32 %v1311, %v1315
      %v1320 = vsel %vm1319, 1, 0
      %v1321 = vadd.s32 %v1311, %v1315
      %v1322 = vadd.s32 %v1314, %v1320
      %vm1323 = vc.u32 %v1321, %v1317
      %v1324 = vsel %vm1323, 1, 0
      %v1325 = vadd.s32 %v1321, %v1317
      %v1326 = vadd.s32 %v1322, %v1324
      %v1327 = vadd.s32 %v1326, %v1316
      %v1328 = vadd.s32 %v1327, %v1318
      %v1329 = vand.u32 %v1306, 65535
      %v1330 = vshrl.u32 %v1306, 16
      %v1331 = vand.u32 %v1301, 65535
      %v1332 = vshrl.u32 %v1301, 16
      %v1333 = vmul.u32 %v1329, %v1331
      %v1334 = vmul.u32 %v1329, %v1332
      %v1335 = vmul.u32 %v1330, %v1331
      %v1336 = vmul.u32 %v1330, %v1332
      %v1337 = vshll.u32 %v1334, 16
      %v1338 = vshrl.u32 %v1334, 16
      %v1339 = vshll.u32 %v1335, 16
      %v1340 = vshrl.u32 %v1335, 16
      %vm1341 = vc.u32 %v1333, %v1337
      %v1342 = vsel %vm1341, 1, 0
      %v1343 = vadd.s32 %v1333, %v1337
      %v1344 = vadd.s32 %v1336, %v1342
      %vm1345 = vc.u32 %v1343, %v1339
      %v1346 = vsel %vm1345, 1, 0
      %v1347 = vadd.s32 %v1343, %v1339
      %v1348 = vadd.s32 %v1344, %v1346
      %v1349 = vadd.s32 %v1348, %v1338
      %v1350 = vadd.s32 %v1349, %v1340
      %v1351 = vmul.u32 %v1306, %v1297
      %v1352 = vadd.s32 %v1328, %v1347
      %vm1353 = vc.u32 %v1328, %v1347
      %v1354 = vadd.s32 %v1350, 1
      %v1355 = vsel %vm1353, %v1354, %v1350
      %v1356 = vadd.s32 %v1351, %v1355
      %v1357 = vadd.s32 %v1356, 536870912
      %v1358 = vshrl.u32 %v1357, 30
      %v1359 = vshll.u32 %v1358, 30
      %v1360 = vsub.s32 %v1356, %v1359
      %vm1361 = vcmp.lt.s32.totalorder %v1360, 0
      %v1362 = vsub.s32 0, %v1360
      %v1363 = vsel %vm1361, %v1362, %v1360
      %v1364 = vclz %v1363
      %v1365 = vsub.s32 %v1364, 2
      %vm1366 = vcmp.gt.s32.totalorder 0, %v1365
      %v1367 = vsel %vm1366, 0, %v1365
      %v1368 = vsub.s32 32, %v1367
      %v1369 = vshll.u32 %v1360, %v1367
      %v1370 = vshrl.u32 %v1352, %v1368
      %v1371 = vor.u32 %v1369, %v1370
      %v1372 = vsub.s32 4294967266, %v1367
      %v1373 = vadd.s32 %v1372, 127
      %v1374 = vshll.u32 %v1373, 23
      %v1375 = vor.u32 4788187, %v1374
      %v1376 = vand.u32 2147483647, %v1375
      %v1378 = vcvt.s32.f32 %v1371
      %v1379 = vmul.f32 %v1378, %v1376
      %v1380 = vxor.u32 %v1379, 2147483648
      %v1381 = vsel %vm1260, %v1380, %v1379
      %v1382 = vsub.s32 4, %v1358
      %v1383 = vsel %vm1260, %v1382, %v1358
      %v1384 = vsel %vm1259, %v763, %v1381
      %v1385 = vsel %vm1259, 0, %v1383
      %v1386 = vmul.f32 %v1384, %v1384
      %v1387 = vmul.f32 %v1386, -0.001358992
      %v1388 = vadd.f32 %v1387, 0.041655596
      %v1389 = vmul.f32 %v1386, %v1388
      %v1390 = vadd.f32 %v1389, -0.4999988
      %v1391 = vmul.f32 %v1386, %v1390
      %v1392 = vadd.f32 1.0, %v1391
      %v1393 = vmul.f32 %v1384, %v1384
      %v1394 = vmul.f32 %v1393, -0.00019511016
      %v1395 = vadd.f32 %v1394, 0.008332121
      %v1396 = vmul.f32 %v1393, %v1395
      %v1397 = vadd.f32 %v1396, -0.16666654
      %v1398 = vmul.f32 %v1393, %v1397
      %v1399 = vadd.f32 %v1398, 1.0
      %v1400 = vmul.f32 %v1399, %v1384
      %vm1401 = vweird.f32 %v763
      %v1402 = vadd.s32 %v1385, 3
      %v1403 = vand.u32 %v1402, 3
      %vm1404 = vcmp.lt.s32.totalorder %v1403, 2
      %vm1405 = vcmp.eq.s32.totalorder %v1403, 0
      %v1406 = vxor.u32 %v1400, 2147483648
      %v1407 = vsel %vm1405, %v1392, %v1406
      %vm1408 = vcmp.eq.s32.totalorder %v1403, 2
      %v1409 = vxor.u32 %v1392, 2147483648
      %v1410 = vsel %vm1408, %v1409, %v1400
      %v1411 = vsel %vm1404, %v1407, %v1410
      %v1412 = vsel %vm1401, nan, %v1411
      %v1413 = vand.u32 2147483647, %v764
      %vm1414 = vcmp.le.f32.partialorder %v1413, 0.7853982
      %vm1415 = vcmp.lt.s32.totalorder %v764, 0
      %v1416 = vand.u32 %v764, 2139095040
      %v1417 = vshrl.u32 %v1416, 23
      %v1418 = vsub.s32 %v1417, 127
      %v1419 = vand.u32 2147483647, %v764
      %v1420 = vand.u32 %v1419, 8388607
      %v1421 = vor.u32 %v1420, 8388608
      %v1422 = vsub.s32 0, %v1421
      %v1423 = vadd.s32 %v1418, 1
      %vm1424 = vcmp.gt.s32.totalorder %v1423, 0
      %v1425 = vsel %vm1424, %v1423, 0
      %v1426 = vshrl.u32 %v1425, 5
      %v1427 = vand.u32 %v1425, 31
      %v1428 = vsub.s32 32, %v1427
      %v1429 = vshrl.u32 683565275, %v1428
      %v1430 = vshll.u32 683565275, %v1427
      %v1431 = vshrl.u32 2475754826, %v1428
      %v1432 = vor.u32 %v1430, %v1431
      %v1433 = vshll.u32 2475754826, %v1427
      %v1434 = vshrl.u32 2131351028, %v1428
      %v1435 = vor.u32 %v1433, %v1434
      %v1436 = vshll.u32 2131351028, %v1427
      %v1437 = vshrl.u32 2102212464, %v1428
      %v1438 = vor.u32 %v1436, %v1437
      %v1439 = vshll.u32 2102212464, %v1427
      %v1440 = vshrl.u32 920167782, %v1428
      %v1441 = vor.u32 %v1439, %v1440
      %v1442 = vshll.u32 920167782, %v1427
      %v1443 = vshrl.u32 1326507024, %v1428
      %v1444 = vor.u32 %v1442, %v1443
      %vm1445 = vcmp.lt.s32.totalorder %v1426, 1
      %vm1446 = vcmp.lt.s32.totalorder %v1426, 2
      %vm1447 = vcmp.lt.s32.totalorder %v1426, 3
      %vm1448 = vcmp.lt.s32.totalorder %v1426, 4
      %v1449 = vsel %vm1445, %v1429, %v1432
      %v1450 = vsel %vm1448, %v1438, 2102212464
      %v1451 = vsel %vm1447, %v1435, %v1450
      %v1452 = vsel %vm1446, %v1449, %v1451
      %v1453 = vsel %vm1445, %v1432, %v1435
      %v1454 = vsel %vm1448, %v1441, 920167782
      %v1455 = vsel %vm1447, %v1438, %v1454
      %v1456 = vsel %vm1446, %v1453, %v1455
      %v1457 = vsel %vm1445, %v1435, %v1438
      %v1458 = vsel %vm1448, %v1444, 1326507024
      %v1459 = vsel %vm1447, %v1441, %v1458
      %v1460 = vsel %vm1446, %v1457, %v1459
      %v1461 = vshll.u32 %v1421, 8
      %v1462 = vand.u32 %v1461, 65535
      %v1463 = vshrl.u32 %v1461, 16
      %v1464 = vand.u32 %v1460, 65535
      %v1465 = vshrl.u32 %v1460, 16
      %v1466 = vmul.u32 %v1462, %v1464
      %v1467 = vmul.u32 %v1462, %v1465
      %v1468 = vmul.u32 %v1463, %v1464
      %v1469 = vmul.u32 %v1463, %v1465
      %v1470 = vshll.u32 %v1467, 16
      %v1471 = vshrl.u32 %v1467, 16
      %v1472 = vshll.u32 %v1468, 16
      %v1473 = vshrl.u32 %v1468, 16
      %vm1474 = vc.u32 %v1466, %v1470
      %v1475 = vsel %vm1474, 1, 0
      %v1476 = vadd.s32 %v1466, %v1470
      %v1477 = vadd.s32 %v1469, %v1475
      %vm1478 = vc.u32 %v1476, %v1472
      %v1479 = vsel %vm1478, 1, 0
      %v1480 = vadd.s32 %v1476, %v1472
      %v1481 = vadd.s32 %v1477, %v1479
      %v1482 = vadd.s32 %v1481, %v1471
      %v1483 = vadd.s32 %v1482, %v1473
      %v1484 = vand.u32 %v1461, 65535
      %v1485 = vshrl.u32 %v1461, 16
      %v1486 = vand.u32 %v1456, 65535
      %v1487 = vshrl.u32 %v1456, 16
      %v1488 = vmul.u32 %v1484, %v1486
      %v1489 = vmul.u32 %v1484, %v1487
      %v1490 = vmul.u32 %v1485, %v1486
      %v1491 = vmul.u32 %v1485, %v1487
      %v1492 = vshll.u32 %v1489, 16
      %v1493 = vshrl.u32 %v1489, 16
      %v1494 = vshll.u32 %v1490, 16
      %v1495 = vshrl.u32 %v1490, 16
      %vm1496 = vc.u32 %v1488, %v1492
      %v1497 = vsel %vm1496, 1, 0
      %v1498 = vadd.s32 %v1488, %v1492
      %v1499 = vadd.s32 %v1491, %v1497
      %vm1500 = vc.u32 %v1498, %v1494
      %v1501 = vsel %vm1500, 1, 0
      %v1502 = vadd.s32 %v1498, %v1494
      %v1503 = vadd.s32 %v1499, %v1501
      %v1504 = vadd.s32 %v1503, %v1493
      %v1505 = vadd.s32 %v1504, %v1495
      %v1506 = vmul.u32 %v1461, %v1452
      %v1507 = vadd.s32 %v1483, %v1502
      %vm1508 = vc.u32 %v1483, %v1502
      %v1509 = vadd.s32 %v1505, 1
      %v1510 = vsel %vm1508, %v1509, %v1505
      %v1511 = vadd.s32 %v1506, %v1510
      %v1512 = vadd.s32 %v1511, 536870912
      %v1513 = vshrl.u32 %v1512, 30
      %v1514 = vshll.u32 %v1513, 30
      %v1515 = vsub.s32 %v1511, %v1514
      %vm1516 = vcmp.lt.s32.totalorder %v1515, 0
      %v1517 = vsub.s32 0, %v1515
      %v1518 = vsel %vm1516, %v1517, %v1515
      %v1519 = vclz %v1518
      %v1520 = vsub.s32 %v1519, 2
      %vm1521 = vcmp.gt.s32.totalorder 0, %v1520
      %v1522 = vsel %vm1521, 0, %v1520
      %v1523 = vsub.s32 32, %v1522
      %v1524 = vshll.u32 %v1515, %v1522
      %v1525 = vshrl.u32 %v1507, %v1523
      %v1526 = vor.u32 %v1524, %v1525
      %v1527 = vsub.s32 4294967266, %v1522
      %v1528 = vadd.s32 %v1527, 127
      %v1529 = vshll.u32 %v1528, 23
      %v1530 = vor.u32 4788187, %v1529
      %v1531 = vand.u32 2147483647, %v1530
      %v1533 = vcvt.s32.f32 %v1526
      %v1534 = vmul.f32 %v1533, %v1531
      %v1535 = vxor.u32 %v1534, 2147483648
      %v1536 = vsel %vm1415, %v1535, %v1534
      %v1537 = vsub.s32 4, %v1513
      %v1538 = vsel %vm1415, %v1537, %v1513
      %v1539 = vsel %vm1414, %v764, %v1536
      %v1540 = vsel %vm1414, 0, %v1538
      %v1541 = vmul.f32 %v1539, %v1539
      %v1542 = vmul.f32 %v1541, -0.001358992
      %v1543 = vadd.f32 %v1542, 0.041655596
      %v1544 = vmul.f32 %v1541, %v1543
      %v1545 = vadd.f32 %v1544, -0.4999988
      %v1546 = vmul.f32 %v1541, %v1545
      %v1547 = vadd.f32 1.0, %v1546
      %v1548 = vmul.f32 %v1539, %v1539
      %v1549 = vmul.f32 %v1548, -0.00019511016
      %v1550 = vadd.f32 %v1549, 0.008332121
      %v1551 = vmul.f32 %v1548, %v1550
      %v1552 = vadd.f32 %v1551, -0.16666654
      %v1553 = vmul.f32 %v1548, %v1552
      %v1554 = vadd.f32 %v1553, 1.0
      %v1555 = vmul.f32 %v1554, %v1539
      %vm1556 = vweird.f32 %v764
      %v1557 = vadd.s32 %v1540, 3
      %v1558 = vand.u32 %v1557, 3
      %vm1559 = vcmp.lt.s32.totalorder %v1558, 2
      %vm1560 = vcmp.eq.s32.totalorder %v1558, 0
      %v1561 = vxor.u32 %v1555, 2147483648
      %v1562 = vsel %vm1560, %v1547, %v1561
      %vm1563 = vcmp.eq.s32.totalorder %v1558, 2
      %v1564 = vxor.u32 %v1547, 2147483648
      %v1565 = vsel %vm1563, %v1564, %v1555
      %v1566 = vsel %vm1559, %v1562, %v1565
      %v1567 = vsel %vm1556, nan, %v1566
      %v1568 = vand.u32 2147483647, %v765
      %vm1569 = vcmp.le.f32.partialorder %v1568, 0.7853982
      %vm1570 = vcmp.lt.s32.totalorder %v765, 0
      %v1571 = vand.u32 %v765, 2139095040
      %v1572 = vshrl.u32 %v1571, 23
      %v1573 = vsub.s32 %v1572, 127
      %v1574 = vand.u32 2147483647, %v765
      %v1575 = vand.u32 %v1574, 8388607
      %v1576 = vor.u32 %v1575, 8388608
      %v1577 = vsub.s32 0, %v1576
      %v1578 = vadd.s32 %v1573, 1
      %vm1579 = vcmp.gt.s32.totalorder %v1578, 0
      %v1580 = vsel %vm1579, %v1578, 0
      %v1581 = vshrl.u32 %v1580, 5
      %v1582 = vand.u32 %v1580, 31
      %v1583 = vsub.s32 32, %v1582
      %v1584 = vshrl.u32 683565275, %v1583
      %v1585 = vshll.u32 683565275, %v1582
      %v1586 = vshrl.u32 2475754826, %v1583
      %v1587 = vor.u32 %v1585, %v1586
      %v1588 = vshll.u32 2475754826, %v1582
      %v1589 = vshrl.u32 2131351028, %v1583
      %v1590 = vor.u32 %v1588, %v1589
      %v1591 = vshll.u32 2131351028, %v1582
      %v1592 = vshrl.u32 2102212464, %v1583
      %v1593 = vor.u32 %v1591, %v1592
      %v1594 = vshll.u32 2102212464, %v1582
      %v1595 = vshrl.u32 920167782, %v1583
      %v1596 = vor.u32 %v1594, %v1595
      %v1597 = vshll.u32 920167782, %v1582
      %v1598 = vshrl.u32 1326507024, %v1583
      %v1599 = vor.u32 %v1597, %v1598
      %vm1600 = vcmp.lt.s32.totalorder %v1581, 1
      %vm1601 = vcmp.lt.s32.totalorder %v1581, 2
      %vm1602 = vcmp.lt.s32.totalorder %v1581, 3
      %vm1603 = vcmp.lt.s32.totalorder %v1581, 4
      %v1604 = vsel %vm1600, %v1584, %v1587
      %v1605 = vsel %vm1603, %v1593, 2102212464
      %v1606 = vsel %vm1602, %v1590, %v1605
      %v1607 = vsel %vm1601, %v1604, %v1606
      %v1608 = vsel %vm1600, %v1587, %v1590
      %v1609 = vsel %vm1603, %v1596, 920167782
      %v1610 = vsel %vm1602, %v1593, %v1609
      %v1611 = vsel %vm1601, %v1608, %v1610
      %v1612 = vsel %vm1600, %v1590, %v1593
      %v1613 = vsel %vm1603, %v1599, 1326507024
      %v1614 = vsel %vm1602, %v1596, %v1613
      %v1615 = vsel %vm1601, %v1612, %v1614
      %v1616 = vshll.u32 %v1576, 8
      %v1617 = vand.u32 %v1616, 65535
      %v1618 = vshrl.u32 %v1616, 16
      %v1619 = vand.u32 %v1615, 65535
      %v1620 = vshrl.u32 %v1615, 16
      %v1621 = vmul.u32 %v1617, %v1619
      %v1622 = vmul.u32 %v1617, %v1620
      %v1623 = vmul.u32 %v1618, %v1619
      %v1624 = vmul.u32 %v1618, %v1620
      %v1625 = vshll.u32 %v1622, 16
      %v1626 = vshrl.u32 %v1622, 16
      %v1627 = vshll.u32 %v1623, 16
      %v1628 = vshrl.u32 %v1623, 16
      %vm1629 = vc.u32 %v1621, %v1625
      %v1630 = vsel %vm1629, 1, 0
      %v1631 = vadd.s32 %v1621, %v1625
      %v1632 = vadd.s32 %v1624, %v1630
      %vm1633 = vc.u32 %v1631, %v1627
      %v1634 = vsel %vm1633, 1, 0
      %v1635 = vadd.s32 %v1631, %v1627
      %v1636 = vadd.s32 %v1632, %v1634
      %v1637 = vadd.s32 %v1636, %v1626
      %v1638 = vadd.s32 %v1637, %v1628
      %v1639 = vand.u32 %v1616, 65535
      %v1640 = vshrl.u32 %v1616, 16
      %v1641 = vand.u32 %v1611, 65535
      %v1642 = vshrl.u32 %v1611, 16
      %v1643 = vmul.u32 %v1639, %v1641
      %v1644 = vmul.u32 %v1639, %v1642
      %v1645 = vmul.u32 %v1640, %v1641
      %v1646 = vmul.u32 %v1640, %v1642
      %v1647 = vshll.u32 %v1644, 16
      %v1648 = vshrl.u32 %v1644, 16
      %v1649 = vshll.u32 %v1645, 16
      %v1650 = vshrl.u32 %v1645, 16
      %vm1651 = vc.u32 %v1643, %v1647
      %v1652 = vsel %vm1651, 1, 0
      %v1653 = vadd.s32 %v1643, %v1647
      %v1654 = vadd.s32 %v1646, %v1652
      %vm1655 = vc.u32 %v1653, %v1649
      %v1656 = vsel %vm1655, 1, 0
      %v1657 = vadd.s32 %v1653, %v1649
      %v1658 = vadd.s32 %v1654, %v1656
      %v1659 = vadd.s32 %v1658, %v1648
      %v1660 = vadd.s32 %v1659, %v1650
      %v1661 = vmul.u32 %v1616, %v1607
      %v1662 = vadd.s32 %v1638, %v1657
      %vm1663 = vc.u32 %v1638, %v1657
      %v1664 = vadd.s32 %v1660, 1
      %v1665 = vsel %vm1663, %v1664, %v1660
      %v1666 = vadd.s32 %v1661, %v1665
      %v1667 = vadd.s32 %v1666, 536870912
      %v1668 = vshrl.u32 %v1667, 30
      %v1669 = vshll.u32 %v1668, 30
      %v1670 = vsub.s32 %v1666, %v1669
      %vm1671 = vcmp.lt.s32.totalorder %v1670, 0
      %v1672 = vsub.s32 0, %v1670
      %v1673 = vsel %vm1671, %v1672, %v1670
      %v1674 = vclz %v1673
      %v1675 = vsub.s32 %v1674, 2
      %vm1676 = vcmp.gt.s32.totalorder 0, %v1675
      %v1677 = vsel %vm1676, 0, %v1675
      %v1678 = vsub.s32 32, %v1677
      %v1679 = vshll.u32 %v1670, %v1677
      %v1680 = vshrl.u32 %v1662, %v1678
      %v1681 = vor.u32 %v1679, %v1680
      %v1682 = vsub.s32 4294967266, %v1677
      %v1683 = vadd.s32 %v1682, 127
      %v1684 = vshll.u32 %v1683, 23
      %v1685 = vor.u32 4788187, %v1684
      %v1686 = vand.u32 2147483647, %v1685
      %v1688 = vcvt.s32.f32 %v1681
      %v1689 = vmul.f32 %v1688, %v1686
      %v1690 = vxor.u32 %v1689, 2147483648
      %v1691 = vsel %vm1570, %v1690, %v1689
      %v1692 = vsub.s32 4, %v1668
      %v1693 = vsel %vm1570, %v1692, %v1668
      %v1694 = vsel %vm1569, %v765, %v1691
      %v1695 = vsel %vm1569, 0, %v1693
      %v1696 = vmul.f32 %v1694, %v1694
      %v1697 = vmul.f32 %v1696, -0.001358992
      %v1698 = vadd.f32 %v1697, 0.041655596
      %v1699 = vmul.f32 %v1696, %v1698
      %v1700 = vadd.f32 %v1699, -0.4999988
      %v1701 = vmul.f32 %v1696, %v1700
      %v1702 = vadd.f32 1.0, %v1701
      %v1703 = vmul.f32 %v1694, %v1694
      %v1704 = vmul.f32 %v1703, -0.00019511016
      %v1705 = vadd.f32 %v1704, 0.008332121
      %v1706 = vmul.f32 %v1703, %v1705
      %v1707 = vadd.f32 %v1706, -0.16666654
      %v1708 = vmul.f32 %v1703, %v1707
      %v1709 = vadd.f32 %v1708, 1.0
      %v1710 = vmul.f32 %v1709, %v1694
      %vm1711 = vweird.f32 %v765
      %v1712 = vadd.s32 %v1695, 3
      %v1713 = vand.u32 %v1712, 3
      %vm1714 = vcmp.lt.s32.totalorder %v1713, 2
      %vm1715 = vcmp.eq.s32.totalorder %v1713, 0
      %v1716 = vxor.u32 %v1710, 2147483648
      %v1717 = vsel %vm1715, %v1702, %v1716
      %vm1718 = vcmp.eq.s32.totalorder %v1713, 2
      %v1719 = vxor.u32 %v1702, 2147483648
      %v1720 = vsel %vm1718, %v1719, %v1710
      %v1721 = vsel %vm1714, %v1717, %v1720
      %v1722 = vsel %vm1711, nan, %v1721
      %v1723 = vand.u32 2147483647, %v766
      %vm1724 = vcmp.le.f32.partialorder %v1723, 0.7853982
      %vm1725 = vcmp.lt.s32.totalorder %v766, 0
      %v1726 = vand.u32 %v766, 2139095040
      %v1727 = vshrl.u32 %v1726, 23
      %v1728 = vsub.s32 %v1727, 127
      %v1729 = vand.u32 2147483647, %v766
      %v1730 = vand.u32 %v1729, 8388607
      %v1731 = vor.u32 %v1730, 8388608
      %v1732 = vsub.s32 0, %v1731
      %v1733 = vadd.s32 %v1728, 1
      %vm1734 = vcmp.gt.s32.totalorder %v1733, 0
      %v1735 = vsel %vm1734, %v1733, 0
      %v1736 = vshrl.u32 %v1735, 5
      %v1737 = vand.u32 %v1735, 31
      %v1738 = vsub.s32 32, %v1737
      %v1739 = vshrl.u32 683565275, %v1738
      %v1740 = vshll.u32 683565275, %v1737
      %v1741 = vshrl.u32 2475754826, %v1738
      %v1742 = vor.u32 %v1740, %v1741
      %v1743 = vshll.u32 2475754826, %v1737
      %v1744 = vshrl.u32 2131351028, %v1738
      %v1745 = vor.u32 %v1743, %v1744
      %v1746 = vshll.u32 2131351028, %v1737
      %v1747 = vshrl.u32 2102212464, %v1738
      %v1748 = vor.u32 %v1746, %v1747
      %v1749 = vshll.u32 2102212464, %v1737
      %v1750 = vshrl.u32 920167782, %v1738
      %v1751 = vor.u32 %v1749, %v1750
      %v1752 = vshll.u32 920167782, %v1737
      %v1753 = vshrl.u32 1326507024, %v1738
      %v1754 = vor.u32 %v1752, %v1753
      %vm1755 = vcmp.lt.s32.totalorder %v1736, 1
      %vm1756 = vcmp.lt.s32.totalorder %v1736, 2
      %vm1757 = vcmp.lt.s32.totalorder %v1736, 3
      %vm1758 = vcmp.lt.s32.totalorder %v1736, 4
      %v1759 = vsel %vm1755, %v1739, %v1742
      %v1760 = vsel %vm1758, %v1748, 2102212464
      %v1761 = vsel %vm1757, %v1745, %v1760
      %v1762 = vsel %vm1756, %v1759, %v1761
      %v1763 = vsel %vm1755, %v1742, %v1745
      %v1764 = vsel %vm1758, %v1751, 920167782
      %v1765 = vsel %vm1757, %v1748, %v1764
      %v1766 = vsel %vm1756, %v1763, %v1765
      %v1767 = vsel %vm1755, %v1745, %v1748
      %v1768 = vsel %vm1758, %v1754, 1326507024
      %v1769 = vsel %vm1757, %v1751, %v1768
      %v1770 = vsel %vm1756, %v1767, %v1769
      %v1771 = vshll.u32 %v1731, 8
      %v1772 = vand.u32 %v1771, 65535
      %v1773 = vshrl.u32 %v1771, 16
      %v1774 = vand.u32 %v1770, 65535
      %v1775 = vshrl.u32 %v1770, 16
      %v1776 = vmul.u32 %v1772, %v1774
      %v1777 = vmul.u32 %v1772, %v1775
      %v1778 = vmul.u32 %v1773, %v1774
      %v1779 = vmul.u32 %v1773, %v1775
      %v1780 = vshll.u32 %v1777, 16
      %v1781 = vshrl.u32 %v1777, 16
      %v1782 = vshll.u32 %v1778, 16
      %v1783 = vshrl.u32 %v1778, 16
      %vm1784 = vc.u32 %v1776, %v1780
      %v1785 = vsel %vm1784, 1, 0
      %v1786 = vadd.s32 %v1776, %v1780
      %v1787 = vadd.s32 %v1779, %v1785
      %vm1788 = vc.u32 %v1786, %v1782
      %v1789 = vsel %vm1788, 1, 0
      %v1790 = vadd.s32 %v1786, %v1782
      %v1791 = vadd.s32 %v1787, %v1789
      %v1792 = vadd.s32 %v1791, %v1781
      %v1793 = vadd.s32 %v1792, %v1783
      %v1794 = vand.u32 %v1771, 65535
      %v1795 = vshrl.u32 %v1771, 16
      %v1796 = vand.u32 %v1766, 65535
      %v1797 = vshrl.u32 %v1766, 16
      %v1798 = vmul.u32 %v1794, %v1796
      %v1799 = vmul.u32 %v1794, %v1797
      %v1800 = vmul.u32 %v1795, %v1796
      %v1801 = vmul.u32 %v1795, %v1797
      %v1802 = vshll.u32 %v1799, 16
      %v1803 = vshrl.u32 %v1799, 16
      %v1804 = vshll.u32 %v1800, 16
      %v1805 = vshrl.u32 %v1800, 16
      %vm1806 = vc.u32 %v1798, %v1802
      %v1807 = vsel %vm1806, 1, 0
      %v1808 = vadd.s32 %v1798, %v1802
      %v1809 = vadd.s32 %v1801, %v1807
      %vm1810 = vc.u32 %v1808, %v1804
      %v1811 = vsel %vm1810, 1, 0
      %v1812 = vadd.s32 %v1808, %v1804
      %v1813 = vadd.s32 %v1809, %v1811
      %v1814 = vadd.s32 %v1813, %v1803
      %v1815 = vadd.s32 %v1814, %v1805
      %v1816 = vmul.u32 %v1771, %v1762
      %v1817 = vadd.s32 %v1793, %v1812
      %vm1818 = vc.u32 %v1793, %v1812
      %v1819 = vadd.s32 %v1815, 1
      %v1820 = vsel %vm1818, %v1819, %v1815
      %v1821 = vadd.s32 %v1816, %v1820
      %v1822 = vadd.s32 %v1821, 536870912
      %v1823 = vshrl.u32 %v1822, 30
      %v1824 = vshll.u32 %v1823, 30
      %v1825 = vsub.s32 %v1821, %v1824
      %vm1826 = vcmp.lt.s32.totalorder %v1825, 0
      %v1827 = vsub.s32 0, %v1825
      %v1828 = vsel %vm1826, %v1827, %v1825
      %v1829 = vclz %v1828
      %v1830 = vsub.s32 %v1829, 2
      %vm1831 = vcmp.gt.s32.totalorder 0, %v1830
      %v1832 = vsel %vm1831, 0, %v1830
      %v1833 = vsub.s32 32, %v1832
      %v1834 = vshll.u32 %v1825, %v1832
      %v1835 = vshrl.u32 %v1817, %v1833
      %v1836 = vor.u32 %v1834, %v1835
      %v1837 = vsub.s32 4294967266, %v1832
      %v1838 = vadd.s32 %v1837, 127
      %v1839 = vshll.u32 %v1838, 23
      %v1840 = vor.u32 4788187, %v1839
      %v1841 = vand.u32 2147483647, %v1840
      %v1843 = vcvt.s32.f32 %v1836
      %v1844 = vmul.f32 %v1843, %v1841
      %v1845 = vxor.u32 %v1844, 2147483648
      %v1846 = vsel %vm1725, %v1845, %v1844
      %v1847 = vsub.s32 4, %v1823
      %v1848 = vsel %vm1725, %v1847, %v1823
      %v1849 = vsel %vm1724, %v766, %v1846
      %v1850 = vsel %vm1724, 0, %v1848
      %v1851 = vmul.f32 %v1849, %v1849
      %v1852 = vmul.f32 %v1851, -0.001358992
      %v1853 = vadd.f32 %v1852, 0.041655596
      %v1854 = vmul.f32 %v1851, %v1853
      %v1855 = vadd.f32 %v1854, -0.4999988
      %v1856 = vmul.f32 %v1851, %v1855
      %v1857 = vadd.f32 1.0, %v1856
      %v1858 = vmul.f32 %v1849, %v1849
      %v1859 = vmul.f32 %v1858, -0.00019511016
      %v1860 = vadd.f32 %v1859, 0.008332121
      %v1861 = vmul.f32 %v1858, %v1860
      %v1862 = vadd.f32 %v1861, -0.16666654
      %v1863 = vmul.f32 %v1858, %v1862
      %v1864 = vadd.f32 %v1863, 1.0
      %v1865 = vmul.f32 %v1864, %v1849
      %vm1866 = vweird.f32 %v766
      %v1867 = vadd.s32 %v1850, 3
      %v1868 = vand.u32 %v1867, 3
      %vm1869 = vcmp.lt.s32.totalorder %v1868, 2
      %vm1870 = vcmp.eq.s32.totalorder %v1868, 0
      %v1871 = vxor.u32 %v1865, 2147483648
      %v1872 = vsel %vm1870, %v1857, %v1871
      %vm1873 = vcmp.eq.s32.totalorder %v1868, 2
      %v1874 = vxor.u32 %v1857, 2147483648
      %v1875 = vsel %vm1873, %v1874, %v1865
      %v1876 = vsel %vm1869, %v1872, %v1875
      %v1877 = vsel %vm1866, nan, %v1876
      %v1878 = vand.u32 2147483647, %v767
      %vm1879 = vcmp.le.f32.partialorder %v1878, 0.7853982
      %vm1880 = vcmp.lt.s32.totalorder %v767, 0
      %v1881 = vand.u32 %v767, 2139095040
      %v1882 = vshrl.u32 %v1881, 23
      %v1883 = vsub.s32 %v1882, 127
      %v1884 = vand.u32 2147483647, %v767
      %v1885 = vand.u32 %v1884, 8388607
      %v1886 = vor.u32 %v1885, 8388608
      %v1887 = vsub.s32 0, %v1886
      %v1888 = vadd.s32 %v1883, 1
      %vm1889 = vcmp.gt.s32.totalorder %v1888, 0
      %v1890 = vsel %vm1889, %v1888, 0
      %v1891 = vshrl.u32 %v1890, 5
      %v1892 = vand.u32 %v1890, 31
      %v1893 = vsub.s32 32, %v1892
      %v1894 = vshrl.u32 683565275, %v1893
      %v1895 = vshll.u32 683565275, %v1892
      %v1896 = vshrl.u32 2475754826, %v1893
      %v1897 = vor.u32 %v1895, %v1896
      %v1898 = vshll.u32 2475754826, %v1892
      %v1899 = vshrl.u32 2131351028, %v1893
      %v1900 = vor.u32 %v1898, %v1899
      %v1901 = vshll.u32 2131351028, %v1892
      %v1902 = vshrl.u32 2102212464, %v1893
      %v1903 = vor.u32 %v1901, %v1902
      %v1904 = vshll.u32 2102212464, %v1892
      %v1905 = vshrl.u32 920167782, %v1893
      %v1906 = vor.u32 %v1904, %v1905
      %v1907 = vshll.u32 920167782, %v1892
      %v1908 = vshrl.u32 1326507024, %v1893
      %v1909 = vor.u32 %v1907, %v1908
      %vm1910 = vcmp.lt.s32.totalorder %v1891, 1
      %vm1911 = vcmp.lt.s32.totalorder %v1891, 2
      %vm1912 = vcmp.lt.s32.totalorder %v1891, 3
      %vm1913 = vcmp.lt.s32.totalorder %v1891, 4
      %v1914 = vsel %vm1910, %v1894, %v1897
      %v1915 = vsel %vm1913, %v1903, 2102212464
      %v1916 = vsel %vm1912, %v1900, %v1915
      %v1917 = vsel %vm1911, %v1914, %v1916
      %v1918 = vsel %vm1910, %v1897, %v1900
      %v1919 = vsel %vm1913, %v1906, 920167782
      %v1920 = vsel %vm1912, %v1903, %v1919
      %v1921 = vsel %vm1911, %v1918, %v1920
      %v1922 = vsel %vm1910, %v1900, %v1903
      %v1923 = vsel %vm1913, %v1909, 1326507024
      %v1924 = vsel %vm1912, %v1906, %v1923
      %v1925 = vsel %vm1911, %v1922, %v1924
      %v1926 = vshll.u32 %v1886, 8
      %v1927 = vand.u32 %v1926, 65535
      %v1928 = vshrl.u32 %v1926, 16
      %v1929 = vand.u32 %v1925, 65535
      %v1930 = vshrl.u32 %v1925, 16
      %v1931 = vmul.u32 %v1927, %v1929
      %v1932 = vmul.u32 %v1927, %v1930
      %v1933 = vmul.u32 %v1928, %v1929
      %v1934 = vmul.u32 %v1928, %v1930
      %v1935 = vshll.u32 %v1932, 16
      %v1936 = vshrl.u32 %v1932, 16
      %v1937 = vshll.u32 %v1933, 16
      %v1938 = vshrl.u32 %v1933, 16
      %vm1939 = vc.u32 %v1931, %v1935
      %v1940 = vsel %vm1939, 1, 0
      %v1941 = vadd.s32 %v1931, %v1935
      %v1942 = vadd.s32 %v1934, %v1940
      %vm1943 = vc.u32 %v1941, %v1937
      %v1944 = vsel %vm1943, 1, 0
      %v1945 = vadd.s32 %v1941, %v1937
      %v1946 = vadd.s32 %v1942, %v1944
      %v1947 = vadd.s32 %v1946, %v1936
      %v1948 = vadd.s32 %v1947, %v1938
      %v1949 = vand.u32 %v1926, 65535
      %v1950 = vshrl.u32 %v1926, 16
      %v1951 = vand.u32 %v1921, 65535
      %v1952 = vshrl.u32 %v1921, 16
      %v1953 = vmul.u32 %v1949, %v1951
      %v1954 = vmul.u32 %v1949, %v1952
      %v1955 = vmul.u32 %v1950, %v1951
      %v1956 = vmul.u32 %v1950, %v1952
      %v1957 = vshll.u32 %v1954, 16
      %v1958 = vshrl.u32 %v1954, 16
      %v1959 = vshll.u32 %v1955, 16
      %v1960 = vshrl.u32 %v1955, 16
      %vm1961 = vc.u32 %v1953, %v1957
      %v1962 = vsel %vm1961, 1, 0
      %v1963 = vadd.s32 %v1953, %v1957
      %v1964 = vadd.s32 %v1956, %v1962
      %vm1965 = vc.u32 %v1963, %v1959
      %v1966 = vsel %vm1965, 1, 0
      %v1967 = vadd.s32 %v1963, %v1959
      %v1968 = vadd.s32 %v1964, %v1966
      %v1969 = vadd.s32 %v1968, %v1958
      %v1970 = vadd.s32 %v1969, %v1960
      %v1971 = vmul.u32 %v1926, %v1917
      %v1972 = vadd.s32 %v1948, %v1967
      %vm1973 = vc.u32 %v1948, %v1967
      %v1974 = vadd.s32 %v1970, 1
      %v1975 = vsel %vm1973, %v1974, %v1970
      %v1976 = vadd.s32 %v1971, %v1975
      %v1977 = vadd.s32 %v1976, 536870912
      %v1978 = vshrl.u32 %v1977, 30
      %v1979 = vshll.u32 %v1978, 30
      %v1980 = vsub.s32 %v1976, %v1979
      %vm1981 = vcmp.lt.s32.totalorder %v1980, 0
      %v1982 = vsub.s32 0, %v1980
      %v1983 = vsel %vm1981, %v1982, %v1980
      %v1984 = vclz %v1983
      %v1985 = vsub.s32 %v1984, 2
      %vm1986 = vcmp.gt.s32.totalorder 0, %v1985
      %v1987 = vsel %vm1986, 0, %v1985
      %v1988 = vsub.s32 32, %v1987
      %v1989 = vshll.u32 %v1980, %v1987
      %v1990 = vshrl.u32 %v1972, %v1988
      %v1991 = vor.u32 %v1989, %v1990
      %v1992 = vsub.s32 4294967266, %v1987
      %v1993 = vadd.s32 %v1992, 127
      %v1994 = vshll.u32 %v1993, 23
      %v1995 = vor.u32 4788187, %v1994
      %v1996 = vand.u32 2147483647, %v1995
      %v1998 = vcvt.s32.f32 %v1991
      %v1999 = vmul.f32 %v1998, %v1996
      %v2000 = vxor.u32 %v1999, 2147483648
      %v2001 = vsel %vm1880, %v2000, %v1999
      %v2002 = vsub.s32 4, %v1978
      %v2003 = vsel %vm1880, %v2002, %v1978
      %v2004 = vsel %vm1879, %v767, %v2001
      %v2005 = vsel %vm1879, 0, %v2003
      %v2006 = vmul.f32 %v2004, %v2004
      %v2007 = vmul.f32 %v2006, -0.001358992
      %v2008 = vadd.f32 %v2007, 0.041655596
      %v2009 = vmul.f32 %v2006, %v2008
      %v2010 = vadd.f32 %v2009, -0.4999988
      %v2011 = vmul.f32 %v2006, %v2010
      %v2012 = vadd.f32 1.0, %v2011
      %v2013 = vmul.f32 %v2004, %v2004
      %v2014 = vmul.f32 %v2013, -0.00019511016
      %v2015 = vadd.f32 %v2014, 0.008332121
      %v2016 = vmul.f32 %v2013, %v2015
      %v2017 = vadd.f32 %v2016, -0.16666654
      %v2018 = vmul.f32 %v2013, %v2017
      %v2019 = vadd.f32 %v2018, 1.0
      %v2020 = vmul.f32 %v2019, %v2004
      %vm2021 = vweird.f32 %v767
      %v2022 = vadd.s32 %v2005, 3
      %v2023 = vand.u32 %v2022, 3
      %vm2024 = vcmp.lt.s32.totalorder %v2023, 2
      %vm2025 = vcmp.eq.s32.totalorder %v2023, 0
      %v2026 = vxor.u32 %v2020, 2147483648
      %v2027 = vsel %vm2025, %v2012, %v2026
      %vm2028 = vcmp.eq.s32.totalorder %v2023, 2
      %v2029 = vxor.u32 %v2012, 2147483648
      %v2030 = vsel %vm2028, %v2029, %v2020
      %v2031 = vsel %vm2024, %v2027, %v2030
      %v2032 = vsel %vm2021, nan, %v2031
      %v2033 = vand.u32 2147483647, %v768
      %vm2034 = vcmp.le.f32.partialorder %v2033, 0.7853982
      %vm2035 = vcmp.lt.s32.totalorder %v768, 0
      %v2036 = vand.u32 %v768, 2139095040
      %v2037 = vshrl.u32 %v2036, 23
      %v2038 = vsub.s32 %v2037, 127
      %v2039 = vand.u32 2147483647, %v768
      %v2040 = vand.u32 %v2039, 8388607
      %v2041 = vor.u32 %v2040, 8388608
      %v2042 = vsub.s32 0, %v2041
      %v2043 = vadd.s32 %v2038, 1
      %vm2044 = vcmp.gt.s32.totalorder %v2043, 0
      %v2045 = vsel %vm2044, %v2043, 0
      %v2046 = vshrl.u32 %v2045, 5
      %v2047 = vand.u32 %v2045, 31
      %v2048 = vsub.s32 32, %v2047
      %v2049 = vshrl.u32 683565275, %v2048
      %v2050 = vshll.u32 683565275, %v2047
      %v2051 = vshrl.u32 2475754826, %v2048
      %v2052 = vor.u32 %v2050, %v2051
      %v2053 = vshll.u32 2475754826, %v2047
      %v2054 = vshrl.u32 2131351028, %v2048
      %v2055 = vor.u32 %v2053, %v2054
      %v2056 = vshll.u32 2131351028, %v2047
      %v2057 = vshrl.u32 2102212464, %v2048
      %v2058 = vor.u32 %v2056, %v2057
      %v2059 = vshll.u32 2102212464, %v2047
      %v2060 = vshrl.u32 920167782, %v2048
      %v2061 = vor.u32 %v2059, %v2060
      %v2062 = vshll.u32 920167782, %v2047
      %v2063 = vshrl.u32 1326507024, %v2048
      %v2064 = vor.u32 %v2062, %v2063
      %vm2065 = vcmp.lt.s32.totalorder %v2046, 1
      %vm2066 = vcmp.lt.s32.totalorder %v2046, 2
      %vm2067 = vcmp.lt.s32.totalorder %v2046, 3
      %vm2068 = vcmp.lt.s32.totalorder %v2046, 4
      %v2069 = vsel %vm2065, %v2049, %v2052
      %v2070 = vsel %vm2068, %v2058, 2102212464
      %v2071 = vsel %vm2067, %v2055, %v2070
      %v2072 = vsel %vm2066, %v2069, %v2071
      %v2073 = vsel %vm2065, %v2052, %v2055
      %v2074 = vsel %vm2068, %v2061, 920167782
      %v2075 = vsel %vm2067, %v2058, %v2074
      %v2076 = vsel %vm2066, %v2073, %v2075
      %v2077 = vsel %vm2065, %v2055, %v2058
      %v2078 = vsel %vm2068, %v2064, 1326507024
      %v2079 = vsel %vm2067, %v2061, %v2078
      %v2080 = vsel %vm2066, %v2077, %v2079
      %v2081 = vshll.u32 %v2041, 8
      %v2082 = vand.u32 %v2081, 65535
      %v2083 = vshrl.u32 %v2081, 16
      %v2084 = vand.u32 %v2080, 65535
      %v2085 = vshrl.u32 %v2080, 16
      %v2086 = vmul.u32 %v2082, %v2084
      %v2087 = vmul.u32 %v2082, %v2085
      %v2088 = vmul.u32 %v2083, %v2084
      %v2089 = vmul.u32 %v2083, %v2085
      %v2090 = vshll.u32 %v2087, 16
      %v2091 = vshrl.u32 %v2087, 16
      %v2092 = vshll.u32 %v2088, 16
      %v2093 = vshrl.u32 %v2088, 16
      %vm2094 = vc.u32 %v2086, %v2090
      %v2095 = vsel %vm2094, 1, 0
      %v2096 = vadd.s32 %v2086, %v2090
      %v2097 = vadd.s32 %v2089, %v2095
      %vm2098 = vc.u32 %v2096, %v2092
      %v2099 = vsel %vm2098, 1, 0
      %v2100 = vadd.s32 %v2096, %v2092
      %v2101 = vadd.s32 %v2097, %v2099
      %v2102 = vadd.s32 %v2101, %v2091
      %v2103 = vadd.s32 %v2102, %v2093
      %v2104 = vand.u32 %v2081, 65535
      %v2105 = vshrl.u32 %v2081, 16
      %v2106 = vand.u32 %v2076, 65535
      %v2107 = vshrl.u32 %v2076, 16
      %v2108 = vmul.u32 %v2104, %v2106
      %v2109 = vmul.u32 %v2104, %v2107
      %v2110 = vmul.u32 %v2105, %v2106
      %v2111 = vmul.u32 %v2105, %v2107
      %v2112 = vshll.u32 %v2109, 16
      %v2113 = vshrl.u32 %v2109, 16
      %v2114 = vshll.u32 %v2110, 16
      %v2115 = vshrl.u32 %v2110, 16
      %vm2116 = vc.u32 %v2108, %v2112
      %v2117 = vsel %vm2116, 1, 0
      %v2118 = vadd.s32 %v2108, %v2112
      %v2119 = vadd.s32 %v2111, %v2117
      %vm2120 = vc.u32 %v2118, %v2114
      %v2121 = vsel %vm2120, 1, 0
      %v2122 = vadd.s32 %v2118, %v2114
      %v2123 = vadd.s32 %v2119, %v2121
      %v2124 = vadd.s32 %v2123, %v2113
      %v2125 = vadd.s32 %v2124, %v2115
      %v2126 = vmul.u32 %v2081, %v2072
      %v2127 = vadd.s32 %v2103, %v2122
      %vm2128 = vc.u32 %v2103, %v2122
      %v2129 = vadd.s32 %v2125, 1
      %v2130 = vsel %vm2128, %v2129, %v2125
      %v2131 = vadd.s32 %v2126, %v2130
      %v2132 = vadd.s32 %v2131, 536870912
      %v2133 = vshrl.u32 %v2132, 30
      %v2134 = vshll.u32 %v2133, 30
      %v2135 = vsub.s32 %v2131, %v2134
      %vm2136 = vcmp.lt.s32.totalorder %v2135, 0
      %v2137 = vsub.s32 0, %v2135
      %v2138 = vsel %vm2136, %v2137, %v2135
      %v2139 = vclz %v2138
      %v2140 = vsub.s32 %v2139, 2
      %vm2141 = vcmp.gt.s32.totalorder 0, %v2140
      %v2142 = vsel %vm2141, 0, %v2140
      %v2143 = vsub.s32 32, %v2142
      %v2144 = vshll.u32 %v2135, %v2142
      %v2145 = vshrl.u32 %v2127, %v2143
      %v2146 = vor.u32 %v2144, %v2145
      %v2147 = vsub.s32 4294967266, %v2142
      %v2148 = vadd.s32 %v2147, 127
      %v2149 = vshll.u32 %v2148, 23
      %v2150 = vor.u32 4788187, %v2149
      %v2151 = vand.u32 2147483647, %v2150
      %v2153 = vcvt.s32.f32 %v2146
      %v2154 = vmul.f32 %v2153, %v2151
      %v2155 = vxor.u32 %v2154, 2147483648
      %v2156 = vsel %vm2035, %v2155, %v2154
      %v2157 = vsub.s32 4, %v2133
      %v2158 = vsel %vm2035, %v2157, %v2133
      %v2159 = vsel %vm2034, %v768, %v2156
      %v2160 = vsel %vm2034, 0, %v2158
      %v2161 = vmul.f32 %v2159, %v2159
      %v2162 = vmul.f32 %v2161, -0.001358992
      %v2163 = vadd.f32 %v2162, 0.041655596
      %v2164 = vmul.f32 %v2161, %v2163
      %v2165 = vadd.f32 %v2164, -0.4999988
      %v2166 = vmul.f32 %v2161, %v2165
      %v2167 = vadd.f32 1.0, %v2166
      %v2168 = vmul.f32 %v2159, %v2159
      %v2169 = vmul.f32 %v2168, -0.00019511016
      %v2170 = vadd.f32 %v2169, 0.008332121
      %v2171 = vmul.f32 %v2168, %v2170
      %v2172 = vadd.f32 %v2171, -0.16666654
      %v2173 = vmul.f32 %v2168, %v2172
      %v2174 = vadd.f32 %v2173, 1.0
      %v2175 = vmul.f32 %v2174, %v2159
      %vm2176 = vweird.f32 %v768
      %v2177 = vadd.s32 %v2160, 3
      %v2178 = vand.u32 %v2177, 3
      %vm2179 = vcmp.lt.s32.totalorder %v2178, 2
      %vm2180 = vcmp.eq.s32.totalorder %v2178, 0
      %v2181 = vxor.u32 %v2175, 2147483648
      %v2182 = vsel %vm2180, %v2167, %v2181
      %vm2183 = vcmp.eq.s32.totalorder %v2178, 2
      %v2184 = vxor.u32 %v2167, 2147483648
      %v2185 = vsel %vm2183, %v2184, %v2175
      %v2186 = vsel %vm2179, %v2182, %v2185
      %v2187 = vsel %vm2176, nan, %v2186
      %v2188 = vand.u32 2147483647, %v769
      %vm2189 = vcmp.le.f32.partialorder %v2188, 0.7853982
      %vm2190 = vcmp.lt.s32.totalorder %v769, 0
      %v2191 = vand.u32 %v769, 2139095040
      %v2192 = vshrl.u32 %v2191, 23
      %v2193 = vsub.s32 %v2192, 127
      %v2194 = vand.u32 2147483647, %v769
      %v2195 = vand.u32 %v2194, 8388607
      %v2196 = vor.u32 %v2195, 8388608
      %v2197 = vsub.s32 0, %v2196
      %v2198 = vadd.s32 %v2193, 1
      %vm2199 = vcmp.gt.s32.totalorder %v2198, 0
      %v2200 = vsel %vm2199, %v2198, 0
      %v2201 = vshrl.u32 %v2200, 5
      %v2202 = vand.u32 %v2200, 31
      %v2203 = vsub.s32 32, %v2202
      %v2204 = vshrl.u32 683565275, %v2203
      %v2205 = vshll.u32 683565275, %v2202
      %v2206 = vshrl.u32 2475754826, %v2203
      %v2207 = vor.u32 %v2205, %v2206
      %v2208 = vshll.u32 2475754826, %v2202
      %v2209 = vshrl.u32 2131351028, %v2203
      %v2210 = vor.u32 %v2208, %v2209
      %v2211 = vshll.u32 2131351028, %v2202
      %v2212 = vshrl.u32 2102212464, %v2203
      %v2213 = vor.u32 %v2211, %v2212
      %v2214 = vshll.u32 2102212464, %v2202
      %v2215 = vshrl.u32 920167782, %v2203
      %v2216 = vor.u32 %v2214, %v2215
      %v2217 = vshll.u32 920167782, %v2202
      %v2218 = vshrl.u32 1326507024, %v2203
      %v2219 = vor.u32 %v2217, %v2218
      %vm2220 = vcmp.lt.s32.totalorder %v2201, 1
      %vm2221 = vcmp.lt.s32.totalorder %v2201, 2
      %vm2222 = vcmp.lt.s32.totalorder %v2201, 3
      %vm2223 = vcmp.lt.s32.totalorder %v2201, 4
      %v2224 = vsel %vm2220, %v2204, %v2207
      %v2225 = vsel %vm2223, %v2213, 2102212464
      %v2226 = vsel %vm2222, %v2210, %v2225
      %v2227 = vsel %vm2221, %v2224, %v2226
      %v2228 = vsel %vm2220, %v2207, %v2210
      %v2229 = vsel %vm2223, %v2216, 920167782
      %v2230 = vsel %vm2222, %v2213, %v2229
      %v2231 = vsel %vm2221, %v2228, %v2230
      %v2232 = vsel %vm2220, %v2210, %v2213
      %v2233 = vsel %vm2223, %v2219, 1326507024
      %v2234 = vsel %vm2222, %v2216, %v2233
      %v2235 = vsel %vm2221, %v2232, %v2234
      %v2236 = vshll.u32 %v2196, 8
      %v2237 = vand.u32 %v2236, 65535
      %v2238 = vshrl.u32 %v2236, 16
      %v2239 = vand.u32 %v2235, 65535
      %v2240 = vshrl.u32 %v2235, 16
      %v2241 = vmul.u32 %v2237, %v2239
      %v2242 = vmul.u32 %v2237, %v2240
      %v2243 = vmul.u32 %v2238, %v2239
      %v2244 = vmul.u32 %v2238, %v2240
      %v2245 = vshll.u32 %v2242, 16
      %v2246 = vshrl.u32 %v2242, 16
      %v2247 = vshll.u32 %v2243, 16
      %v2248 = vshrl.u32 %v2243, 16
      %vm2249 = vc.u32 %v2241, %v2245
      %v2250 = vsel %vm2249, 1, 0
      %v2251 = vadd.s32 %v2241, %v2245
      %v2252 = vadd.s32 %v2244, %v2250
      %vm2253 = vc.u32 %v2251, %v2247
      %v2254 = vsel %vm2253, 1, 0
      %v2255 = vadd.s32 %v2251, %v2247
      %v2256 = vadd.s32 %v2252, %v2254
      %v2257 = vadd.s32 %v2256, %v2246
      %v2258 = vadd.s32 %v2257, %v2248
      %v2259 = vand.u32 %v2236, 65535
      %v2260 = vshrl.u32 %v2236, 16
      %v2261 = vand.u32 %v2231, 65535
      %v2262 = vshrl.u32 %v2231, 16
      %v2263 = vmul.u32 %v2259, %v2261
      %v2264 = vmul.u32 %v2259, %v2262
      %v2265 = vmul.u32 %v2260, %v2261
      %v2266 = vmul.u32 %v2260, %v2262
      %v2267 = vshll.u32 %v2264, 16
      %v2268 = vshrl.u32 %v2264, 16
      %v2269 = vshll.u32 %v2265, 16
      %v2270 = vshrl.u32 %v2265, 16
      %vm2271 = vc.u32 %v2263, %v2267
      %v2272 = vsel %vm2271, 1, 0
      %v2273 = vadd.s32 %v2263, %v2267
      %v2274 = vadd.s32 %v2266, %v2272
      %vm2275 = vc.u32 %v2273, %v2269
      %v2276 = vsel %vm2275, 1, 0
      %v2277 = vadd.s32 %v2273, %v2269
      %v2278 = vadd.s32 %v2274, %v2276
      %v2279 = vadd.s32 %v2278, %v2268
      %v2280 = vadd.s32 %v2279, %v2270
      %v2281 = vmul.u32 %v2236, %v2227
      %v2282 = vadd.s32 %v2258, %v2277
      %vm2283 = vc.u32 %v2258, %v2277
      %v2284 = vadd.s32 %v2280, 1
      %v2285 = vsel %vm2283, %v2284, %v2280
      %v2286 = vadd.s32 %v2281, %v2285
      %v2287 = vadd.s32 %v2286, 536870912
      %v2288 = vshrl.u32 %v2287, 30
      %v2289 = vshll.u32 %v2288, 30
      %v2290 = vsub.s32 %v2286, %v2289
      %vm2291 = vcmp.lt.s32.totalorder %v2290, 0
      %v2292 = vsub.s32 0, %v2290
      %v2293 = vsel %vm2291, %v2292, %v2290
      %v2294 = vclz %v2293
      %v2295 = vsub.s32 %v2294, 2
      %vm2296 = vcmp.gt.s32.totalorder 0, %v2295
      %v2297 = vsel %vm2296, 0, %v2295
      %v2298 = vsub.s32 32, %v2297
      %v2299 = vshll.u32 %v2290, %v2297
      %v2300 = vshrl.u32 %v2282, %v2298
      %v2301 = vor.u32 %v2299, %v2300
      %v2302 = vsub.s32 4294967266, %v2297
      %v2303 = vadd.s32 %v2302, 127
      %v2304 = vshll.u32 %v2303, 23
      %v2305 = vor.u32 4788187, %v2304
      %v2306 = vand.u32 2147483647, %v2305
      %v2308 = vcvt.s32.f32 %v2301
      %v2309 = vmul.f32 %v2308, %v2306
      %v2310 = vxor.u32 %v2309, 2147483648
      %v2311 = vsel %vm2190, %v2310, %v2309
      %v2312 = vsub.s32 4, %v2288
      %v2313 = vsel %vm2190, %v2312, %v2288
      %v2314 = vsel %vm2189, %v769, %v2311
      %v2315 = vsel %vm2189, 0, %v2313
      %v2316 = vmul.f32 %v2314, %v2314
      %v2317 = vmul.f32 %v2316, -0.001358992
      %v2318 = vadd.f32 %v2317, 0.041655596
      %v2319 = vmul.f32 %v2316, %v2318
      %v2320 = vadd.f32 %v2319, -0.4999988
      %v2321 = vmul.f32 %v2316, %v2320
      %v2322 = vadd.f32 1.0, %v2321
      %v2323 = vmul.f32 %v2314, %v2314
      %v2324 = vmul.f32 %v2323, -0.00019511016
      %v2325 = vadd.f32 %v2324, 0.008332121
      %v2326 = vmul.f32 %v2323, %v2325
      %v2327 = vadd.f32 %v2326, -0.16666654
      %v2328 = vmul.f32 %v2323, %v2327
      %v2329 = vadd.f32 %v2328, 1.0
      %v2330 = vmul.f32 %v2329, %v2314
      %vm2331 = vweird.f32 %v769
      %v2332 = vadd.s32 %v2315, 3
      %v2333 = vand.u32 %v2332, 3
      %vm2334 = vcmp.lt.s32.totalorder %v2333, 2
      %vm2335 = vcmp.eq.s32.totalorder %v2333, 0
      %v2336 = vxor.u32 %v2330, 2147483648
      %v2337 = vsel %vm2335, %v2322, %v2336
      %vm2338 = vcmp.eq.s32.totalorder %v2333, 2
      %v2339 = vxor.u32 %v2322, 2147483648
      %v2340 = vsel %vm2338, %v2339, %v2330
      %v2341 = vsel %vm2334, %v2337, %v2340
      %v2342 = vsel %vm2331, nan, %v2341
      %v2343 = vand.u32 2147483647, %v770
      %vm2344 = vcmp.le.f32.partialorder %v2343, 0.7853982
      %vm2345 = vcmp.lt.s32.totalorder %v770, 0
      %v2346 = vand.u32 %v770, 2139095040
      %v2347 = vshrl.u32 %v2346, 23
      %v2348 = vsub.s32 %v2347, 127
      %v2349 = vand.u32 2147483647, %v770
      %v2350 = vand.u32 %v2349, 8388607
      %v2351 = vor.u32 %v2350, 8388608
      %v2352 = vsub.s32 0, %v2351
      %v2353 = vadd.s32 %v2348, 1
      %vm2354 = vcmp.gt.s32.totalorder %v2353, 0
      %v2355 = vsel %vm2354, %v2353, 0
      %v2356 = vshrl.u32 %v2355, 5
      %v2357 = vand.u32 %v2355, 31
      %v2358 = vsub.s32 32, %v2357
      %v2359 = vshrl.u32 683565275, %v2358
      %v2360 = vshll.u32 683565275, %v2357
      %v2361 = vshrl.u32 2475754826, %v2358
      %v2362 = vor.u32 %v2360, %v2361
      %v2363 = vshll.u32 2475754826, %v2357
      %v2364 = vshrl.u32 2131351028, %v2358
      %v2365 = vor.u32 %v2363, %v2364
      %v2366 = vshll.u32 2131351028, %v2357
      %v2367 = vshrl.u32 2102212464, %v2358
      %v2368 = vor.u32 %v2366, %v2367
      %v2369 = vshll.u32 2102212464, %v2357
      %v2370 = vshrl.u32 920167782, %v2358
      %v2371 = vor.u32 %v2369, %v2370
      %v2372 = vshll.u32 920167782, %v2357
      %v2373 = vshrl.u32 1326507024, %v2358
      %v2374 = vor.u32 %v2372, %v2373
      %vm2375 = vcmp.lt.s32.totalorder %v2356, 1
      %vm2376 = vcmp.lt.s32.totalorder %v2356, 2
      %vm2377 = vcmp.lt.s32.totalorder %v2356, 3
      %vm2378 = vcmp.lt.s32.totalorder %v2356, 4
      %v2379 = vsel %vm2375, %v2359, %v2362
      %v2380 = vsel %vm2378, %v2368, 2102212464
      %v2381 = vsel %vm2377, %v2365, %v2380
      %v2382 = vsel %vm2376, %v2379, %v2381
      %v2383 = vsel %vm2375, %v2362, %v2365
      %v2384 = vsel %vm2378, %v2371, 920167782
      %v2385 = vsel %vm2377, %v2368, %v2384
      %v2386 = vsel %vm2376, %v2383, %v2385
      %v2387 = vsel %vm2375, %v2365, %v2368
      %v2388 = vsel %vm2378, %v2374, 1326507024
      %v2389 = vsel %vm2377, %v2371, %v2388
      %v2390 = vsel %vm2376, %v2387, %v2389
      %v2391 = vshll.u32 %v2351, 8
      %v2392 = vand.u32 %v2391, 65535
      %v2393 = vshrl.u32 %v2391, 16
      %v2394 = vand.u32 %v2390, 65535
      %v2395 = vshrl.u32 %v2390, 16
      %v2396 = vmul.u32 %v2392, %v2394
      %v2397 = vmul.u32 %v2392, %v2395
      %v2398 = vmul.u32 %v2393, %v2394
      %v2399 = vmul.u32 %v2393, %v2395
      %v2400 = vshll.u32 %v2397, 16
      %v2401 = vshrl.u32 %v2397, 16
      %v2402 = vshll.u32 %v2398, 16
      %v2403 = vshrl.u32 %v2398, 16
      %vm2404 = vc.u32 %v2396, %v2400
      %v2405 = vsel %vm2404, 1, 0
      %v2406 = vadd.s32 %v2396, %v2400
      %v2407 = vadd.s32 %v2399, %v2405
      %vm2408 = vc.u32 %v2406, %v2402
      %v2409 = vsel %vm2408, 1, 0
      %v2410 = vadd.s32 %v2406, %v2402
      %v2411 = vadd.s32 %v2407, %v2409
      %v2412 = vadd.s32 %v2411, %v2401
      %v2413 = vadd.s32 %v2412, %v2403
      %v2414 = vand.u32 %v2391, 65535
      %v2415 = vshrl.u32 %v2391, 16
      %v2416 = vand.u32 %v2386, 65535
      %v2417 = vshrl.u32 %v2386, 16
      %v2418 = vmul.u32 %v2414, %v2416
      %v2419 = vmul.u32 %v2414, %v2417
      %v2420 = vmul.u32 %v2415, %v2416
      %v2421 = vmul.u32 %v2415, %v2417
      %v2422 = vshll.u32 %v2419, 16
      %v2423 = vshrl.u32 %v2419, 16
      %v2424 = vshll.u32 %v2420, 16
      %v2425 = vshrl.u32 %v2420, 16
      %vm2426 = vc.u32 %v2418, %v2422
      %v2427 = vsel %vm2426, 1, 0
      %v2428 = vadd.s32 %v2418, %v2422
      %v2429 = vadd.s32 %v2421, %v2427
      %vm2430 = vc.u32 %v2428, %v2424
      %v2431 = vsel %vm2430, 1, 0
      %v2432 = vadd.s32 %v2428, %v2424
      %v2433 = vadd.s32 %v2429, %v2431
      %v2434 = vadd.s32 %v2433, %v2423
      %v2435 = vadd.s32 %v2434, %v2425
      %v2436 = vmul.u32 %v2391, %v2382
      %v2437 = vadd.s32 %v2413, %v2432
      %vm2438 = vc.u32 %v2413, %v2432
      %v2439 = vadd.s32 %v2435, 1
      %v2440 = vsel %vm2438, %v2439, %v2435
      %v2441 = vadd.s32 %v2436, %v2440
      %v2442 = vadd.s32 %v2441, 536870912
      %v2443 = vshrl.u32 %v2442, 30
      %v2444 = vshll.u32 %v2443, 30
      %v2445 = vsub.s32 %v2441, %v2444
      %vm2446 = vcmp.lt.s32.totalorder %v2445, 0
      %v2447 = vsub.s32 0, %v2445
      %v2448 = vsel %vm2446, %v2447, %v2445
      %v2449 = vclz %v2448
      %v2450 = vsub.s32 %v2449, 2
      %vm2451 = vcmp.gt.s32.totalorder 0, %v2450
      %v2452 = vsel %vm2451, 0, %v2450
      %v2453 = vsub.s32 32, %v2452
      %v2454 = vshll.u32 %v2445, %v2452
      %v2455 = vshrl.u32 %v2437, %v2453
      %v2456 = vor.u32 %v2454, %v2455
      %v2457 = vsub.s32 4294967266, %v2452
      %v2458 = vadd.s32 %v2457, 127
      %v2459 = vshll.u32 %v2458, 23
      %v2460 = vor.u32 4788187, %v2459
      %v2461 = vand.u32 2147483647, %v2460
      %v2463 = vcvt.s32.f32 %v2456
      %v2464 = vmul.f32 %v2463, %v2461
      %v2465 = vxor.u32 %v2464, 2147483648
      %v2466 = vsel %vm2345, %v2465, %v2464
      %v2467 = vsub.s32 4, %v2443
      %v2468 = vsel %vm2345, %v2467, %v2443
      %v2469 = vsel %vm2344, %v770, %v2466
      %v2470 = vsel %vm2344, 0, %v2468
      %v2471 = vmul.f32 %v2469, %v2469
      %v2472 = vmul.f32 %v2471, -0.001358992
      %v2473 = vadd.f32 %v2472, 0.041655596
      %v2474 = vmul.f32 %v2471, %v2473
      %v2475 = vadd.f32 %v2474, -0.4999988
      %v2476 = vmul.f32 %v2471, %v2475
      %v2477 = vadd.f32 1.0, %v2476
      %v2478 = vmul.f32 %v2469, %v2469
      %v2479 = vmul.f32 %v2478, -0.00019511016
      %v2480 = vadd.f32 %v2479, 0.008332121
      %v2481 = vmul.f32 %v2478, %v2480
      %v2482 = vadd.f32 %v2481, -0.16666654
      %v2483 = vmul.f32 %v2478, %v2482
      %v2484 = vadd.f32 %v2483, 1.0
      %v2485 = vmul.f32 %v2484, %v2469
      %vm2486 = vweird.f32 %v770
      %v2487 = vadd.s32 %v2470, 3
      %v2488 = vand.u32 %v2487, 3
      %vm2489 = vcmp.lt.s32.totalorder %v2488, 2
      %vm2490 = vcmp.eq.s32.totalorder %v2488, 0
      %v2491 = vxor.u32 %v2485, 2147483648
      %v2492 = vsel %vm2490, %v2477, %v2491
      %vm2493 = vcmp.eq.s32.totalorder %v2488, 2
      %v2494 = vxor.u32 %v2477, 2147483648
      %v2495 = vsel %vm2493, %v2494, %v2485
      %v2496 = vsel %vm2489, %v2492, %v2495
      %v2497 = vsel %vm2486, nan, %v2496
      %v2498 = vand.u32 2147483647, %v771
      %vm2499 = vcmp.le.f32.partialorder %v2498, 0.7853982
      %vm2500 = vcmp.lt.s32.totalorder %v771, 0
      %v2501 = vand.u32 %v771, 2139095040
      %v2502 = vshrl.u32 %v2501, 23
      %v2503 = vsub.s32 %v2502, 127
      %v2504 = vand.u32 2147483647, %v771
      %v2505 = vand.u32 %v2504, 8388607
      %v2506 = vor.u32 %v2505, 8388608
      %v2507 = vsub.s32 0, %v2506
      %v2508 = vadd.s32 %v2503, 1
      %vm2509 = vcmp.gt.s32.totalorder %v2508, 0
      %v2510 = vsel %vm2509, %v2508, 0
      %v2511 = vshrl.u32 %v2510, 5
      %v2512 = vand.u32 %v2510, 31
      %v2513 = vsub.s32 32, %v2512
      %v2514 = vshrl.u32 683565275, %v2513
      %v2515 = vshll.u32 683565275, %v2512
      %v2516 = vshrl.u32 2475754826, %v2513
      %v2517 = vor.u32 %v2515, %v2516
      %v2518 = vshll.u32 2475754826, %v2512
      %v2519 = vshrl.u32 2131351028, %v2513
      %v2520 = vor.u32 %v2518, %v2519
      %v2521 = vshll.u32 2131351028, %v2512
      %v2522 = vshrl.u32 2102212464, %v2513
      %v2523 = vor.u32 %v2521, %v2522
      %v2524 = vshll.u32 2102212464, %v2512
      %v2525 = vshrl.u32 920167782, %v2513
      %v2526 = vor.u32 %v2524, %v2525
      %v2527 = vshll.u32 920167782, %v2512
      %v2528 = vshrl.u32 1326507024, %v2513
      %v2529 = vor.u32 %v2527, %v2528
      %vm2530 = vcmp.lt.s32.totalorder %v2511, 1
      %vm2531 = vcmp.lt.s32.totalorder %v2511, 2
      %vm2532 = vcmp.lt.s32.totalorder %v2511, 3
      %vm2533 = vcmp.lt.s32.totalorder %v2511, 4
      %v2534 = vsel %vm2530, %v2514, %v2517
      %v2535 = vsel %vm2533, %v2523, 2102212464
      %v2536 = vsel %vm2532, %v2520, %v2535
      %v2537 = vsel %vm2531, %v2534, %v2536
      %v2538 = vsel %vm2530, %v2517, %v2520
      %v2539 = vsel %vm2533, %v2526, 920167782
      %v2540 = vsel %vm2532, %v2523, %v2539
      %v2541 = vsel %vm2531, %v2538, %v2540
      %v2542 = vsel %vm2530, %v2520, %v2523
      %v2543 = vsel %vm2533, %v2529, 1326507024
      %v2544 = vsel %vm2532, %v2526, %v2543
      %v2545 = vsel %vm2531, %v2542, %v2544
      %v2546 = vshll.u32 %v2506, 8
      %v2547 = vand.u32 %v2546, 65535
      %v2548 = vshrl.u32 %v2546, 16
      %v2549 = vand.u32 %v2545, 65535
      %v2550 = vshrl.u32 %v2545, 16
      %v2551 = vmul.u32 %v2547, %v2549
      %v2552 = vmul.u32 %v2547, %v2550
      %v2553 = vmul.u32 %v2548, %v2549
      %v2554 = vmul.u32 %v2548, %v2550
      %v2555 = vshll.u32 %v2552, 16
      %v2556 = vshrl.u32 %v2552, 16
      %v2557 = vshll.u32 %v2553, 16
      %v2558 = vshrl.u32 %v2553, 16
      %vm2559 = vc.u32 %v2551, %v2555
      %v2560 = vsel %vm2559, 1, 0
      %v2561 = vadd.s32 %v2551, %v2555
      %v2562 = vadd.s32 %v2554, %v2560
      %vm2563 = vc.u32 %v2561, %v2557
      %v2564 = vsel %vm2563, 1, 0
      %v2565 = vadd.s32 %v2561, %v2557
      %v2566 = vadd.s32 %v2562, %v2564
      %v2567 = vadd.s32 %v2566, %v2556
      %v2568 = vadd.s32 %v2567, %v2558
      %v2569 = vand.u32 %v2546, 65535
      %v2570 = vshrl.u32 %v2546, 16
      %v2571 = vand.u32 %v2541, 65535
      %v2572 = vshrl.u32 %v2541, 16
      %v2573 = vmul.u32 %v2569, %v2571
      %v2574 = vmul.u32 %v2569, %v2572
      %v2575 = vmul.u32 %v2570, %v2571
      %v2576 = vmul.u32 %v2570, %v2572
      %v2577 = vshll.u32 %v2574, 16
      %v2578 = vshrl.u32 %v2574, 16
      %v2579 = vshll.u32 %v2575, 16
      %v2580 = vshrl.u32 %v2575, 16
      %vm2581 = vc.u32 %v2573, %v2577
      %v2582 = vsel %vm2581, 1, 0
      %v2583 = vadd.s32 %v2573, %v2577
      %v2584 = vadd.s32 %v2576, %v2582
      %vm2585 = vc.u32 %v2583, %v2579
      %v2586 = vsel %vm2585, 1, 0
      %v2587 = vadd.s32 %v2583, %v2579
      %v2588 = vadd.s32 %v2584, %v2586
      %v2589 = vadd.s32 %v2588, %v2578
      %v2590 = vadd.s32 %v2589, %v2580
      %v2591 = vmul.u32 %v2546, %v2537
      %v2592 = vadd.s32 %v2568, %v2587
      %vm2593 = vc.u32 %v2568, %v2587
      %v2594 = vadd.s32 %v2590, 1
      %v2595 = vsel %vm2593, %v2594, %v2590
      %v2596 = vadd.s32 %v2591, %v2595
      %v2597 = vadd.s32 %v2596, 536870912
      %v2598 = vshrl.u32 %v2597, 30
      %v2599 = vshll.u32 %v2598, 30
      %v2600 = vsub.s32 %v2596, %v2599
      %vm2601 = vcmp.lt.s32.totalorder %v2600, 0
      %v2602 = vsub.s32 0, %v2600
      %v2603 = vsel %vm2601, %v2602, %v2600
      %v2604 = vclz %v2603
      %v2605 = vsub.s32 %v2604, 2
      %vm2606 = vcmp.gt.s32.totalorder 0, %v2605
      %v2607 = vsel %vm2606, 0, %v2605
      %v2608 = vsub.s32 32, %v2607
      %v2609 = vshll.u32 %v2600, %v2607
      %v2610 = vshrl.u32 %v2592, %v2608
      %v2611 = vor.u32 %v2609, %v2610
      %v2612 = vsub.s32 4294967266, %v2607
      %v2613 = vadd.s32 %v2612, 127
      %v2614 = vshll.u32 %v2613, 23
      %v2615 = vor.u32 4788187, %v2614
      %v2616 = vand.u32 2147483647, %v2615
      %v2618 = vcvt.s32.f32 %v2611
      %v2619 = vmul.f32 %v2618, %v2616
      %v2620 = vxor.u32 %v2619, 2147483648
      %v2621 = vsel %vm2500, %v2620, %v2619
      %v2622 = vsub.s32 4, %v2598
      %v2623 = vsel %vm2500, %v2622, %v2598
      %v2624 = vsel %vm2499, %v771, %v2621
      %v2625 = vsel %vm2499, 0, %v2623
      %v2626 = vmul.f32 %v2624, %v2624
      %v2627 = vmul.f32 %v2626, -0.001358992
      %v2628 = vadd.f32 %v2627, 0.041655596
      %v2629 = vmul.f32 %v2626, %v2628
      %v2630 = vadd.f32 %v2629, -0.4999988
      %v2631 = vmul.f32 %v2626, %v2630
      %v2632 = vadd.f32 1.0, %v2631
      %v2633 = vmul.f32 %v2624, %v2624
      %v2634 = vmul.f32 %v2633, -0.00019511016
      %v2635 = vadd.f32 %v2634, 0.008332121
      %v2636 = vmul.f32 %v2633, %v2635
      %v2637 = vadd.f32 %v2636, -0.16666654
      %v2638 = vmul.f32 %v2633, %v2637
      %v2639 = vadd.f32 %v2638, 1.0
      %v2640 = vmul.f32 %v2639, %v2624
      %vm2641 = vweird.f32 %v771
      %v2642 = vadd.s32 %v2625, 3
      %v2643 = vand.u32 %v2642, 3
      %vm2644 = vcmp.lt.s32.totalorder %v2643, 2
      %vm2645 = vcmp.eq.s32.totalorder %v2643, 0
      %v2646 = vxor.u32 %v2640, 2147483648
      %v2647 = vsel %vm2645, %v2632, %v2646
      %vm2648 = vcmp.eq.s32.totalorder %v2643, 2
      %v2649 = vxor.u32 %v2632, 2147483648
      %v2650 = vsel %vm2648, %v2649, %v2640
      %v2651 = vsel %vm2644, %v2647, %v2650
      %v2652 = vsel %vm2641, nan, %v2651
      %v2653 = vand.u32 2147483647, %v772
      %vm2654 = vcmp.le.f32.partialorder %v2653, 0.7853982
      %vm2655 = vcmp.lt.s32.totalorder %v772, 0
      %v2656 = vand.u32 %v772, 2139095040
      %v2657 = vshrl.u32 %v2656, 23
      %v2658 = vsub.s32 %v2657, 127
      %v2659 = vand.u32 2147483647, %v772
      %v2660 = vand.u32 %v2659, 8388607
      %v2661 = vor.u32 %v2660, 8388608
      %v2662 = vsub.s32 0, %v2661
      %v2663 = vadd.s32 %v2658, 1
      %vm2664 = vcmp.gt.s32.totalorder %v2663, 0
      %v2665 = vsel %vm2664, %v2663, 0
      %v2666 = vshrl.u32 %v2665, 5
      %v2667 = vand.u32 %v2665, 31
      %v2668 = vsub.s32 32, %v2667
      %v2669 = vshrl.u32 683565275, %v2668
      %v2670 = vshll.u32 683565275, %v2667
      %v2671 = vshrl.u32 2475754826, %v2668
      %v2672 = vor.u32 %v2670, %v2671
      %v2673 = vshll.u32 2475754826, %v2667
      %v2674 = vshrl.u32 2131351028, %v2668
      %v2675 = vor.u32 %v2673, %v2674
      %v2676 = vshll.u32 2131351028, %v2667
      %v2677 = vshrl.u32 2102212464, %v2668
      %v2678 = vor.u32 %v2676, %v2677
      %v2679 = vshll.u32 2102212464, %v2667
      %v2680 = vshrl.u32 920167782, %v2668
      %v2681 = vor.u32 %v2679, %v2680
      %v2682 = vshll.u32 920167782, %v2667
      %v2683 = vshrl.u32 1326507024, %v2668
      %v2684 = vor.u32 %v2682, %v2683
      %vm2685 = vcmp.lt.s32.totalorder %v2666, 1
      %vm2686 = vcmp.lt.s32.totalorder %v2666, 2
      %vm2687 = vcmp.lt.s32.totalorder %v2666, 3
      %vm2688 = vcmp.lt.s32.totalorder %v2666, 4
      %v2689 = vsel %vm2685, %v2669, %v2672
      %v2690 = vsel %vm2688, %v2678, 2102212464
      %v2691 = vsel %vm2687, %v2675, %v2690
      %v2692 = vsel %vm2686, %v2689, %v2691
      %v2693 = vsel %vm2685, %v2672, %v2675
      %v2694 = vsel %vm2688, %v2681, 920167782
      %v2695 = vsel %vm2687, %v2678, %v2694
      %v2696 = vsel %vm2686, %v2693, %v2695
      %v2697 = vsel %vm2685, %v2675, %v2678
      %v2698 = vsel %vm2688, %v2684, 1326507024
      %v2699 = vsel %vm2687, %v2681, %v2698
      %v2700 = vsel %vm2686, %v2697, %v2699
      %v2701 = vshll.u32 %v2661, 8
      %v2702 = vand.u32 %v2701, 65535
      %v2703 = vshrl.u32 %v2701, 16
      %v2704 = vand.u32 %v2700, 65535
      %v2705 = vshrl.u32 %v2700, 16
      %v2706 = vmul.u32 %v2702, %v2704
      %v2707 = vmul.u32 %v2702, %v2705
      %v2708 = vmul.u32 %v2703, %v2704
      %v2709 = vmul.u32 %v2703, %v2705
      %v2710 = vshll.u32 %v2707, 16
      %v2711 = vshrl.u32 %v2707, 16
      %v2712 = vshll.u32 %v2708, 16
      %v2713 = vshrl.u32 %v2708, 16
      %vm2714 = vc.u32 %v2706, %v2710
      %v2715 = vsel %vm2714, 1, 0
      %v2716 = vadd.s32 %v2706, %v2710
      %v2717 = vadd.s32 %v2709, %v2715
      %vm2718 = vc.u32 %v2716, %v2712
      %v2719 = vsel %vm2718, 1, 0
      %v2720 = vadd.s32 %v2716, %v2712
      %v2721 = vadd.s32 %v2717, %v2719
      %v2722 = vadd.s32 %v2721, %v2711
      %v2723 = vadd.s32 %v2722, %v2713
      %v2724 = vand.u32 %v2701, 65535
      %v2725 = vshrl.u32 %v2701, 16
      %v2726 = vand.u32 %v2696, 65535
      %v2727 = vshrl.u32 %v2696, 16
      %v2728 = vmul.u32 %v2724, %v2726
      %v2729 = vmul.u32 %v2724, %v2727
      %v2730 = vmul.u32 %v2725, %v2726
      %v2731 = vmul.u32 %v2725, %v2727
      %v2732 = vshll.u32 %v2729, 16
      %v2733 = vshrl.u32 %v2729, 16
      %v2734 = vshll.u32 %v2730, 16
      %v2735 = vshrl.u32 %v2730, 16
      %vm2736 = vc.u32 %v2728, %v2732
      %v2737 = vsel %vm2736, 1, 0
      %v2738 = vadd.s32 %v2728, %v2732
      %v2739 = vadd.s32 %v2731, %v2737
      %vm2740 = vc.u32 %v2738, %v2734
      %v2741 = vsel %vm2740, 1, 0
      %v2742 = vadd.s32 %v2738, %v2734
      %v2743 = vadd.s32 %v2739, %v2741
      %v2744 = vadd.s32 %v2743, %v2733
      %v2745 = vadd.s32 %v2744, %v2735
      %v2746 = vmul.u32 %v2701, %v2692
      %v2747 = vadd.s32 %v2723, %v2742
      %vm2748 = vc.u32 %v2723, %v2742
      %v2749 = vadd.s32 %v2745, 1
      %v2750 = vsel %vm2748, %v2749, %v2745
      %v2751 = vadd.s32 %v2746, %v2750
      %v2752 = vadd.s32 %v2751, 536870912
      %v2753 = vshrl.u32 %v2752, 30
      %v2754 = vshll.u32 %v2753, 30
      %v2755 = vsub.s32 %v2751, %v2754
      %vm2756 = vcmp.lt.s32.totalorder %v2755, 0
      %v2757 = vsub.s32 0, %v2755
      %v2758 = vsel %vm2756, %v2757, %v2755
      %v2759 = vclz %v2758
      %v2760 = vsub.s32 %v2759, 2
      %vm2761 = vcmp.gt.s32.totalorder 0, %v2760
      %v2762 = vsel %vm2761, 0, %v2760
      %v2763 = vsub.s32 32, %v2762
      %v2764 = vshll.u32 %v2755, %v2762
      %v2765 = vshrl.u32 %v2747, %v2763
      %v2766 = vor.u32 %v2764, %v2765
      %v2767 = vsub.s32 4294967266, %v2762
      %v2768 = vadd.s32 %v2767, 127
      %v2769 = vshll.u32 %v2768, 23
      %v2770 = vor.u32 4788187, %v2769
      %v2771 = vand.u32 2147483647, %v2770
      %v2773 = vcvt.s32.f32 %v2766
      %v2774 = vmul.f32 %v2773, %v2771
      %v2775 = vxor.u32 %v2774, 2147483648
      %v2776 = vsel %vm2655, %v2775, %v2774
      %v2777 = vsub.s32 4, %v2753
      %v2778 = vsel %vm2655, %v2777, %v2753
      %v2779 = vsel %vm2654, %v772, %v2776
      %v2780 = vsel %vm2654, 0, %v2778
      %v2781 = vmul.f32 %v2779, %v2779
      %v2782 = vmul.f32 %v2781, -0.001358992
      %v2783 = vadd.f32 %v2782, 0.041655596
      %v2784 = vmul.f32 %v2781, %v2783
      %v2785 = vadd.f32 %v2784, -0.4999988
      %v2786 = vmul.f32 %v2781, %v2785
      %v2787 = vadd.f32 1.0, %v2786
      %v2788 = vmul.f32 %v2779, %v2779
      %v2789 = vmul.f32 %v2788, -0.00019511016
      %v2790 = vadd.f32 %v2789, 0.008332121
      %v2791 = vmul.f32 %v2788, %v2790
      %v2792 = vadd.f32 %v2791, -0.16666654
      %v2793 = vmul.f32 %v2788, %v2792
      %v2794 = vadd.f32 %v2793, 1.0
      %v2795 = vmul.f32 %v2794, %v2779
      %vm2796 = vweird.f32 %v772
      %v2797 = vadd.s32 %v2780, 3
      %v2798 = vand.u32 %v2797, 3
      %vm2799 = vcmp.lt.s32.totalorder %v2798, 2
      %vm2800 = vcmp.eq.s32.totalorder %v2798, 0
      %v2801 = vxor.u32 %v2795, 2147483648
      %v2802 = vsel %vm2800, %v2787, %v2801
      %vm2803 = vcmp.eq.s32.totalorder %v2798, 2
      %v2804 = vxor.u32 %v2787, 2147483648
      %v2805 = vsel %vm2803, %v2804, %v2795
      %v2806 = vsel %vm2799, %v2802, %v2805
      %v2807 = vsel %vm2796, nan, %v2806
      %v2808 = vand.u32 2147483647, %v773
      %vm2809 = vcmp.le.f32.partialorder %v2808, 0.7853982
      %vm2810 = vcmp.lt.s32.totalorder %v773, 0
      %v2811 = vand.u32 %v773, 2139095040
      %v2812 = vshrl.u32 %v2811, 23
      %v2813 = vsub.s32 %v2812, 127
      %v2814 = vand.u32 2147483647, %v773
      %v2815 = vand.u32 %v2814, 8388607
      %v2816 = vor.u32 %v2815, 8388608
      %v2817 = vsub.s32 0, %v2816
      %v2818 = vadd.s32 %v2813, 1
      %vm2819 = vcmp.gt.s32.totalorder %v2818, 0
      %v2820 = vsel %vm2819, %v2818, 0
      %v2821 = vshrl.u32 %v2820, 5
      %v2822 = vand.u32 %v2820, 31
      %v2823 = vsub.s32 32, %v2822
      %v2824 = vshrl.u32 683565275, %v2823
      %v2825 = vshll.u32 683565275, %v2822
      %v2826 = vshrl.u32 2475754826, %v2823
      %v2827 = vor.u32 %v2825, %v2826
      %v2828 = vshll.u32 2475754826, %v2822
      %v2829 = vshrl.u32 2131351028, %v2823
      %v2830 = vor.u32 %v2828, %v2829
      %v2831 = vshll.u32 2131351028, %v2822
      %v2832 = vshrl.u32 2102212464, %v2823
      %v2833 = vor.u32 %v2831, %v2832
      %v2834 = vshll.u32 2102212464, %v2822
      %v2835 = vshrl.u32 920167782, %v2823
      %v2836 = vor.u32 %v2834, %v2835
      %v2837 = vshll.u32 920167782, %v2822
      %v2838 = vshrl.u32 1326507024, %v2823
      %v2839 = vor.u32 %v2837, %v2838
      %vm2840 = vcmp.lt.s32.totalorder %v2821, 1
      %vm2841 = vcmp.lt.s32.totalorder %v2821, 2
      %vm2842 = vcmp.lt.s32.totalorder %v2821, 3
      %vm2843 = vcmp.lt.s32.totalorder %v2821, 4
      %v2844 = vsel %vm2840, %v2824, %v2827
      %v2845 = vsel %vm2843, %v2833, 2102212464
      %v2846 = vsel %vm2842, %v2830, %v2845
      %v2847 = vsel %vm2841, %v2844, %v2846
      %v2848 = vsel %vm2840, %v2827, %v2830
      %v2849 = vsel %vm2843, %v2836, 920167782
      %v2850 = vsel %vm2842, %v2833, %v2849
      %v2851 = vsel %vm2841, %v2848, %v2850
      %v2852 = vsel %vm2840, %v2830, %v2833
      %v2853 = vsel %vm2843, %v2839, 1326507024
      %v2854 = vsel %vm2842, %v2836, %v2853
      %v2855 = vsel %vm2841, %v2852, %v2854
      %v2856 = vshll.u32 %v2816, 8
      %v2857 = vand.u32 %v2856, 65535
      %v2858 = vshrl.u32 %v2856, 16
      %v2859 = vand.u32 %v2855, 65535
      %v2860 = vshrl.u32 %v2855, 16
      %v2861 = vmul.u32 %v2857, %v2859
      %v2862 = vmul.u32 %v2857, %v2860
      %v2863 = vmul.u32 %v2858, %v2859
      %v2864 = vmul.u32 %v2858, %v2860
      %v2865 = vshll.u32 %v2862, 16
      %v2866 = vshrl.u32 %v2862, 16
      %v2867 = vshll.u32 %v2863, 16
      %v2868 = vshrl.u32 %v2863, 16
      %vm2869 = vc.u32 %v2861, %v2865
      %v2870 = vsel %vm2869, 1, 0
      %v2871 = vadd.s32 %v2861, %v2865
      %v2872 = vadd.s32 %v2864, %v2870
      %vm2873 = vc.u32 %v2871, %v2867
      %v2874 = vsel %vm2873, 1, 0
      %v2875 = vadd.s32 %v2871, %v2867
      %v2876 = vadd.s32 %v2872, %v2874
      %v2877 = vadd.s32 %v2876, %v2866
      %v2878 = vadd.s32 %v2877, %v2868
      %v2879 = vand.u32 %v2856, 65535
      %v2880 = vshrl.u32 %v2856, 16
      %v2881 = vand.u32 %v2851, 65535
      %v2882 = vshrl.u32 %v2851, 16
      %v2883 = vmul.u32 %v2879, %v2881
      %v2884 = vmul.u32 %v2879, %v2882
      %v2885 = vmul.u32 %v2880, %v2881
      %v2886 = vmul.u32 %v2880, %v2882
      %v2887 = vshll.u32 %v2884, 16
      %v2888 = vshrl.u32 %v2884, 16
      %v2889 = vshll.u32 %v2885, 16
      %v2890 = vshrl.u32 %v2885, 16
      %vm2891 = vc.u32 %v2883, %v2887
      %v2892 = vsel %vm2891, 1, 0
      %v2893 = vadd.s32 %v2883, %v2887
      %v2894 = vadd.s32 %v2886, %v2892
      %vm2895 = vc.u32 %v2893, %v2889
      %v2896 = vsel %vm2895, 1, 0
      %v2897 = vadd.s32 %v2893, %v2889
      %v2898 = vadd.s32 %v2894, %v2896
      %v2899 = vadd.s32 %v2898, %v2888
      %v2900 = vadd.s32 %v2899, %v2890
      %v2901 = vmul.u32 %v2856, %v2847
      %v2902 = vadd.s32 %v2878, %v2897
      %vm2903 = vc.u32 %v2878, %v2897
      %v2904 = vadd.s32 %v2900, 1
      %v2905 = vsel %vm2903, %v2904, %v2900
      %v2906 = vadd.s32 %v2901, %v2905
      %v2907 = vadd.s32 %v2906, 536870912
      %v2908 = vshrl.u32 %v2907, 30
      %v2909 = vshll.u32 %v2908, 30
      %v2910 = vsub.s32 %v2906, %v2909
      %vm2911 = vcmp.lt.s32.totalorder %v2910, 0
      %v2912 = vsub.s32 0, %v2910
      %v2913 = vsel %vm2911, %v2912, %v2910
      %v2914 = vclz %v2913
      %v2915 = vsub.s32 %v2914, 2
      %vm2916 = vcmp.gt.s32.totalorder 0, %v2915
      %v2917 = vsel %vm2916, 0, %v2915
      %v2918 = vsub.s32 32, %v2917
      %v2919 = vshll.u32 %v2910, %v2917
      %v2920 = vshrl.u32 %v2902, %v2918
      %v2921 = vor.u32 %v2919, %v2920
      %v2922 = vsub.s32 4294967266, %v2917
      %v2923 = vadd.s32 %v2922, 127
      %v2924 = vshll.u32 %v2923, 23
      %v2925 = vor.u32 4788187, %v2924
      %v2926 = vand.u32 2147483647, %v2925
      %v2928 = vcvt.s32.f32 %v2921
      %v2929 = vmul.f32 %v2928, %v2926
      %v2930 = vxor.u32 %v2929, 2147483648
      %v2931 = vsel %vm2810, %v2930, %v2929
      %v2932 = vsub.s32 4, %v2908
      %v2933 = vsel %vm2810, %v2932, %v2908
      %v2934 = vsel %vm2809, %v773, %v2931
      %v2935 = vsel %vm2809, 0, %v2933
      %v2936 = vmul.f32 %v2934, %v2934
      %v2937 = vmul.f32 %v2936, -0.001358992
      %v2938 = vadd.f32 %v2937, 0.041655596
      %v2939 = vmul.f32 %v2936, %v2938
      %v2940 = vadd.f32 %v2939, -0.4999988
      %v2941 = vmul.f32 %v2936, %v2940
      %v2942 = vadd.f32 1.0, %v2941
      %v2943 = vmul.f32 %v2934, %v2934
      %v2944 = vmul.f32 %v2943, -0.00019511016
      %v2945 = vadd.f32 %v2944, 0.008332121
      %v2946 = vmul.f32 %v2943, %v2945
      %v2947 = vadd.f32 %v2946, -0.16666654
      %v2948 = vmul.f32 %v2943, %v2947
      %v2949 = vadd.f32 %v2948, 1.0
      %v2950 = vmul.f32 %v2949, %v2934
      %vm2951 = vweird.f32 %v773
      %v2952 = vadd.s32 %v2935, 3
      %v2953 = vand.u32 %v2952, 3
      %vm2954 = vcmp.lt.s32.totalorder %v2953, 2
      %vm2955 = vcmp.eq.s32.totalorder %v2953, 0
      %v2956 = vxor.u32 %v2950, 2147483648
      %v2957 = vsel %vm2955, %v2942, %v2956
      %vm2958 = vcmp.eq.s32.totalorder %v2953, 2
      %v2959 = vxor.u32 %v2942, 2147483648
      %v2960 = vsel %vm2958, %v2959, %v2950
      %v2961 = vsel %vm2954, %v2957, %v2960
      %v2962 = vsel %vm2951, nan, %v2961
      %v2963 = vand.u32 2147483647, %v774
      %vm2964 = vcmp.le.f32.partialorder %v2963, 0.7853982
      %vm2965 = vcmp.lt.s32.totalorder %v774, 0
      %v2966 = vand.u32 %v774, 2139095040
      %v2967 = vshrl.u32 %v2966, 23
      %v2968 = vsub.s32 %v2967, 127
      %v2969 = vand.u32 2147483647, %v774
      %v2970 = vand.u32 %v2969, 8388607
      %v2971 = vor.u32 %v2970, 8388608
      %v2972 = vsub.s32 0, %v2971
      %v2973 = vadd.s32 %v2968, 1
      %vm2974 = vcmp.gt.s32.totalorder %v2973, 0
      %v2975 = vsel %vm2974, %v2973, 0
      %v2976 = vshrl.u32 %v2975, 5
      %v2977 = vand.u32 %v2975, 31
      %v2978 = vsub.s32 32, %v2977
      %v2979 = vshrl.u32 683565275, %v2978
      %v2980 = vshll.u32 683565275, %v2977
      %v2981 = vshrl.u32 2475754826, %v2978
      %v2982 = vor.u32 %v2980, %v2981
      %v2983 = vshll.u32 2475754826, %v2977
      %v2984 = vshrl.u32 2131351028, %v2978
      %v2985 = vor.u32 %v2983, %v2984
      %v2986 = vshll.u32 2131351028, %v2977
      %v2987 = vshrl.u32 2102212464, %v2978
      %v2988 = vor.u32 %v2986, %v2987
      %v2989 = vshll.u32 2102212464, %v2977
      %v2990 = vshrl.u32 920167782, %v2978
      %v2991 = vor.u32 %v2989, %v2990
      %v2992 = vshll.u32 920167782, %v2977
      %v2993 = vshrl.u32 1326507024, %v2978
      %v2994 = vor.u32 %v2992, %v2993
      %vm2995 = vcmp.lt.s32.totalorder %v2976, 1
      %vm2996 = vcmp.lt.s32.totalorder %v2976, 2
      %vm2997 = vcmp.lt.s32.totalorder %v2976, 3
      %vm2998 = vcmp.lt.s32.totalorder %v2976, 4
      %v2999 = vsel %vm2995, %v2979, %v2982
      %v3000 = vsel %vm2998, %v2988, 2102212464
      %v3001 = vsel %vm2997, %v2985, %v3000
      %v3002 = vsel %vm2996, %v2999, %v3001
      %v3003 = vsel %vm2995, %v2982, %v2985
      %v3004 = vsel %vm2998, %v2991, 920167782
      %v3005 = vsel %vm2997, %v2988, %v3004
      %v3006 = vsel %vm2996, %v3003, %v3005
      %v3007 = vsel %vm2995, %v2985, %v2988
      %v3008 = vsel %vm2998, %v2994, 1326507024
      %v3009 = vsel %vm2997, %v2991, %v3008
      %v3010 = vsel %vm2996, %v3007, %v3009
      %v3011 = vshll.u32 %v2971, 8
      %v3012 = vand.u32 %v3011, 65535
      %v3013 = vshrl.u32 %v3011, 16
      %v3014 = vand.u32 %v3010, 65535
      %v3015 = vshrl.u32 %v3010, 16
      %v3016 = vmul.u32 %v3012, %v3014
      %v3017 = vmul.u32 %v3012, %v3015
      %v3018 = vmul.u32 %v3013, %v3014
      %v3019 = vmul.u32 %v3013, %v3015
      %v3020 = vshll.u32 %v3017, 16
      %v3021 = vshrl.u32 %v3017, 16
      %v3022 = vshll.u32 %v3018, 16
      %v3023 = vshrl.u32 %v3018, 16
      %vm3024 = vc.u32 %v3016, %v3020
      %v3025 = vsel %vm3024, 1, 0
      %v3026 = vadd.s32 %v3016, %v3020
      %v3027 = vadd.s32 %v3019, %v3025
      %vm3028 = vc.u32 %v3026, %v3022
      %v3029 = vsel %vm3028, 1, 0
      %v3030 = vadd.s32 %v3026, %v3022
      %v3031 = vadd.s32 %v3027, %v3029
      %v3032 = vadd.s32 %v3031, %v3021
      %v3033 = vadd.s32 %v3032, %v3023
      %v3034 = vand.u32 %v3011, 65535
      %v3035 = vshrl.u32 %v3011, 16
      %v3036 = vand.u32 %v3006, 65535
      %v3037 = vshrl.u32 %v3006, 16
      %v3038 = vmul.u32 %v3034, %v3036
      %v3039 = vmul.u32 %v3034, %v3037
      %v3040 = vmul.u32 %v3035, %v3036
      %v3041 = vmul.u32 %v3035, %v3037
      %v3042 = vshll.u32 %v3039, 16
      %v3043 = vshrl.u32 %v3039, 16
      %v3044 = vshll.u32 %v3040, 16
      %v3045 = vshrl.u32 %v3040, 16
      %vm3046 = vc.u32 %v3038, %v3042
      %v3047 = vsel %vm3046, 1, 0
      %v3048 = vadd.s32 %v3038, %v3042
      %v3049 = vadd.s32 %v3041, %v3047
      %vm3050 = vc.u32 %v3048, %v3044
      %v3051 = vsel %vm3050, 1, 0
      %v3052 = vadd.s32 %v3048, %v3044
      %v3053 = vadd.s32 %v3049, %v3051
      %v3054 = vadd.s32 %v3053, %v3043
      %v3055 = vadd.s32 %v3054, %v3045
      %v3056 = vmul.u32 %v3011, %v3002
      %v3057 = vadd.s32 %v3033, %v3052
      %vm3058 = vc.u32 %v3033, %v3052
      %v3059 = vadd.s32 %v3055, 1
      %v3060 = vsel %vm3058, %v3059, %v3055
      %v3061 = vadd.s32 %v3056, %v3060
      %v3062 = vadd.s32 %v3061, 536870912
      %v3063 = vshrl.u32 %v3062, 30
      %v3064 = vshll.u32 %v3063, 30
      %v3065 = vsub.s32 %v3061, %v3064
      %vm3066 = vcmp.lt.s32.totalorder %v3065, 0
      %v3067 = vsub.s32 0, %v3065
      %v3068 = vsel %vm3066, %v3067, %v3065
      %v3069 = vclz %v3068
      %v3070 = vsub.s32 %v3069, 2
      %vm3071 = vcmp.gt.s32.totalorder 0, %v3070
      %v3072 = vsel %vm3071, 0, %v3070
      %v3073 = vsub.s32 32, %v3072
      %v3074 = vshll.u32 %v3065, %v3072
      %v3075 = vshrl.u32 %v3057, %v3073
      %v3076 = vor.u32 %v3074, %v3075
      %v3077 = vsub.s32 4294967266, %v3072
      %v3078 = vadd.s32 %v3077, 127
      %v3079 = vshll.u32 %v3078, 23
      %v3080 = vor.u32 4788187, %v3079
      %v3081 = vand.u32 2147483647, %v3080
      %v3083 = vcvt.s32.f32 %v3076
      %v3084 = vmul.f32 %v3083, %v3081
      %v3085 = vxor.u32 %v3084, 2147483648
      %v3086 = vsel %vm2965, %v3085, %v3084
      %v3087 = vsub.s32 4, %v3063
      %v3088 = vsel %vm2965, %v3087, %v3063
      %v3089 = vsel %vm2964, %v774, %v3086
      %v3090 = vsel %vm2964, 0, %v3088
      %v3091 = vmul.f32 %v3089, %v3089
      %v3092 = vmul.f32 %v3091, -0.001358992
      %v3093 = vadd.f32 %v3092, 0.041655596
      %v3094 = vmul.f32 %v3091, %v3093
      %v3095 = vadd.f32 %v3094, -0.4999988
      %v3096 = vmul.f32 %v3091, %v3095
      %v3097 = vadd.f32 1.0, %v3096
      %v3098 = vmul.f32 %v3089, %v3089
      %v3099 = vmul.f32 %v3098, -0.00019511016
      %v3100 = vadd.f32 %v3099, 0.008332121
      %v3101 = vmul.f32 %v3098, %v3100
      %v3102 = vadd.f32 %v3101, -0.16666654
      %v3103 = vmul.f32 %v3098, %v3102
      %v3104 = vadd.f32 %v3103, 1.0
      %v3105 = vmul.f32 %v3104, %v3089
      %vm3106 = vweird.f32 %v774
      %v3107 = vadd.s32 %v3090, 3
      %v3108 = vand.u32 %v3107, 3
      %vm3109 = vcmp.lt.s32.totalorder %v3108, 2
      %vm3110 = vcmp.eq.s32.totalorder %v3108, 0
      %v3111 = vxor.u32 %v3105, 2147483648
      %v3112 = vsel %vm3110, %v3097, %v3111
      %vm3113 = vcmp.eq.s32.totalorder %v3108, 2
      %v3114 = vxor.u32 %v3097, 2147483648
      %v3115 = vsel %vm3113, %v3114, %v3105
      %v3116 = vsel %vm3109, %v3112, %v3115
      %v3117 = vsel %vm3106, nan, %v3116
      %v3118 = vand.u32 2147483647, %v775
      %vm3119 = vcmp.le.f32.partialorder %v3118, 0.7853982
      %vm3120 = vcmp.lt.s32.totalorder %v775, 0
      %v3121 = vand.u32 %v775, 2139095040
      %v3122 = vshrl.u32 %v3121, 23
      %v3123 = vsub.s32 %v3122, 127
      %v3124 = vand.u32 2147483647, %v775
      %v3125 = vand.u32 %v3124, 8388607
      %v3126 = vor.u32 %v3125, 8388608
      %v3127 = vsub.s32 0, %v3126
      %v3128 = vadd.s32 %v3123, 1
      %vm3129 = vcmp.gt.s32.totalorder %v3128, 0
      %v3130 = vsel %vm3129, %v3128, 0
      %v3131 = vshrl.u32 %v3130, 5
      %v3132 = vand.u32 %v3130, 31
      %v3133 = vsub.s32 32, %v3132
      %v3134 = vshrl.u32 683565275, %v3133
      %v3135 = vshll.u32 683565275, %v3132
      %v3136 = vshrl.u32 2475754826, %v3133
      %v3137 = vor.u32 %v3135, %v3136
      %v3138 = vshll.u32 2475754826, %v3132
      %v3139 = vshrl.u32 2131351028, %v3133
      %v3140 = vor.u32 %v3138, %v3139
      %v3141 = vshll.u32 2131351028, %v3132
      %v3142 = vshrl.u32 2102212464, %v3133
      %v3143 = vor.u32 %v3141, %v3142
      %v3144 = vshll.u32 2102212464, %v3132
      %v3145 = vshrl.u32 920167782, %v3133
      %v3146 = vor.u32 %v3144, %v3145
      %v3147 = vshll.u32 920167782, %v3132
      %v3148 = vshrl.u32 1326507024, %v3133
      %v3149 = vor.u32 %v3147, %v3148
      %vm3150 = vcmp.lt.s32.totalorder %v3131, 1
      %vm3151 = vcmp.lt.s32.totalorder %v3131, 2
      %vm3152 = vcmp.lt.s32.totalorder %v3131, 3
      %vm3153 = vcmp.lt.s32.totalorder %v3131, 4
      %v3154 = vsel %vm3150, %v3134, %v3137
      %v3155 = vsel %vm3153, %v3143, 2102212464
      %v3156 = vsel %vm3152, %v3140, %v3155
      %v3157 = vsel %vm3151, %v3154, %v3156
      %v3158 = vsel %vm3150, %v3137, %v3140
      %v3159 = vsel %vm3153, %v3146, 920167782
      %v3160 = vsel %vm3152, %v3143, %v3159
      %v3161 = vsel %vm3151, %v3158, %v3160
      %v3162 = vsel %vm3150, %v3140, %v3143
      %v3163 = vsel %vm3153, %v3149, 1326507024
      %v3164 = vsel %vm3152, %v3146, %v3163
      %v3165 = vsel %vm3151, %v3162, %v3164
      %v3166 = vshll.u32 %v3126, 8
      %v3167 = vand.u32 %v3166, 65535
      %v3168 = vshrl.u32 %v3166, 16
      %v3169 = vand.u32 %v3165, 65535
      %v3170 = vshrl.u32 %v3165, 16
      %v3171 = vmul.u32 %v3167, %v3169
      %v3172 = vmul.u32 %v3167, %v3170
      %v3173 = vmul.u32 %v3168, %v3169
      %v3174 = vmul.u32 %v3168, %v3170
      %v3175 = vshll.u32 %v3172, 16
      %v3176 = vshrl.u32 %v3172, 16
      %v3177 = vshll.u32 %v3173, 16
      %v3178 = vshrl.u32 %v3173, 16
      %vm3179 = vc.u32 %v3171, %v3175
      %v3180 = vsel %vm3179, 1, 0
      %v3181 = vadd.s32 %v3171, %v3175
      %v3182 = vadd.s32 %v3174, %v3180
      %vm3183 = vc.u32 %v3181, %v3177
      %v3184 = vsel %vm3183, 1, 0
      %v3185 = vadd.s32 %v3181, %v3177
      %v3186 = vadd.s32 %v3182, %v3184
      %v3187 = vadd.s32 %v3186, %v3176
      %v3188 = vadd.s32 %v3187, %v3178
      %v3189 = vand.u32 %v3166, 65535
      %v3190 = vshrl.u32 %v3166, 16
      %v3191 = vand.u32 %v3161, 65535
      %v3192 = vshrl.u32 %v3161, 16
      %v3193 = vmul.u32 %v3189, %v3191
      %v3194 = vmul.u32 %v3189, %v3192
      %v3195 = vmul.u32 %v3190, %v3191
      %v3196 = vmul.u32 %v3190, %v3192
      %v3197 = vshll.u32 %v3194, 16
      %v3198 = vshrl.u32 %v3194, 16
      %v3199 = vshll.u32 %v3195, 16
      %v3200 = vshrl.u32 %v3195, 16
      %vm3201 = vc.u32 %v3193, %v3197
      %v3202 = vsel %vm3201, 1, 0
      %v3203 = vadd.s32 %v3193, %v3197
      %v3204 = vadd.s32 %v3196, %v3202
      %vm3205 = vc.u32 %v3203, %v3199
      %v3206 = vsel %vm3205, 1, 0
      %v3207 = vadd.s32 %v3203, %v3199
      %v3208 = vadd.s32 %v3204, %v3206
      %v3209 = vadd.s32 %v3208, %v3198
      %v3210 = vadd.s32 %v3209, %v3200
      %v3211 = vmul.u32 %v3166, %v3157
      %v3212 = vadd.s32 %v3188, %v3207
      %vm3213 = vc.u32 %v3188, %v3207
      %v3214 = vadd.s32 %v3210, 1
      %v3215 = vsel %vm3213, %v3214, %v3210
      %v3216 = vadd.s32 %v3211, %v3215
      %v3217 = vadd.s32 %v3216, 536870912
      %v3218 = vshrl.u32 %v3217, 30
      %v3219 = vshll.u32 %v3218, 30
      %v3220 = vsub.s32 %v3216, %v3219
      %vm3221 = vcmp.lt.s32.totalorder %v3220, 0
      %v3222 = vsub.s32 0, %v3220
      %v3223 = vsel %vm3221, %v3222, %v3220
      %v3224 = vclz %v3223
      %v3225 = vsub.s32 %v3224, 2
      %vm3226 = vcmp.gt.s32.totalorder 0, %v3225
      %v3227 = vsel %vm3226, 0, %v3225
      %v3228 = vsub.s32 32, %v3227
      %v3229 = vshll.u32 %v3220, %v3227
      %v3230 = vshrl.u32 %v3212, %v3228
      %v3231 = vor.u32 %v3229, %v3230
      %v3232 = vsub.s32 4294967266, %v3227
      %v3233 = vadd.s32 %v3232, 127
      %v3234 = vshll.u32 %v3233, 23
      %v3235 = vor.u32 4788187, %v3234
      %v3236 = vand.u32 2147483647, %v3235
      %v3238 = vcvt.s32.f32 %v3231
      %v3239 = vmul.f32 %v3238, %v3236
      %v3240 = vxor.u32 %v3239, 2147483648
      %v3241 = vsel %vm3120, %v3240, %v3239
      %v3242 = vsub.s32 4, %v3218
      %v3243 = vsel %vm3120, %v3242, %v3218
      %v3244 = vsel %vm3119, %v775, %v3241
      %v3245 = vsel %vm3119, 0, %v3243
      %v3246 = vmul.f32 %v3244, %v3244
      %v3247 = vmul.f32 %v3246, -0.001358992
      %v3248 = vadd.f32 %v3247, 0.041655596
      %v3249 = vmul.f32 %v3246, %v3248
      %v3250 = vadd.f32 %v3249, -0.4999988
      %v3251 = vmul.f32 %v3246, %v3250
      %v3252 = vadd.f32 1.0, %v3251
      %v3253 = vmul.f32 %v3244, %v3244
      %v3254 = vmul.f32 %v3253, -0.00019511016
      %v3255 = vadd.f32 %v3254, 0.008332121
      %v3256 = vmul.f32 %v3253, %v3255
      %v3257 = vadd.f32 %v3256, -0.16666654
      %v3258 = vmul.f32 %v3253, %v3257
      %v3259 = vadd.f32 %v3258, 1.0
      %v3260 = vmul.f32 %v3259, %v3244
      %vm3261 = vweird.f32 %v775
      %v3262 = vadd.s32 %v3245, 3
      %v3263 = vand.u32 %v3262, 3
      %vm3264 = vcmp.lt.s32.totalorder %v3263, 2
      %vm3265 = vcmp.eq.s32.totalorder %v3263, 0
      %v3266 = vxor.u32 %v3260, 2147483648
      %v3267 = vsel %vm3265, %v3252, %v3266
      %vm3268 = vcmp.eq.s32.totalorder %v3263, 2
      %v3269 = vxor.u32 %v3252, 2147483648
      %v3270 = vsel %vm3268, %v3269, %v3260
      %v3271 = vsel %vm3264, %v3267, %v3270
      %v3272 = vsel %vm3261, nan, %v3271
      %v3273 = vand.u32 2147483647, %v776
      %vm3274 = vcmp.le.f32.partialorder %v3273, 0.7853982
      %vm3275 = vcmp.lt.s32.totalorder %v776, 0
      %v3276 = vand.u32 %v776, 2139095040
      %v3277 = vshrl.u32 %v3276, 23
      %v3278 = vsub.s32 %v3277, 127
      %v3279 = vand.u32 2147483647, %v776
      %v3280 = vand.u32 %v3279, 8388607
      %v3281 = vor.u32 %v3280, 8388608
      %v3282 = vsub.s32 0, %v3281
      %v3283 = vadd.s32 %v3278, 1
      %vm3284 = vcmp.gt.s32.totalorder %v3283, 0
      %v3285 = vsel %vm3284, %v3283, 0
      %v3286 = vshrl.u32 %v3285, 5
      %v3287 = vand.u32 %v3285, 31
      %v3288 = vsub.s32 32, %v3287
      %v3289 = vshrl.u32 683565275, %v3288
      %v3290 = vshll.u32 683565275, %v3287
      %v3291 = vshrl.u32 2475754826, %v3288
      %v3292 = vor.u32 %v3290, %v3291
      %v3293 = vshll.u32 2475754826, %v3287
      %v3294 = vshrl.u32 2131351028, %v3288
      %v3295 = vor.u32 %v3293, %v3294
      %v3296 = vshll.u32 2131351028, %v3287
      %v3297 = vshrl.u32 2102212464, %v3288
      %v3298 = vor.u32 %v3296, %v3297
      %v3299 = vshll.u32 2102212464, %v3287
      %v3300 = vshrl.u32 920167782, %v3288
      %v3301 = vor.u32 %v3299, %v3300
      %v3302 = vshll.u32 920167782, %v3287
      %v3303 = vshrl.u32 1326507024, %v3288
      %v3304 = vor.u32 %v3302, %v3303
      %vm3305 = vcmp.lt.s32.totalorder %v3286, 1
      %vm3306 = vcmp.lt.s32.totalorder %v3286, 2
      %vm3307 = vcmp.lt.s32.totalorder %v3286, 3
      %vm3308 = vcmp.lt.s32.totalorder %v3286, 4
      %v3309 = vsel %vm3305, %v3289, %v3292
      %v3310 = vsel %vm3308, %v3298, 2102212464
      %v3311 = vsel %vm3307, %v3295, %v3310
      %v3312 = vsel %vm3306, %v3309, %v3311
      %v3313 = vsel %vm3305, %v3292, %v3295
      %v3314 = vsel %vm3308, %v3301, 920167782
      %v3315 = vsel %vm3307, %v3298, %v3314
      %v3316 = vsel %vm3306, %v3313, %v3315
      %v3317 = vsel %vm3305, %v3295, %v3298
      %v3318 = vsel %vm3308, %v3304, 1326507024
      %v3319 = vsel %vm3307, %v3301, %v3318
      %v3320 = vsel %vm3306, %v3317, %v3319
      %v3321 = vshll.u32 %v3281, 8
      %v3322 = vand.u32 %v3321, 65535
      %v3323 = vshrl.u32 %v3321, 16
      %v3324 = vand.u32 %v3320, 65535
      %v3325 = vshrl.u32 %v3320, 16
      %v3326 = vmul.u32 %v3322, %v3324
      %v3327 = vmul.u32 %v3322, %v3325
      %v3328 = vmul.u32 %v3323, %v3324
      %v3329 = vmul.u32 %v3323, %v3325
      %v3330 = vshll.u32 %v3327, 16
      %v3331 = vshrl.u32 %v3327, 16
      %v3332 = vshll.u32 %v3328, 16
      %v3333 = vshrl.u32 %v3328, 16
      %vm3334 = vc.u32 %v3326, %v3330
      %v3335 = vsel %vm3334, 1, 0
      %v3336 = vadd.s32 %v3326, %v3330
      %v3337 = vadd.s32 %v3329, %v3335
      %vm3338 = vc.u32 %v3336, %v3332
      %v3339 = vsel %vm3338, 1, 0
      %v3340 = vadd.s32 %v3336, %v3332
      %v3341 = vadd.s32 %v3337, %v3339
      %v3342 = vadd.s32 %v3341, %v3331
      %v3343 = vadd.s32 %v3342, %v3333
      %v3344 = vand.u32 %v3321, 65535
      %v3345 = vshrl.u32 %v3321, 16
      %v3346 = vand.u32 %v3316, 65535
      %v3347 = vshrl.u32 %v3316, 16
      %v3348 = vmul.u32 %v3344, %v3346
      %v3349 = vmul.u32 %v3344, %v3347
      %v3350 = vmul.u32 %v3345, %v3346
      %v3351 = vmul.u32 %v3345, %v3347
      %v3352 = vshll.u32 %v3349, 16
      %v3353 = vshrl.u32 %v3349, 16
      %v3354 = vshll.u32 %v3350, 16
      %v3355 = vshrl.u32 %v3350, 16
      %vm3356 = vc.u32 %v3348, %v3352
      %v3357 = vsel %vm3356, 1, 0
      %v3358 = vadd.s32 %v3348, %v3352
      %v3359 = vadd.s32 %v3351, %v3357
      %vm3360 = vc.u32 %v3358, %v3354
      %v3361 = vsel %vm3360, 1, 0
      %v3362 = vadd.s32 %v3358, %v3354
      %v3363 = vadd.s32 %v3359, %v3361
      %v3364 = vadd.s32 %v3363, %v3353
      %v3365 = vadd.s32 %v3364, %v3355
      %v3366 = vmul.u32 %v3321, %v3312
      %v3367 = vadd.s32 %v3343, %v3362
      %vm3368 = vc.u32 %v3343, %v3362
      %v3369 = vadd.s32 %v3365, 1
      %v3370 = vsel %vm3368, %v3369, %v3365
      %v3371 = vadd.s32 %v3366, %v3370
      %v3372 = vadd.s32 %v3371, 536870912
      %v3373 = vshrl.u32 %v3372, 30
      %v3374 = vshll.u32 %v3373, 30
      %v3375 = vsub.s32 %v3371, %v3374
      %vm3376 = vcmp.lt.s32.totalorder %v3375, 0
      %v3377 = vsub.s32 0, %v3375
      %v3378 = vsel %vm3376, %v3377, %v3375
      %v3379 = vclz %v3378
      %v3380 = vsub.s32 %v3379, 2
      %vm3381 = vcmp.gt.s32.totalorder 0, %v3380
      %v3382 = vsel %vm3381, 0, %v3380
      %v3383 = vsub.s32 32, %v3382
      %v3384 = vshll.u32 %v3375, %v3382
      %v3385 = vshrl.u32 %v3367, %v3383
      %v3386 = vor.u32 %v3384, %v3385
      %v3387 = vsub.s32 4294967266, %v3382
      %v3388 = vadd.s32 %v3387, 127
      %v3389 = vshll.u32 %v3388, 23
      %v3390 = vor.u32 4788187, %v3389
      %v3391 = vand.u32 2147483647, %v3390
      %v3393 = vcvt.s32.f32 %v3386
      %v3394 = vmul.f32 %v3393, %v3391
      %v3395 = vxor.u32 %v3394, 2147483648
      %v3396 = vsel %vm3275, %v3395, %v3394
      %v3397 = vsub.s32 4, %v3373
      %v3398 = vsel %vm3275, %v3397, %v3373
      %v3399 = vsel %vm3274, %v776, %v3396
      %v3400 = vsel %vm3274, 0, %v3398
      %v3401 = vmul.f32 %v3399, %v3399
      %v3402 = vmul.f32 %v3401, -0.001358992
      %v3403 = vadd.f32 %v3402, 0.041655596
      %v3404 = vmul.f32 %v3401, %v3403
      %v3405 = vadd.f32 %v3404, -0.4999988
      %v3406 = vmul.f32 %v3401, %v3405
      %v3407 = vadd.f32 1.0, %v3406
      %v3408 = vmul.f32 %v3399, %v3399
      %v3409 = vmul.f32 %v3408, -0.00019511016
      %v3410 = vadd.f32 %v3409, 0.008332121
      %v3411 = vmul.f32 %v3408, %v3410
      %v3412 = vadd.f32 %v3411, -0.16666654
      %v3413 = vmul.f32 %v3408, %v3412
      %v3414 = vadd.f32 %v3413, 1.0
      %v3415 = vmul.f32 %v3414, %v3399
      %vm3416 = vweird.f32 %v776
      %v3417 = vadd.s32 %v3400, 3
      %v3418 = vand.u32 %v3417, 3
      %vm3419 = vcmp.lt.s32.totalorder %v3418, 2
      %vm3420 = vcmp.eq.s32.totalorder %v3418, 0
      %v3421 = vxor.u32 %v3415, 2147483648
      %v3422 = vsel %vm3420, %v3407, %v3421
      %vm3423 = vcmp.eq.s32.totalorder %v3418, 2
      %v3424 = vxor.u32 %v3407, 2147483648
      %v3425 = vsel %vm3423, %v3424, %v3415
      %v3426 = vsel %vm3419, %v3422, %v3425
      %v3427 = vsel %vm3416, nan, %v3426
      %v3428 = vand.u32 2147483647, %v777
      %vm3429 = vcmp.le.f32.partialorder %v3428, 0.7853982
      %vm3430 = vcmp.lt.s32.totalorder %v777, 0
      %v3431 = vand.u32 %v777, 2139095040
      %v3432 = vshrl.u32 %v3431, 23
      %v3433 = vsub.s32 %v3432, 127
      %v3434 = vand.u32 2147483647, %v777
      %v3435 = vand.u32 %v3434, 8388607
      %v3436 = vor.u32 %v3435, 8388608
      %v3437 = vsub.s32 0, %v3436
      %v3438 = vadd.s32 %v3433, 1
      %vm3439 = vcmp.gt.s32.totalorder %v3438, 0
      %v3440 = vsel %vm3439, %v3438, 0
      %v3441 = vshrl.u32 %v3440, 5
      %v3442 = vand.u32 %v3440, 31
      %v3443 = vsub.s32 32, %v3442
      %v3444 = vshrl.u32 683565275, %v3443
      %v3445 = vshll.u32 683565275, %v3442
      %v3446 = vshrl.u32 2475754826, %v3443
      %v3447 = vor.u32 %v3445, %v3446
      %v3448 = vshll.u32 2475754826, %v3442
      %v3449 = vshrl.u32 2131351028, %v3443
      %v3450 = vor.u32 %v3448, %v3449
      %v3451 = vshll.u32 2131351028, %v3442
      %v3452 = vshrl.u32 2102212464, %v3443
      %v3453 = vor.u32 %v3451, %v3452
      %v3454 = vshll.u32 2102212464, %v3442
      %v3455 = vshrl.u32 920167782, %v3443
      %v3456 = vor.u32 %v3454, %v3455
      %v3457 = vshll.u32 920167782, %v3442
      %v3458 = vshrl.u32 1326507024, %v3443
      %v3459 = vor.u32 %v3457, %v3458
      %vm3460 = vcmp.lt.s32.totalorder %v3441, 1
      %vm3461 = vcmp.lt.s32.totalorder %v3441, 2
      %vm3462 = vcmp.lt.s32.totalorder %v3441, 3
      %vm3463 = vcmp.lt.s32.totalorder %v3441, 4
      %v3464 = vsel %vm3460, %v3444, %v3447
      %v3465 = vsel %vm3463, %v3453, 2102212464
      %v3466 = vsel %vm3462, %v3450, %v3465
      %v3467 = vsel %vm3461, %v3464, %v3466
      %v3468 = vsel %vm3460, %v3447, %v3450
      %v3469 = vsel %vm3463, %v3456, 920167782
      %v3470 = vsel %vm3462, %v3453, %v3469
      %v3471 = vsel %vm3461, %v3468, %v3470
      %v3472 = vsel %vm3460, %v3450, %v3453
      %v3473 = vsel %vm3463, %v3459, 1326507024
      %v3474 = vsel %vm3462, %v3456, %v3473
      %v3475 = vsel %vm3461, %v3472, %v3474
      %v3476 = vshll.u32 %v3436, 8
      %v3477 = vand.u32 %v3476, 65535
      %v3478 = vshrl.u32 %v3476, 16
      %v3479 = vand.u32 %v3475, 65535
      %v3480 = vshrl.u32 %v3475, 16
      %v3481 = vmul.u32 %v3477, %v3479
      %v3482 = vmul.u32 %v3477, %v3480
      %v3483 = vmul.u32 %v3478, %v3479
      %v3484 = vmul.u32 %v3478, %v3480
      %v3485 = vshll.u32 %v3482, 16
      %v3486 = vshrl.u32 %v3482, 16
      %v3487 = vshll.u32 %v3483, 16
      %v3488 = vshrl.u32 %v3483, 16
      %vm3489 = vc.u32 %v3481, %v3485
      %v3490 = vsel %vm3489, 1, 0
      %v3491 = vadd.s32 %v3481, %v3485
      %v3492 = vadd.s32 %v3484, %v3490
      %vm3493 = vc.u32 %v3491, %v3487
      %v3494 = vsel %vm3493, 1, 0
      %v3495 = vadd.s32 %v3491, %v3487
      %v3496 = vadd.s32 %v3492, %v3494
      %v3497 = vadd.s32 %v3496, %v3486
      %v3498 = vadd.s32 %v3497, %v3488
      %v3499 = vand.u32 %v3476, 65535
      %v3500 = vshrl.u32 %v3476, 16
      %v3501 = vand.u32 %v3471, 65535
      %v3502 = vshrl.u32 %v3471, 16
      %v3503 = vmul.u32 %v3499, %v3501
      %v3504 = vmul.u32 %v3499, %v3502
      %v3505 = vmul.u32 %v3500, %v3501
      %v3506 = vmul.u32 %v3500, %v3502
      %v3507 = vshll.u32 %v3504, 16
      %v3508 = vshrl.u32 %v3504, 16
      %v3509 = vshll.u32 %v3505, 16
      %v3510 = vshrl.u32 %v3505, 16
      %vm3511 = vc.u32 %v3503, %v3507
      %v3512 = vsel %vm3511, 1, 0
      %v3513 = vadd.s32 %v3503, %v3507
      %v3514 = vadd.s32 %v3506, %v3512
      %vm3515 = vc.u32 %v3513, %v3509
      %v3516 = vsel %vm3515, 1, 0
      %v3517 = vadd.s32 %v3513, %v3509
      %v3518 = vadd.s32 %v3514, %v3516
      %v3519 = vadd.s32 %v3518, %v3508
      %v3520 = vadd.s32 %v3519, %v3510
      %v3521 = vmul.u32 %v3476, %v3467
      %v3522 = vadd.s32 %v3498, %v3517
      %vm3523 = vc.u32 %v3498, %v3517
      %v3524 = vadd.s32 %v3520, 1
      %v3525 = vsel %vm3523, %v3524, %v3520
      %v3526 = vadd.s32 %v3521, %v3525
      %v3527 = vadd.s32 %v3526, 536870912
      %v3528 = vshrl.u32 %v3527, 30
      %v3529 = vshll.u32 %v3528, 30
      %v3530 = vsub.s32 %v3526, %v3529
      %vm3531 = vcmp.lt.s32.totalorder %v3530, 0
      %v3532 = vsub.s32 0, %v3530
      %v3533 = vsel %vm3531, %v3532, %v3530
      %v3534 = vclz %v3533
      %v3535 = vsub.s32 %v3534, 2
      %vm3536 = vcmp.gt.s32.totalorder 0, %v3535
      %v3537 = vsel %vm3536, 0, %v3535
      %v3538 = vsub.s32 32, %v3537
      %v3539 = vshll.u32 %v3530, %v3537
      %v3540 = vshrl.u32 %v3522, %v3538
      %v3541 = vor.u32 %v3539, %v3540
      %v3542 = vsub.s32 4294967266, %v3537
      %v3543 = vadd.s32 %v3542, 127
      %v3544 = vshll.u32 %v3543, 23
      %v3545 = vor.u32 4788187, %v3544
      %v3546 = vand.u32 2147483647, %v3545
      %v3548 = vcvt.s32.f32 %v3541
      %v3549 = vmul.f32 %v3548, %v3546
      %v3550 = vxor.u32 %v3549, 2147483648
      %v3551 = vsel %vm3430, %v3550, %v3549
      %v3552 = vsub.s32 4, %v3528
      %v3553 = vsel %vm3430, %v3552, %v3528
      %v3554 = vsel %vm3429, %v777, %v3551
      %v3555 = vsel %vm3429, 0, %v3553
      %v3556 = vmul.f32 %v3554, %v3554
      %v3557 = vmul.f32 %v3556, -0.001358992
      %v3558 = vadd.f32 %v3557, 0.041655596
      %v3559 = vmul.f32 %v3556, %v3558
      %v3560 = vadd.f32 %v3559, -0.4999988
      %v3561 = vmul.f32 %v3556, %v3560
      %v3562 = vadd.f32 1.0, %v3561
      %v3563 = vmul.f32 %v3554, %v3554
      %v3564 = vmul.f32 %v3563, -0.00019511016
      %v3565 = vadd.f32 %v3564, 0.008332121
      %v3566 = vmul.f32 %v3563, %v3565
      %v3567 = vadd.f32 %v3566, -0.16666654
      %v3568 = vmul.f32 %v3563, %v3567
      %v3569 = vadd.f32 %v3568, 1.0
      %v3570 = vmul.f32 %v3569, %v3554
      %vm3571 = vweird.f32 %v777
      %v3572 = vadd.s32 %v3555, 3
      %v3573 = vand.u32 %v3572, 3
      %vm3574 = vcmp.lt.s32.totalorder %v3573, 2
      %vm3575 = vcmp.eq.s32.totalorder %v3573, 0
      %v3576 = vxor.u32 %v3570, 2147483648
      %v3577 = vsel %vm3575, %v3562, %v3576
      %vm3578 = vcmp.eq.s32.totalorder %v3573, 2
      %v3579 = vxor.u32 %v3562, 2147483648
      %v3580 = vsel %vm3578, %v3579, %v3570
      %v3581 = vsel %vm3574, %v3577, %v3580
      %v3582 = vsel %vm3571, nan, %v3581
      %v3583 = vand.u32 2147483647, %v778
      %vm3584 = vcmp.le.f32.partialorder %v3583, 0.7853982
      %vm3585 = vcmp.lt.s32.totalorder %v778, 0
      %v3586 = vand.u32 %v778, 2139095040
      %v3587 = vshrl.u32 %v3586, 23
      %v3588 = vsub.s32 %v3587, 127
      %v3589 = vand.u32 2147483647, %v778
      %v3590 = vand.u32 %v3589, 8388607
      %v3591 = vor.u32 %v3590, 8388608
      %v3592 = vsub.s32 0, %v3591
      %v3593 = vadd.s32 %v3588, 1
      %vm3594 = vcmp.gt.s32.totalorder %v3593, 0
      %v3595 = vsel %vm3594, %v3593, 0
      %v3596 = vshrl.u32 %v3595, 5
      %v3597 = vand.u32 %v3595, 31
      %v3598 = vsub.s32 32, %v3597
      %v3599 = vshrl.u32 683565275, %v3598
      %v3600 = vshll.u32 683565275, %v3597
      %v3601 = vshrl.u32 2475754826, %v3598
      %v3602 = vor.u32 %v3600, %v3601
      %v3603 = vshll.u32 2475754826, %v3597
      %v3604 = vshrl.u32 2131351028, %v3598
      %v3605 = vor.u32 %v3603, %v3604
      %v3606 = vshll.u32 2131351028, %v3597
      %v3607 = vshrl.u32 2102212464, %v3598
      %v3608 = vor.u32 %v3606, %v3607
      %v3609 = vshll.u32 2102212464, %v3597
      %v3610 = vshrl.u32 920167782, %v3598
      %v3611 = vor.u32 %v3609, %v3610
      %v3612 = vshll.u32 920167782, %v3597
      %v3613 = vshrl.u32 1326507024, %v3598
      %v3614 = vor.u32 %v3612, %v3613
      %vm3615 = vcmp.lt.s32.totalorder %v3596, 1
      %vm3616 = vcmp.lt.s32.totalorder %v3596, 2
      %vm3617 = vcmp.lt.s32.totalorder %v3596, 3
      %vm3618 = vcmp.lt.s32.totalorder %v3596, 4
      %v3619 = vsel %vm3615, %v3599, %v3602
      %v3620 = vsel %vm3618, %v3608, 2102212464
      %v3621 = vsel %vm3617, %v3605, %v3620
      %v3622 = vsel %vm3616, %v3619, %v3621
      %v3623 = vsel %vm3615, %v3602, %v3605
      %v3624 = vsel %vm3618, %v3611, 920167782
      %v3625 = vsel %vm3617, %v3608, %v3624
      %v3626 = vsel %vm3616, %v3623, %v3625
      %v3627 = vsel %vm3615, %v3605, %v3608
      %v3628 = vsel %vm3618, %v3614, 1326507024
      %v3629 = vsel %vm3617, %v3611, %v3628
      %v3630 = vsel %vm3616, %v3627, %v3629
      %v3631 = vshll.u32 %v3591, 8
      %v3632 = vand.u32 %v3631, 65535
      %v3633 = vshrl.u32 %v3631, 16
      %v3634 = vand.u32 %v3630, 65535
      %v3635 = vshrl.u32 %v3630, 16
      %v3636 = vmul.u32 %v3632, %v3634
      %v3637 = vmul.u32 %v3632, %v3635
      %v3638 = vmul.u32 %v3633, %v3634
      %v3639 = vmul.u32 %v3633, %v3635
      %v3640 = vshll.u32 %v3637, 16
      %v3641 = vshrl.u32 %v3637, 16
      %v3642 = vshll.u32 %v3638, 16
      %v3643 = vshrl.u32 %v3638, 16
      %vm3644 = vc.u32 %v3636, %v3640
      %v3645 = vsel %vm3644, 1, 0
      %v3646 = vadd.s32 %v3636, %v3640
      %v3647 = vadd.s32 %v3639, %v3645
      %vm3648 = vc.u32 %v3646, %v3642
      %v3649 = vsel %vm3648, 1, 0
      %v3650 = vadd.s32 %v3646, %v3642
      %v3651 = vadd.s32 %v3647, %v3649
      %v3652 = vadd.s32 %v3651, %v3641
      %v3653 = vadd.s32 %v3652, %v3643
      %v3654 = vand.u32 %v3631, 65535
      %v3655 = vshrl.u32 %v3631, 16
      %v3656 = vand.u32 %v3626, 65535
      %v3657 = vshrl.u32 %v3626, 16
      %v3658 = vmul.u32 %v3654, %v3656
      %v3659 = vmul.u32 %v3654, %v3657
      %v3660 = vmul.u32 %v3655, %v3656
      %v3661 = vmul.u32 %v3655, %v3657
      %v3662 = vshll.u32 %v3659, 16
      %v3663 = vshrl.u32 %v3659, 16
      %v3664 = vshll.u32 %v3660, 16
      %v3665 = vshrl.u32 %v3660, 16
      %vm3666 = vc.u32 %v3658, %v3662
      %v3667 = vsel %vm3666, 1, 0
      %v3668 = vadd.s32 %v3658, %v3662
      %v3669 = vadd.s32 %v3661, %v3667
      %vm3670 = vc.u32 %v3668, %v3664
      %v3671 = vsel %vm3670, 1, 0
      %v3672 = vadd.s32 %v3668, %v3664
      %v3673 = vadd.s32 %v3669, %v3671
      %v3674 = vadd.s32 %v3673, %v3663
      %v3675 = vadd.s32 %v3674, %v3665
      %v3676 = vmul.u32 %v3631, %v3622
      %v3677 = vadd.s32 %v3653, %v3672
      %vm3678 = vc.u32 %v3653, %v3672
      %v3679 = vadd.s32 %v3675, 1
      %v3680 = vsel %vm3678, %v3679, %v3675
      %v3681 = vadd.s32 %v3676, %v3680
      %v3682 = vadd.s32 %v3681, 536870912
      %v3683 = vshrl.u32 %v3682, 30
      %v3684 = vshll.u32 %v3683, 30
      %v3685 = vsub.s32 %v3681, %v3684
      %vm3686 = vcmp.lt.s32.totalorder %v3685, 0
      %v3687 = vsub.s32 0, %v3685
      %v3688 = vsel %vm3686, %v3687, %v3685
      %v3689 = vclz %v3688
      %v3690 = vsub.s32 %v3689, 2
      %vm3691 = vcmp.gt.s32.totalorder 0, %v3690
      %v3692 = vsel %vm3691, 0, %v3690
      %v3693 = vsub.s32 32, %v3692
      %v3694 = vshll.u32 %v3685, %v3692
      %v3695 = vshrl.u32 %v3677, %v3693
      %v3696 = vor.u32 %v3694, %v3695
      %v3697 = vsub.s32 4294967266, %v3692
      %v3698 = vadd.s32 %v3697, 127
      %v3699 = vshll.u32 %v3698, 23
      %v3700 = vor.u32 4788187, %v3699
      %v3701 = vand.u32 2147483647, %v3700
      %v3703 = vcvt.s32.f32 %v3696
      %v3704 = vmul.f32 %v3703, %v3701
      %v3705 = vxor.u32 %v3704, 2147483648
      %v3706 = vsel %vm3585, %v3705, %v3704
      %v3707 = vsub.s32 4, %v3683
      %v3708 = vsel %vm3585, %v3707, %v3683
      %v3709 = vsel %vm3584, %v778, %v3706
      %v3710 = vsel %vm3584, 0, %v3708
      %v3711 = vmul.f32 %v3709, %v3709
      %v3712 = vmul.f32 %v3711, -0.001358992
      %v3713 = vadd.f32 %v3712, 0.041655596
      %v3714 = vmul.f32 %v3711, %v3713
      %v3715 = vadd.f32 %v3714, -0.4999988
      %v3716 = vmul.f32 %v3711, %v3715
      %v3717 = vadd.f32 1.0, %v3716
      %v3718 = vmul.f32 %v3709, %v3709
      %v3719 = vmul.f32 %v3718, -0.00019511016
      %v3720 = vadd.f32 %v3719, 0.008332121
      %v3721 = vmul.f32 %v3718, %v3720
      %v3722 = vadd.f32 %v3721, -0.16666654
      %v3723 = vmul.f32 %v3718, %v3722
      %v3724 = vadd.f32 %v3723, 1.0
      %v3725 = vmul.f32 %v3724, %v3709
      %vm3726 = vweird.f32 %v778
      %v3727 = vadd.s32 %v3710, 3
      %v3728 = vand.u32 %v3727, 3
      %vm3729 = vcmp.lt.s32.totalorder %v3728, 2
      %vm3730 = vcmp.eq.s32.totalorder %v3728, 0
      %v3731 = vxor.u32 %v3725, 2147483648
      %v3732 = vsel %vm3730, %v3717, %v3731
      %vm3733 = vcmp.eq.s32.totalorder %v3728, 2
      %v3734 = vxor.u32 %v3717, 2147483648
      %v3735 = vsel %vm3733, %v3734, %v3725
      %v3736 = vsel %vm3729, %v3732, %v3735
      %v3737 = vsel %vm3726, nan, %v3736
      %v3738 = vand.u32 2147483647, %v779
      %vm3739 = vcmp.le.f32.partialorder %v3738, 0.7853982
      %vm3740 = vcmp.lt.s32.totalorder %v779, 0
      %v3741 = vand.u32 %v779, 2139095040
      %v3742 = vshrl.u32 %v3741, 23
      %v3743 = vsub.s32 %v3742, 127
      %v3744 = vand.u32 2147483647, %v779
      %v3745 = vand.u32 %v3744, 8388607
      %v3746 = vor.u32 %v3745, 8388608
      %v3747 = vsub.s32 0, %v3746
      %v3748 = vadd.s32 %v3743, 1
      %vm3749 = vcmp.gt.s32.totalorder %v3748, 0
      %v3750 = vsel %vm3749, %v3748, 0
      %v3751 = vshrl.u32 %v3750, 5
      %v3752 = vand.u32 %v3750, 31
      %v3753 = vsub.s32 32, %v3752
      %v3754 = vshrl.u32 683565275, %v3753
      %v3755 = vshll.u32 683565275, %v3752
      %v3756 = vshrl.u32 2475754826, %v3753
      %v3757 = vor.u32 %v3755, %v3756
      %v3758 = vshll.u32 2475754826, %v3752
      %v3759 = vshrl.u32 2131351028, %v3753
      %v3760 = vor.u32 %v3758, %v3759
      %v3761 = vshll.u32 2131351028, %v3752
      %v3762 = vshrl.u32 2102212464, %v3753
      %v3763 = vor.u32 %v3761, %v3762
      %v3764 = vshll.u32 2102212464, %v3752
      %v3765 = vshrl.u32 920167782, %v3753
      %v3766 = vor.u32 %v3764, %v3765
      %v3767 = vshll.u32 920167782, %v3752
      %v3768 = vshrl.u32 1326507024, %v3753
      %v3769 = vor.u32 %v3767, %v3768
      %vm3770 = vcmp.lt.s32.totalorder %v3751, 1
      %vm3771 = vcmp.lt.s32.totalorder %v3751, 2
      %vm3772 = vcmp.lt.s32.totalorder %v3751, 3
      %vm3773 = vcmp.lt.s32.totalorder %v3751, 4
      %v3774 = vsel %vm3770, %v3754, %v3757
      %v3775 = vsel %vm3773, %v3763, 2102212464
      %v3776 = vsel %vm3772, %v3760, %v3775
      %v3777 = vsel %vm3771, %v3774, %v3776
      %v3778 = vsel %vm3770, %v3757, %v3760
      %v3779 = vsel %vm3773, %v3766, 920167782
      %v3780 = vsel %vm3772, %v3763, %v3779
      %v3781 = vsel %vm3771, %v3778, %v3780
      %v3782 = vsel %vm3770, %v3760, %v3763
      %v3783 = vsel %vm3773, %v3769, 1326507024
      %v3784 = vsel %vm3772, %v3766, %v3783
      %v3785 = vsel %vm3771, %v3782, %v3784
      %v3786 = vshll.u32 %v3746, 8
      %v3787 = vand.u32 %v3786, 65535
      %v3788 = vshrl.u32 %v3786, 16
      %v3789 = vand.u32 %v3785, 65535
      %v3790 = vshrl.u32 %v3785, 16
      %v3791 = vmul.u32 %v3787, %v3789
      %v3792 = vmul.u32 %v3787, %v3790
      %v3793 = vmul.u32 %v3788, %v3789
      %v3794 = vmul.u32 %v3788, %v3790
      %v3795 = vshll.u32 %v3792, 16
      %v3796 = vshrl.u32 %v3792, 16
      %v3797 = vshll.u32 %v3793, 16
      %v3798 = vshrl.u32 %v3793, 16
      %vm3799 = vc.u32 %v3791, %v3795
      %v3800 = vsel %vm3799, 1, 0
      %v3801 = vadd.s32 %v3791, %v3795
      %v3802 = vadd.s32 %v3794, %v3800
      %vm3803 = vc.u32 %v3801, %v3797
      %v3804 = vsel %vm3803, 1, 0
      %v3805 = vadd.s32 %v3801, %v3797
      %v3806 = vadd.s32 %v3802, %v3804
      %v3807 = vadd.s32 %v3806, %v3796
      %v3808 = vadd.s32 %v3807, %v3798
      %v3809 = vand.u32 %v3786, 65535
      %v3810 = vshrl.u32 %v3786, 16
      %v3811 = vand.u32 %v3781, 65535
      %v3812 = vshrl.u32 %v3781, 16
      %v3813 = vmul.u32 %v3809, %v3811
      %v3814 = vmul.u32 %v3809, %v3812
      %v3815 = vmul.u32 %v3810, %v3811
      %v3816 = vmul.u32 %v3810, %v3812
      %v3817 = vshll.u32 %v3814, 16
      %v3818 = vshrl.u32 %v3814, 16
      %v3819 = vshll.u32 %v3815, 16
      %v3820 = vshrl.u32 %v3815, 16
      %vm3821 = vc.u32 %v3813, %v3817
      %v3822 = vsel %vm3821, 1, 0
      %v3823 = vadd.s32 %v3813, %v3817
      %v3824 = vadd.s32 %v3816, %v3822
      %vm3825 = vc.u32 %v3823, %v3819
      %v3826 = vsel %vm3825, 1, 0
      %v3827 = vadd.s32 %v3823, %v3819
      %v3828 = vadd.s32 %v3824, %v3826
      %v3829 = vadd.s32 %v3828, %v3818
      %v3830 = vadd.s32 %v3829, %v3820
      %v3831 = vmul.u32 %v3786, %v3777
      %v3832 = vadd.s32 %v3808, %v3827
      %vm3833 = vc.u32 %v3808, %v3827
      %v3834 = vadd.s32 %v3830, 1
      %v3835 = vsel %vm3833, %v3834, %v3830
      %v3836 = vadd.s32 %v3831, %v3835
      %v3837 = vadd.s32 %v3836, 536870912
      %v3838 = vshrl.u32 %v3837, 30
      %v3839 = vshll.u32 %v3838, 30
      %v3840 = vsub.s32 %v3836, %v3839
      %vm3841 = vcmp.lt.s32.totalorder %v3840, 0
      %v3842 = vsub.s32 0, %v3840
      %v3843 = vsel %vm3841, %v3842, %v3840
      %v3844 = vclz %v3843
      %v3845 = vsub.s32 %v3844, 2
      %vm3846 = vcmp.gt.s32.totalorder 0, %v3845
      %v3847 = vsel %vm3846, 0, %v3845
      %v3848 = vsub.s32 32, %v3847
      %v3849 = vshll.u32 %v3840, %v3847
      %v3850 = vshrl.u32 %v3832, %v3848
      %v3851 = vor.u32 %v3849, %v3850
      %v3852 = vsub.s32 4294967266, %v3847
      %v3853 = vadd.s32 %v3852, 127
      %v3854 = vshll.u32 %v3853, 23
      %v3855 = vor.u32 4788187, %v3854
      %v3856 = vand.u32 2147483647, %v3855
      %v3858 = vcvt.s32.f32 %v3851
      %v3859 = vmul.f32 %v3858, %v3856
      %v3860 = vxor.u32 %v3859, 2147483648
      %v3861 = vsel %vm3740, %v3860, %v3859
      %v3862 = vsub.s32 4, %v3838
      %v3863 = vsel %vm3740, %v3862, %v3838
      %v3864 = vsel %vm3739, %v779, %v3861
      %v3865 = vsel %vm3739, 0, %v3863
      %v3866 = vmul.f32 %v3864, %v3864
      %v3867 = vmul.f32 %v3866, -0.001358992
      %v3868 = vadd.f32 %v3867, 0.041655596
      %v3869 = vmul.f32 %v3866, %v3868
      %v3870 = vadd.f32 %v3869, -0.4999988
      %v3871 = vmul.f32 %v3866, %v3870
      %v3872 = vadd.f32 1.0, %v3871
      %v3873 = vmul.f32 %v3864, %v3864
      %v3874 = vmul.f32 %v3873, -0.00019511016
      %v3875 = vadd.f32 %v3874, 0.008332121
      %v3876 = vmul.f32 %v3873, %v3875
      %v3877 = vadd.f32 %v3876, -0.16666654
      %v3878 = vmul.f32 %v3873, %v3877
      %v3879 = vadd.f32 %v3878, 1.0
      %v3880 = vmul.f32 %v3879, %v3864
      %vm3881 = vweird.f32 %v779
      %v3882 = vadd.s32 %v3865, 3
      %v3883 = vand.u32 %v3882, 3
      %vm3884 = vcmp.lt.s32.totalorder %v3883, 2
      %vm3885 = vcmp.eq.s32.totalorder %v3883, 0
      %v3886 = vxor.u32 %v3880, 2147483648
      %v3887 = vsel %vm3885, %v3872, %v3886
      %vm3888 = vcmp.eq.s32.totalorder %v3883, 2
      %v3889 = vxor.u32 %v3872, 2147483648
      %v3890 = vsel %vm3888, %v3889, %v3880
      %v3891 = vsel %vm3884, %v3887, %v3890
      %v3892 = vsel %vm3881, nan, %v3891
      %v3893 = vand.u32 2147483647, %v780
      %vm3894 = vcmp.le.f32.partialorder %v3893, 0.7853982
      %vm3895 = vcmp.lt.s32.totalorder %v780, 0
      %v3896 = vand.u32 %v780, 2139095040
      %v3897 = vshrl.u32 %v3896, 23
      %v3898 = vsub.s32 %v3897, 127
      %v3899 = vand.u32 2147483647, %v780
      %v3900 = vand.u32 %v3899, 8388607
      %v3901 = vor.u32 %v3900, 8388608
      %v3902 = vsub.s32 0, %v3901
      %v3903 = vadd.s32 %v3898, 1
      %vm3904 = vcmp.gt.s32.totalorder %v3903, 0
      %v3905 = vsel %vm3904, %v3903, 0
      %v3906 = vshrl.u32 %v3905, 5
      %v3907 = vand.u32 %v3905, 31
      %v3908 = vsub.s32 32, %v3907
      %v3909 = vshrl.u32 683565275, %v3908
      %v3910 = vshll.u32 683565275, %v3907
      %v3911 = vshrl.u32 2475754826, %v3908
      %v3912 = vor.u32 %v3910, %v3911
      %v3913 = vshll.u32 2475754826, %v3907
      %v3914 = vshrl.u32 2131351028, %v3908
      %v3915 = vor.u32 %v3913, %v3914
      %v3916 = vshll.u32 2131351028, %v3907
      %v3917 = vshrl.u32 2102212464, %v3908
      %v3918 = vor.u32 %v3916, %v3917
      %v3919 = vshll.u32 2102212464, %v3907
      %v3920 = vshrl.u32 920167782, %v3908
      %v3921 = vor.u32 %v3919, %v3920
      %v3922 = vshll.u32 920167782, %v3907
      %v3923 = vshrl.u32 1326507024, %v3908
      %v3924 = vor.u32 %v3922, %v3923
      %vm3925 = vcmp.lt.s32.totalorder %v3906, 1
      %vm3926 = vcmp.lt.s32.totalorder %v3906, 2
      %vm3927 = vcmp.lt.s32.totalorder %v3906, 3
      %vm3928 = vcmp.lt.s32.totalorder %v3906, 4
      %v3929 = vsel %vm3925, %v3909, %v3912
      %v3930 = vsel %vm3928, %v3918, 2102212464
      %v3931 = vsel %vm3927, %v3915, %v3930
      %v3932 = vsel %vm3926, %v3929, %v3931
      %v3933 = vsel %vm3925, %v3912, %v3915
      %v3934 = vsel %vm3928, %v3921, 920167782
      %v3935 = vsel %vm3927, %v3918, %v3934
      %v3936 = vsel %vm3926, %v3933, %v3935
      %v3937 = vsel %vm3925, %v3915, %v3918
      %v3938 = vsel %vm3928, %v3924, 1326507024
      %v3939 = vsel %vm3927, %v3921, %v3938
      %v3940 = vsel %vm3926, %v3937, %v3939
      %v3941 = vshll.u32 %v3901, 8
      %v3942 = vand.u32 %v3941, 65535
      %v3943 = vshrl.u32 %v3941, 16
      %v3944 = vand.u32 %v3940, 65535
      %v3945 = vshrl.u32 %v3940, 16
      %v3946 = vmul.u32 %v3942, %v3944
      %v3947 = vmul.u32 %v3942, %v3945
      %v3948 = vmul.u32 %v3943, %v3944
      %v3949 = vmul.u32 %v3943, %v3945
      %v3950 = vshll.u32 %v3947, 16
      %v3951 = vshrl.u32 %v3947, 16
      %v3952 = vshll.u32 %v3948, 16
      %v3953 = vshrl.u32 %v3948, 16
      %vm3954 = vc.u32 %v3946, %v3950
      %v3955 = vsel %vm3954, 1, 0
      %v3956 = vadd.s32 %v3946, %v3950
      %v3957 = vadd.s32 %v3949, %v3955
      %vm3958 = vc.u32 %v3956, %v3952
      %v3959 = vsel %vm3958, 1, 0
      %v3960 = vadd.s32 %v3956, %v3952
      %v3961 = vadd.s32 %v3957, %v3959
      %v3962 = vadd.s32 %v3961, %v3951
      %v3963 = vadd.s32 %v3962, %v3953
      %v3964 = vand.u32 %v3941, 65535
      %v3965 = vshrl.u32 %v3941, 16
      %v3966 = vand.u32 %v3936, 65535
      %v3967 = vshrl.u32 %v3936, 16
      %v3968 = vmul.u32 %v3964, %v3966
      %v3969 = vmul.u32 %v3964, %v3967
      %v3970 = vmul.u32 %v3965, %v3966
      %v3971 = vmul.u32 %v3965, %v3967
      %v3972 = vshll.u32 %v3969, 16
      %v3973 = vshrl.u32 %v3969, 16
      %v3974 = vshll.u32 %v3970, 16
      %v3975 = vshrl.u32 %v3970, 16
      %vm3976 = vc.u32 %v3968, %v3972
      %v3977 = vsel %vm3976, 1, 0
      %v3978 = vadd.s32 %v3968, %v3972
      %v3979 = vadd.s32 %v3971, %v3977
      %vm3980 = vc.u32 %v3978, %v3974
      %v3981 = vsel %vm3980, 1, 0
      %v3982 = vadd.s32 %v3978, %v3974
      %v3983 = vadd.s32 %v3979, %v3981
      %v3984 = vadd.s32 %v3983, %v3973
      %v3985 = vadd.s32 %v3984, %v3975
      %v3986 = vmul.u32 %v3941, %v3932
      %v3987 = vadd.s32 %v3963, %v3982
      %vm3988 = vc.u32 %v3963, %v3982
      %v3989 = vadd.s32 %v3985, 1
      %v3990 = vsel %vm3988, %v3989, %v3985
      %v3991 = vadd.s32 %v3986, %v3990
      %v3992 = vadd.s32 %v3991, 536870912
      %v3993 = vshrl.u32 %v3992, 30
      %v3994 = vshll.u32 %v3993, 30
      %v3995 = vsub.s32 %v3991, %v3994
      %vm3996 = vcmp.lt.s32.totalorder %v3995, 0
      %v3997 = vsub.s32 0, %v3995
      %v3998 = vsel %vm3996, %v3997, %v3995
      %v3999 = vclz %v3998
      %v4000 = vsub.s32 %v3999, 2
      %vm4001 = vcmp.gt.s32.totalorder 0, %v4000
      %v4002 = vsel %vm4001, 0, %v4000
      %v4003 = vsub.s32 32, %v4002
      %v4004 = vshll.u32 %v3995, %v4002
      %v4005 = vshrl.u32 %v3987, %v4003
      %v4006 = vor.u32 %v4004, %v4005
      %v4007 = vsub.s32 4294967266, %v4002
      %v4008 = vadd.s32 %v4007, 127
      %v4009 = vshll.u32 %v4008, 23
      %v4010 = vor.u32 4788187, %v4009
      %v4011 = vand.u32 2147483647, %v4010
      %v4013 = vcvt.s32.f32 %v4006
      %v4014 = vmul.f32 %v4013, %v4011
      %v4015 = vxor.u32 %v4014, 2147483648
      %v4016 = vsel %vm3895, %v4015, %v4014
      %v4017 = vsub.s32 4, %v3993
      %v4018 = vsel %vm3895, %v4017, %v3993
      %v4019 = vsel %vm3894, %v780, %v4016
      %v4020 = vsel %vm3894, 0, %v4018
      %v4021 = vmul.f32 %v4019, %v4019
      %v4022 = vmul.f32 %v4021, -0.001358992
      %v4023 = vadd.f32 %v4022, 0.041655596
      %v4024 = vmul.f32 %v4021, %v4023
      %v4025 = vadd.f32 %v4024, -0.4999988
      %v4026 = vmul.f32 %v4021, %v4025
      %v4027 = vadd.f32 1.0, %v4026
      %v4028 = vmul.f32 %v4019, %v4019
      %v4029 = vmul.f32 %v4028, -0.00019511016
      %v4030 = vadd.f32 %v4029, 0.008332121
      %v4031 = vmul.f32 %v4028, %v4030
      %v4032 = vadd.f32 %v4031, -0.16666654
      %v4033 = vmul.f32 %v4028, %v4032
      %v4034 = vadd.f32 %v4033, 1.0
      %v4035 = vmul.f32 %v4034, %v4019
      %vm4036 = vweird.f32 %v780
      %v4037 = vadd.s32 %v4020, 3
      %v4038 = vand.u32 %v4037, 3
      %vm4039 = vcmp.lt.s32.totalorder %v4038, 2
      %vm4040 = vcmp.eq.s32.totalorder %v4038, 0
      %v4041 = vxor.u32 %v4035, 2147483648
      %v4042 = vsel %vm4040, %v4027, %v4041
      %vm4043 = vcmp.eq.s32.totalorder %v4038, 2
      %v4044 = vxor.u32 %v4027, 2147483648
      %v4045 = vsel %vm4043, %v4044, %v4035
      %v4046 = vsel %vm4039, %v4042, %v4045
      %v4047 = vsel %vm4036, nan, %v4046
      %v4048 = vand.u32 2147483647, %v781
      %vm4049 = vcmp.le.f32.partialorder %v4048, 0.7853982
      %vm4050 = vcmp.lt.s32.totalorder %v781, 0
      %v4051 = vand.u32 %v781, 2139095040
      %v4052 = vshrl.u32 %v4051, 23
      %v4053 = vsub.s32 %v4052, 127
      %v4054 = vand.u32 2147483647, %v781
      %v4055 = vand.u32 %v4054, 8388607
      %v4056 = vor.u32 %v4055, 8388608
      %v4057 = vsub.s32 0, %v4056
      %v4058 = vadd.s32 %v4053, 1
      %vm4059 = vcmp.gt.s32.totalorder %v4058, 0
      %v4060 = vsel %vm4059, %v4058, 0
      %v4061 = vshrl.u32 %v4060, 5
      %v4062 = vand.u32 %v4060, 31
      %v4063 = vsub.s32 32, %v4062
      %v4064 = vshrl.u32 683565275, %v4063
      %v4065 = vshll.u32 683565275, %v4062
      %v4066 = vshrl.u32 2475754826, %v4063
      %v4067 = vor.u32 %v4065, %v4066
      %v4068 = vshll.u32 2475754826, %v4062
      %v4069 = vshrl.u32 2131351028, %v4063
      %v4070 = vor.u32 %v4068, %v4069
      %v4071 = vshll.u32 2131351028, %v4062
      %v4072 = vshrl.u32 2102212464, %v4063
      %v4073 = vor.u32 %v4071, %v4072
      %v4074 = vshll.u32 2102212464, %v4062
      %v4075 = vshrl.u32 920167782, %v4063
      %v4076 = vor.u32 %v4074, %v4075
      %v4077 = vshll.u32 920167782, %v4062
      %v4078 = vshrl.u32 1326507024, %v4063
      %v4079 = vor.u32 %v4077, %v4078
      %vm4080 = vcmp.lt.s32.totalorder %v4061, 1
      %vm4081 = vcmp.lt.s32.totalorder %v4061, 2
      %vm4082 = vcmp.lt.s32.totalorder %v4061, 3
      %vm4083 = vcmp.lt.s32.totalorder %v4061, 4
      %v4084 = vsel %vm4080, %v4064, %v4067
      %v4085 = vsel %vm4083, %v4073, 2102212464
      %v4086 = vsel %vm4082, %v4070, %v4085
      %v4087 = vsel %vm4081, %v4084, %v4086
      %v4088 = vsel %vm4080, %v4067, %v4070
      %v4089 = vsel %vm4083, %v4076, 920167782
      %v4090 = vsel %vm4082, %v4073, %v4089
      %v4091 = vsel %vm4081, %v4088, %v4090
      %v4092 = vsel %vm4080, %v4070, %v4073
      %v4093 = vsel %vm4083, %v4079, 1326507024
      %v4094 = vsel %vm4082, %v4076, %v4093
      %v4095 = vsel %vm4081, %v4092, %v4094
      %v4096 = vshll.u32 %v4056, 8
      %v4097 = vand.u32 %v4096, 65535
      %v4098 = vshrl.u32 %v4096, 16
      %v4099 = vand.u32 %v4095, 65535
      %v4100 = vshrl.u32 %v4095, 16
      %v4101 = vmul.u32 %v4097, %v4099
      %v4102 = vmul.u32 %v4097, %v4100
      %v4103 = vmul.u32 %v4098, %v4099
      %v4104 = vmul.u32 %v4098, %v4100
      %v4105 = vshll.u32 %v4102, 16
      %v4106 = vshrl.u32 %v4102, 16
      %v4107 = vshll.u32 %v4103, 16
      %v4108 = vshrl.u32 %v4103, 16
      %vm4109 = vc.u32 %v4101, %v4105
      %v4110 = vsel %vm4109, 1, 0
      %v4111 = vadd.s32 %v4101, %v4105
      %v4112 = vadd.s32 %v4104, %v4110
      %vm4113 = vc.u32 %v4111, %v4107
      %v4114 = vsel %vm4113, 1, 0
      %v4115 = vadd.s32 %v4111, %v4107
      %v4116 = vadd.s32 %v4112, %v4114
      %v4117 = vadd.s32 %v4116, %v4106
      %v4118 = vadd.s32 %v4117, %v4108
      %v4119 = vand.u32 %v4096, 65535
      %v4120 = vshrl.u32 %v4096, 16
      %v4121 = vand.u32 %v4091, 65535
      %v4122 = vshrl.u32 %v4091, 16
      %v4123 = vmul.u32 %v4119, %v4121
      %v4124 = vmul.u32 %v4119, %v4122
      %v4125 = vmul.u32 %v4120, %v4121
      %v4126 = vmul.u32 %v4120, %v4122
      %v4127 = vshll.u32 %v4124, 16
      %v4128 = vshrl.u32 %v4124, 16
      %v4129 = vshll.u32 %v4125, 16
      %v4130 = vshrl.u32 %v4125, 16
      %vm4131 = vc.u32 %v4123, %v4127
      %v4132 = vsel %vm4131, 1, 0
      %v4133 = vadd.s32 %v4123, %v4127
      %v4134 = vadd.s32 %v4126, %v4132
      %vm4135 = vc.u32 %v4133, %v4129
      %v4136 = vsel %vm4135, 1, 0
      %v4137 = vadd.s32 %v4133, %v4129
      %v4138 = vadd.s32 %v4134, %v4136
      %v4139 = vadd.s32 %v4138, %v4128
      %v4140 = vadd.s32 %v4139, %v4130
      %v4141 = vmul.u32 %v4096, %v4087
      %v4142 = vadd.s32 %v4118, %v4137
      %vm4143 = vc.u32 %v4118, %v4137
      %v4144 = vadd.s32 %v4140, 1
      %v4145 = vsel %vm4143, %v4144, %v4140
      %v4146 = vadd.s32 %v4141, %v4145
      %v4147 = vadd.s32 %v4146, 536870912
      %v4148 = vshrl.u32 %v4147, 30
      %v4149 = vshll.u32 %v4148, 30
      %v4150 = vsub.s32 %v4146, %v4149
      %vm4151 = vcmp.lt.s32.totalorder %v4150, 0
      %v4152 = vsub.s32 0, %v4150
      %v4153 = vsel %vm4151, %v4152, %v4150
      %v4154 = vclz %v4153
      %v4155 = vsub.s32 %v4154, 2
      %vm4156 = vcmp.gt.s32.totalorder 0, %v4155
      %v4157 = vsel %vm4156, 0, %v4155
      %v4158 = vsub.s32 32, %v4157
      %v4159 = vshll.u32 %v4150, %v4157
      %v4160 = vshrl.u32 %v4142, %v4158
      %v4161 = vor.u32 %v4159, %v4160
      %v4162 = vsub.s32 4294967266, %v4157
      %v4163 = vadd.s32 %v4162, 127
      %v4164 = vshll.u32 %v4163, 23
      %v4165 = vor.u32 4788187, %v4164
      %v4166 = vand.u32 2147483647, %v4165
      %v4168 = vcvt.s32.f32 %v4161
      %v4169 = vmul.f32 %v4168, %v4166
      %v4170 = vxor.u32 %v4169, 2147483648
      %v4171 = vsel %vm4050, %v4170, %v4169
      %v4172 = vsub.s32 4, %v4148
      %v4173 = vsel %vm4050, %v4172, %v4148
      %v4174 = vsel %vm4049, %v781, %v4171
      %v4175 = vsel %vm4049, 0, %v4173
      %v4176 = vmul.f32 %v4174, %v4174
      %v4177 = vmul.f32 %v4176, -0.001358992
      %v4178 = vadd.f32 %v4177, 0.041655596
      %v4179 = vmul.f32 %v4176, %v4178
      %v4180 = vadd.f32 %v4179, -0.4999988
      %v4181 = vmul.f32 %v4176, %v4180
      %v4182 = vadd.f32 1.0, %v4181
      %v4183 = vmul.f32 %v4174, %v4174
      %v4184 = vmul.f32 %v4183, -0.00019511016
      %v4185 = vadd.f32 %v4184, 0.008332121
      %v4186 = vmul.f32 %v4183, %v4185
      %v4187 = vadd.f32 %v4186, -0.16666654
      %v4188 = vmul.f32 %v4183, %v4187
      %v4189 = vadd.f32 %v4188, 1.0
      %v4190 = vmul.f32 %v4189, %v4174
      %vm4191 = vweird.f32 %v781
      %v4192 = vadd.s32 %v4175, 3
      %v4193 = vand.u32 %v4192, 3
      %vm4194 = vcmp.lt.s32.totalorder %v4193, 2
      %vm4195 = vcmp.eq.s32.totalorder %v4193, 0
      %v4196 = vxor.u32 %v4190, 2147483648
      %v4197 = vsel %vm4195, %v4182, %v4196
      %vm4198 = vcmp.eq.s32.totalorder %v4193, 2
      %v4199 = vxor.u32 %v4182, 2147483648
      %v4200 = vsel %vm4198, %v4199, %v4190
      %v4201 = vsel %vm4194, %v4197, %v4200
      %v4202 = vsel %vm4191, nan, %v4201
      %v4203 = vand.u32 2147483647, %v782
      %vm4204 = vcmp.le.f32.partialorder %v4203, 0.7853982
      %vm4205 = vcmp.lt.s32.totalorder %v782, 0
      %v4206 = vand.u32 %v782, 2139095040
      %v4207 = vshrl.u32 %v4206, 23
      %v4208 = vsub.s32 %v4207, 127
      %v4209 = vand.u32 2147483647, %v782
      %v4210 = vand.u32 %v4209, 8388607
      %v4211 = vor.u32 %v4210, 8388608
      %v4212 = vsub.s32 0, %v4211
      %v4213 = vadd.s32 %v4208, 1
      %vm4214 = vcmp.gt.s32.totalorder %v4213, 0
      %v4215 = vsel %vm4214, %v4213, 0
      %v4216 = vshrl.u32 %v4215, 5
      %v4217 = vand.u32 %v4215, 31
      %v4218 = vsub.s32 32, %v4217
      %v4219 = vshrl.u32 683565275, %v4218
      %v4220 = vshll.u32 683565275, %v4217
      %v4221 = vshrl.u32 2475754826, %v4218
      %v4222 = vor.u32 %v4220, %v4221
      %v4223 = vshll.u32 2475754826, %v4217
      %v4224 = vshrl.u32 2131351028, %v4218
      %v4225 = vor.u32 %v4223, %v4224
      %v4226 = vshll.u32 2131351028, %v4217
      %v4227 = vshrl.u32 2102212464, %v4218
      %v4228 = vor.u32 %v4226, %v4227
      %v4229 = vshll.u32 2102212464, %v4217
      %v4230 = vshrl.u32 920167782, %v4218
      %v4231 = vor.u32 %v4229, %v4230
      %v4232 = vshll.u32 920167782, %v4217
      %v4233 = vshrl.u32 1326507024, %v4218
      %v4234 = vor.u32 %v4232, %v4233
      %vm4235 = vcmp.lt.s32.totalorder %v4216, 1
      %vm4236 = vcmp.lt.s32.totalorder %v4216, 2
      %vm4237 = vcmp.lt.s32.totalorder %v4216, 3
      %vm4238 = vcmp.lt.s32.totalorder %v4216, 4
      %v4239 = vsel %vm4235, %v4219, %v4222
      %v4240 = vsel %vm4238, %v4228, 2102212464
      %v4241 = vsel %vm4237, %v4225, %v4240
      %v4242 = vsel %vm4236, %v4239, %v4241
      %v4243 = vsel %vm4235, %v4222, %v4225
      %v4244 = vsel %vm4238, %v4231, 920167782
      %v4245 = vsel %vm4237, %v4228, %v4244
      %v4246 = vsel %vm4236, %v4243, %v4245
      %v4247 = vsel %vm4235, %v4225, %v4228
      %v4248 = vsel %vm4238, %v4234, 1326507024
      %v4249 = vsel %vm4237, %v4231, %v4248
      %v4250 = vsel %vm4236, %v4247, %v4249
      %v4251 = vshll.u32 %v4211, 8
      %v4252 = vand.u32 %v4251, 65535
      %v4253 = vshrl.u32 %v4251, 16
      %v4254 = vand.u32 %v4250, 65535
      %v4255 = vshrl.u32 %v4250, 16
      %v4256 = vmul.u32 %v4252, %v4254
      %v4257 = vmul.u32 %v4252, %v4255
      %v4258 = vmul.u32 %v4253, %v4254
      %v4259 = vmul.u32 %v4253, %v4255
      %v4260 = vshll.u32 %v4257, 16
      %v4261 = vshrl.u32 %v4257, 16
      %v4262 = vshll.u32 %v4258, 16
      %v4263 = vshrl.u32 %v4258, 16
      %vm4264 = vc.u32 %v4256, %v4260
      %v4265 = vsel %vm4264, 1, 0
      %v4266 = vadd.s32 %v4256, %v4260
      %v4267 = vadd.s32 %v4259, %v4265
      %vm4268 = vc.u32 %v4266, %v4262
      %v4269 = vsel %vm4268, 1, 0
      %v4270 = vadd.s32 %v4266, %v4262
      %v4271 = vadd.s32 %v4267, %v4269
      %v4272 = vadd.s32 %v4271, %v4261
      %v4273 = vadd.s32 %v4272, %v4263
      %v4274 = vand.u32 %v4251, 65535
      %v4275 = vshrl.u32 %v4251, 16
      %v4276 = vand.u32 %v4246, 65535
      %v4277 = vshrl.u32 %v4246, 16
      %v4278 = vmul.u32 %v4274, %v4276
      %v4279 = vmul.u32 %v4274, %v4277
      %v4280 = vmul.u32 %v4275, %v4276
      %v4281 = vmul.u32 %v4275, %v4277
      %v4282 = vshll.u32 %v4279, 16
      %v4283 = vshrl.u32 %v4279, 16
      %v4284 = vshll.u32 %v4280, 16
      %v4285 = vshrl.u32 %v4280, 16
      %vm4286 = vc.u32 %v4278, %v4282
      %v4287 = vsel %vm4286, 1, 0
      %v4288 = vadd.s32 %v4278, %v4282
      %v4289 = vadd.s32 %v4281, %v4287
      %vm4290 = vc.u32 %v4288, %v4284
      %v4291 = vsel %vm4290, 1, 0
      %v4292 = vadd.s32 %v4288, %v4284
      %v4293 = vadd.s32 %v4289, %v4291
      %v4294 = vadd.s32 %v4293, %v4283
      %v4295 = vadd.s32 %v4294, %v4285
      %v4296 = vmul.u32 %v4251, %v4242
      %v4297 = vadd.s32 %v4273, %v4292
      %vm4298 = vc.u32 %v4273, %v4292
      %v4299 = vadd.s32 %v4295, 1
      %v4300 = vsel %vm4298, %v4299, %v4295
      %v4301 = vadd.s32 %v4296, %v4300
      %v4302 = vadd.s32 %v4301, 536870912
      %v4303 = vshrl.u32 %v4302, 30
      %v4304 = vshll.u32 %v4303, 30
      %v4305 = vsub.s32 %v4301, %v4304
      %vm4306 = vcmp.lt.s32.totalorder %v4305, 0
      %v4307 = vsub.s32 0, %v4305
      %v4308 = vsel %vm4306, %v4307, %v4305
      %v4309 = vclz %v4308
      %v4310 = vsub.s32 %v4309, 2
      %vm4311 = vcmp.gt.s32.totalorder 0, %v4310
      %v4312 = vsel %vm4311, 0, %v4310
      %v4313 = vsub.s32 32, %v4312
      %v4314 = vshll.u32 %v4305, %v4312
      %v4315 = vshrl.u32 %v4297, %v4313
      %v4316 = vor.u32 %v4314, %v4315
      %v4317 = vsub.s32 4294967266, %v4312
      %v4318 = vadd.s32 %v4317, 127
      %v4319 = vshll.u32 %v4318, 23
      %v4320 = vor.u32 4788187, %v4319
      %v4321 = vand.u32 2147483647, %v4320
      %v4323 = vcvt.s32.f32 %v4316
      %v4324 = vmul.f32 %v4323, %v4321
      %v4325 = vxor.u32 %v4324, 2147483648
      %v4326 = vsel %vm4205, %v4325, %v4324
      %v4327 = vsub.s32 4, %v4303
      %v4328 = vsel %vm4205, %v4327, %v4303
      %v4329 = vsel %vm4204, %v782, %v4326
      %v4330 = vsel %vm4204, 0, %v4328
      %v4331 = vmul.f32 %v4329, %v4329
      %v4332 = vmul.f32 %v4331, -0.001358992
      %v4333 = vadd.f32 %v4332, 0.041655596
      %v4334 = vmul.f32 %v4331, %v4333
      %v4335 = vadd.f32 %v4334, -0.4999988
      %v4336 = vmul.f32 %v4331, %v4335
      %v4337 = vadd.f32 1.0, %v4336
      %v4338 = vmul.f32 %v4329, %v4329
      %v4339 = vmul.f32 %v4338, -0.00019511016
      %v4340 = vadd.f32 %v4339, 0.008332121
      %v4341 = vmul.f32 %v4338, %v4340
      %v4342 = vadd.f32 %v4341, -0.16666654
      %v4343 = vmul.f32 %v4338, %v4342
      %v4344 = vadd.f32 %v4343, 1.0
      %v4345 = vmul.f32 %v4344, %v4329
      %vm4346 = vweird.f32 %v782
      %v4347 = vadd.s32 %v4330, 3
      %v4348 = vand.u32 %v4347, 3
      %vm4349 = vcmp.lt.s32.totalorder %v4348, 2
      %vm4350 = vcmp.eq.s32.totalorder %v4348, 0
      %v4351 = vxor.u32 %v4345, 2147483648
      %v4352 = vsel %vm4350, %v4337, %v4351
      %vm4353 = vcmp.eq.s32.totalorder %v4348, 2
      %v4354 = vxor.u32 %v4337, 2147483648
      %v4355 = vsel %vm4353, %v4354, %v4345
      %v4356 = vsel %vm4349, %v4352, %v4355
      %v4357 = vsel %vm4346, nan, %v4356
      %v4358 = vand.u32 2147483647, %v783
      %vm4359 = vcmp.le.f32.partialorder %v4358, 0.7853982
      %vm4360 = vcmp.lt.s32.totalorder %v783, 0
      %v4361 = vand.u32 %v783, 2139095040
      %v4362 = vshrl.u32 %v4361, 23
      %v4363 = vsub.s32 %v4362, 127
      %v4364 = vand.u32 2147483647, %v783
      %v4365 = vand.u32 %v4364, 8388607
      %v4366 = vor.u32 %v4365, 8388608
      %v4367 = vsub.s32 0, %v4366
      %v4368 = vadd.s32 %v4363, 1
      %vm4369 = vcmp.gt.s32.totalorder %v4368, 0
      %v4370 = vsel %vm4369, %v4368, 0
      %v4371 = vshrl.u32 %v4370, 5
      %v4372 = vand.u32 %v4370, 31
      %v4373 = vsub.s32 32, %v4372
      %v4374 = vshrl.u32 683565275, %v4373
      %v4375 = vshll.u32 683565275, %v4372
      %v4376 = vshrl.u32 2475754826, %v4373
      %v4377 = vor.u32 %v4375, %v4376
      %v4378 = vshll.u32 2475754826, %v4372
      %v4379 = vshrl.u32 2131351028, %v4373
      %v4380 = vor.u32 %v4378, %v4379
      %v4381 = vshll.u32 2131351028, %v4372
      %v4382 = vshrl.u32 2102212464, %v4373
      %v4383 = vor.u32 %v4381, %v4382
      %v4384 = vshll.u32 2102212464, %v4372
      %v4385 = vshrl.u32 920167782, %v4373
      %v4386 = vor.u32 %v4384, %v4385
      %v4387 = vshll.u32 920167782, %v4372
      %v4388 = vshrl.u32 1326507024, %v4373
      %v4389 = vor.u32 %v4387, %v4388
      %vm4390 = vcmp.lt.s32.totalorder %v4371, 1
      %vm4391 = vcmp.lt.s32.totalorder %v4371, 2
      %vm4392 = vcmp.lt.s32.totalorder %v4371, 3
      %vm4393 = vcmp.lt.s32.totalorder %v4371, 4
      %v4394 = vsel %vm4390, %v4374, %v4377
      %v4395 = vsel %vm4393, %v4383, 2102212464
      %v4396 = vsel %vm4392, %v4380, %v4395
      %v4397 = vsel %vm4391, %v4394, %v4396
      %v4398 = vsel %vm4390, %v4377, %v4380
      %v4399 = vsel %vm4393, %v4386, 920167782
      %v4400 = vsel %vm4392, %v4383, %v4399
      %v4401 = vsel %vm4391, %v4398, %v4400
      %v4402 = vsel %vm4390, %v4380, %v4383
      %v4403 = vsel %vm4393, %v4389, 1326507024
      %v4404 = vsel %vm4392, %v4386, %v4403
      %v4405 = vsel %vm4391, %v4402, %v4404
      %v4406 = vshll.u32 %v4366, 8
      %v4407 = vand.u32 %v4406, 65535
      %v4408 = vshrl.u32 %v4406, 16
      %v4409 = vand.u32 %v4405, 65535
      %v4410 = vshrl.u32 %v4405, 16
      %v4411 = vmul.u32 %v4407, %v4409
      %v4412 = vmul.u32 %v4407, %v4410
      %v4413 = vmul.u32 %v4408, %v4409
      %v4414 = vmul.u32 %v4408, %v4410
      %v4415 = vshll.u32 %v4412, 16
      %v4416 = vshrl.u32 %v4412, 16
      %v4417 = vshll.u32 %v4413, 16
      %v4418 = vshrl.u32 %v4413, 16
      %vm4419 = vc.u32 %v4411, %v4415
      %v4420 = vsel %vm4419, 1, 0
      %v4421 = vadd.s32 %v4411, %v4415
      %v4422 = vadd.s32 %v4414, %v4420
      %vm4423 = vc.u32 %v4421, %v4417
      %v4424 = vsel %vm4423, 1, 0
      %v4425 = vadd.s32 %v4421, %v4417
      %v4426 = vadd.s32 %v4422, %v4424
      %v4427 = vadd.s32 %v4426, %v4416
      %v4428 = vadd.s32 %v4427, %v4418
      %v4429 = vand.u32 %v4406, 65535
      %v4430 = vshrl.u32 %v4406, 16
      %v4431 = vand.u32 %v4401, 65535
      %v4432 = vshrl.u32 %v4401, 16
      %v4433 = vmul.u32 %v4429, %v4431
      %v4434 = vmul.u32 %v4429, %v4432
      %v4435 = vmul.u32 %v4430, %v4431
      %v4436 = vmul.u32 %v4430, %v4432
      %v4437 = vshll.u32 %v4434, 16
      %v4438 = vshrl.u32 %v4434, 16
      %v4439 = vshll.u32 %v4435, 16
      %v4440 = vshrl.u32 %v4435, 16
      %vm4441 = vc.u32 %v4433, %v4437
      %v4442 = vsel %vm4441, 1, 0
      %v4443 = vadd.s32 %v4433, %v4437
      %v4444 = vadd.s32 %v4436, %v4442
      %vm4445 = vc.u32 %v4443, %v4439
      %v4446 = vsel %vm4445, 1, 0
      %v4447 = vadd.s32 %v4443, %v4439
      %v4448 = vadd.s32 %v4444, %v4446
      %v4449 = vadd.s32 %v4448, %v4438
      %v4450 = vadd.s32 %v4449, %v4440
      %v4451 = vmul.u32 %v4406, %v4397
      %v4452 = vadd.s32 %v4428, %v4447
      %vm4453 = vc.u32 %v4428, %v4447
      %v4454 = vadd.s32 %v4450, 1
      %v4455 = vsel %vm4453, %v4454, %v4450
      %v4456 = vadd.s32 %v4451, %v4455
      %v4457 = vadd.s32 %v4456, 536870912
      %v4458 = vshrl.u32 %v4457, 30
      %v4459 = vshll.u32 %v4458, 30
      %v4460 = vsub.s32 %v4456, %v4459
      %vm4461 = vcmp.lt.s32.totalorder %v4460, 0
      %v4462 = vsub.s32 0, %v4460
      %v4463 = vsel %vm4461, %v4462, %v4460
      %v4464 = vclz %v4463
      %v4465 = vsub.s32 %v4464, 2
      %vm4466 = vcmp.gt.s32.totalorder 0, %v4465
      %v4467 = vsel %vm4466, 0, %v4465
      %v4468 = vsub.s32 32, %v4467
      %v4469 = vshll.u32 %v4460, %v4467
      %v4470 = vshrl.u32 %v4452, %v4468
      %v4471 = vor.u32 %v4469, %v4470
      %v4472 = vsub.s32 4294967266, %v4467
      %v4473 = vadd.s32 %v4472, 127
      %v4474 = vshll.u32 %v4473, 23
      %v4475 = vor.u32 4788187, %v4474
      %v4476 = vand.u32 2147483647, %v4475
      %v4478 = vcvt.s32.f32 %v4471
      %v4479 = vmul.f32 %v4478, %v4476
      %v4480 = vxor.u32 %v4479, 2147483648
      %v4481 = vsel %vm4360, %v4480, %v4479
      %v4482 = vsub.s32 4, %v4458
      %v4483 = vsel %vm4360, %v4482, %v4458
      %v4484 = vsel %vm4359, %v783, %v4481
      %v4485 = vsel %vm4359, 0, %v4483
      %v4486 = vmul.f32 %v4484, %v4484
      %v4487 = vmul.f32 %v4486, -0.001358992
      %v4488 = vadd.f32 %v4487, 0.041655596
      %v4489 = vmul.f32 %v4486, %v4488
      %v4490 = vadd.f32 %v4489, -0.4999988
      %v4491 = vmul.f32 %v4486, %v4490
      %v4492 = vadd.f32 1.0, %v4491
      %v4493 = vmul.f32 %v4484, %v4484
      %v4494 = vmul.f32 %v4493, -0.00019511016
      %v4495 = vadd.f32 %v4494, 0.008332121
      %v4496 = vmul.f32 %v4493, %v4495
      %v4497 = vadd.f32 %v4496, -0.16666654
      %v4498 = vmul.f32 %v4493, %v4497
      %v4499 = vadd.f32 %v4498, 1.0
      %v4500 = vmul.f32 %v4499, %v4484
      %vm4501 = vweird.f32 %v783
      %v4502 = vadd.s32 %v4485, 3
      %v4503 = vand.u32 %v4502, 3
      %vm4504 = vcmp.lt.s32.totalorder %v4503, 2
      %vm4505 = vcmp.eq.s32.totalorder %v4503, 0
      %v4506 = vxor.u32 %v4500, 2147483648
      %v4507 = vsel %vm4505, %v4492, %v4506
      %vm4508 = vcmp.eq.s32.totalorder %v4503, 2
      %v4509 = vxor.u32 %v4492, 2147483648
      %v4510 = vsel %vm4508, %v4509, %v4500
      %v4511 = vsel %vm4504, %v4507, %v4510
      %v4512 = vsel %vm4501, nan, %v4511
      %v4513 = vand.u32 2147483647, %v784
      %vm4514 = vcmp.le.f32.partialorder %v4513, 0.7853982
      %vm4515 = vcmp.lt.s32.totalorder %v784, 0
      %v4516 = vand.u32 %v784, 2139095040
      %v4517 = vshrl.u32 %v4516, 23
      %v4518 = vsub.s32 %v4517, 127
      %v4519 = vand.u32 2147483647, %v784
      %v4520 = vand.u32 %v4519, 8388607
      %v4521 = vor.u32 %v4520, 8388608
      %v4522 = vsub.s32 0, %v4521
      %v4523 = vadd.s32 %v4518, 1
      %vm4524 = vcmp.gt.s32.totalorder %v4523, 0
      %v4525 = vsel %vm4524, %v4523, 0
      %v4526 = vshrl.u32 %v4525, 5
      %v4527 = vand.u32 %v4525, 31
      %v4528 = vsub.s32 32, %v4527
      %v4529 = vshrl.u32 683565275, %v4528
      %v4530 = vshll.u32 683565275, %v4527
      %v4531 = vshrl.u32 2475754826, %v4528
      %v4532 = vor.u32 %v4530, %v4531
      %v4533 = vshll.u32 2475754826, %v4527
      %v4534 = vshrl.u32 2131351028, %v4528
      %v4535 = vor.u32 %v4533, %v4534
      %v4536 = vshll.u32 2131351028, %v4527
      %v4537 = vshrl.u32 2102212464, %v4528
      %v4538 = vor.u32 %v4536, %v4537
      %v4539 = vshll.u32 2102212464, %v4527
      %v4540 = vshrl.u32 920167782, %v4528
      %v4541 = vor.u32 %v4539, %v4540
      %v4542 = vshll.u32 920167782, %v4527
      %v4543 = vshrl.u32 1326507024, %v4528
      %v4544 = vor.u32 %v4542, %v4543
      %vm4545 = vcmp.lt.s32.totalorder %v4526, 1
      %vm4546 = vcmp.lt.s32.totalorder %v4526, 2
      %vm4547 = vcmp.lt.s32.totalorder %v4526, 3
      %vm4548 = vcmp.lt.s32.totalorder %v4526, 4
      %v4549 = vsel %vm4545, %v4529, %v4532
      %v4550 = vsel %vm4548, %v4538, 2102212464
      %v4551 = vsel %vm4547, %v4535, %v4550
      %v4552 = vsel %vm4546, %v4549, %v4551
      %v4553 = vsel %vm4545, %v4532, %v4535
      %v4554 = vsel %vm4548, %v4541, 920167782
      %v4555 = vsel %vm4547, %v4538, %v4554
      %v4556 = vsel %vm4546, %v4553, %v4555
      %v4557 = vsel %vm4545, %v4535, %v4538
      %v4558 = vsel %vm4548, %v4544, 1326507024
      %v4559 = vsel %vm4547, %v4541, %v4558
      %v4560 = vsel %vm4546, %v4557, %v4559
      %v4561 = vshll.u32 %v4521, 8
      %v4562 = vand.u32 %v4561, 65535
      %v4563 = vshrl.u32 %v4561, 16
      %v4564 = vand.u32 %v4560, 65535
      %v4565 = vshrl.u32 %v4560, 16
      %v4566 = vmul.u32 %v4562, %v4564
      %v4567 = vmul.u32 %v4562, %v4565
      %v4568 = vmul.u32 %v4563, %v4564
      %v4569 = vmul.u32 %v4563, %v4565
      %v4570 = vshll.u32 %v4567, 16
      %v4571 = vshrl.u32 %v4567, 16
      %v4572 = vshll.u32 %v4568, 16
      %v4573 = vshrl.u32 %v4568, 16
      %vm4574 = vc.u32 %v4566, %v4570
      %v4575 = vsel %vm4574, 1, 0
      %v4576 = vadd.s32 %v4566, %v4570
      %v4577 = vadd.s32 %v4569, %v4575
      %vm4578 = vc.u32 %v4576, %v4572
      %v4579 = vsel %vm4578, 1, 0
      %v4580 = vadd.s32 %v4576, %v4572
      %v4581 = vadd.s32 %v4577, %v4579
      %v4582 = vadd.s32 %v4581, %v4571
      %v4583 = vadd.s32 %v4582, %v4573
      %v4584 = vand.u32 %v4561, 65535
      %v4585 = vshrl.u32 %v4561, 16
      %v4586 = vand.u32 %v4556, 65535
      %v4587 = vshrl.u32 %v4556, 16
      %v4588 = vmul.u32 %v4584, %v4586
      %v4589 = vmul.u32 %v4584, %v4587
      %v4590 = vmul.u32 %v4585, %v4586
      %v4591 = vmul.u32 %v4585, %v4587
      %v4592 = vshll.u32 %v4589, 16
      %v4593 = vshrl.u32 %v4589, 16
      %v4594 = vshll.u32 %v4590, 16
      %v4595 = vshrl.u32 %v4590, 16
      %vm4596 = vc.u32 %v4588, %v4592
      %v4597 = vsel %vm4596, 1, 0
      %v4598 = vadd.s32 %v4588, %v4592
      %v4599 = vadd.s32 %v4591, %v4597
      %vm4600 = vc.u32 %v4598, %v4594
      %v4601 = vsel %vm4600, 1, 0
      %v4602 = vadd.s32 %v4598, %v4594
      %v4603 = vadd.s32 %v4599, %v4601
      %v4604 = vadd.s32 %v4603, %v4593
      %v4605 = vadd.s32 %v4604, %v4595
      %v4606 = vmul.u32 %v4561, %v4552
      %v4607 = vadd.s32 %v4583, %v4602
      %vm4608 = vc.u32 %v4583, %v4602
      %v4609 = vadd.s32 %v4605, 1
      %v4610 = vsel %vm4608, %v4609, %v4605
      %v4611 = vadd.s32 %v4606, %v4610
      %v4612 = vadd.s32 %v4611, 536870912
      %v4613 = vshrl.u32 %v4612, 30
      %v4614 = vshll.u32 %v4613, 30
      %v4615 = vsub.s32 %v4611, %v4614
      %vm4616 = vcmp.lt.s32.totalorder %v4615, 0
      %v4617 = vsub.s32 0, %v4615
      %v4618 = vsel %vm4616, %v4617, %v4615
      %v4619 = vclz %v4618
      %v4620 = vsub.s32 %v4619, 2
      %vm4621 = vcmp.gt.s32.totalorder 0, %v4620
      %v4622 = vsel %vm4621, 0, %v4620
      %v4623 = vsub.s32 32, %v4622
      %v4624 = vshll.u32 %v4615, %v4622
      %v4625 = vshrl.u32 %v4607, %v4623
      %v4626 = vor.u32 %v4624, %v4625
      %v4627 = vsub.s32 4294967266, %v4622
      %v4628 = vadd.s32 %v4627, 127
      %v4629 = vshll.u32 %v4628, 23
      %v4630 = vor.u32 4788187, %v4629
      %v4631 = vand.u32 2147483647, %v4630
      %v4633 = vcvt.s32.f32 %v4626
      %v4634 = vmul.f32 %v4633, %v4631
      %v4635 = vxor.u32 %v4634, 2147483648
      %v4636 = vsel %vm4515, %v4635, %v4634
      %v4637 = vsub.s32 4, %v4613
      %v4638 = vsel %vm4515, %v4637, %v4613
      %v4639 = vsel %vm4514, %v784, %v4636
      %v4640 = vsel %vm4514, 0, %v4638
      %v4641 = vmul.f32 %v4639, %v4639
      %v4642 = vmul.f32 %v4641, -0.001358992
      %v4643 = vadd.f32 %v4642, 0.041655596
      %v4644 = vmul.f32 %v4641, %v4643
      %v4645 = vadd.f32 %v4644, -0.4999988
      %v4646 = vmul.f32 %v4641, %v4645
      %v4647 = vadd.f32 1.0, %v4646
      %v4648 = vmul.f32 %v4639, %v4639
      %v4649 = vmul.f32 %v4648, -0.00019511016
      %v4650 = vadd.f32 %v4649, 0.008332121
      %v4651 = vmul.f32 %v4648, %v4650
      %v4652 = vadd.f32 %v4651, -0.16666654
      %v4653 = vmul.f32 %v4648, %v4652
      %v4654 = vadd.f32 %v4653, 1.0
      %v4655 = vmul.f32 %v4654, %v4639
      %vm4656 = vweird.f32 %v784
      %v4657 = vadd.s32 %v4640, 3
      %v4658 = vand.u32 %v4657, 3
      %vm4659 = vcmp.lt.s32.totalorder %v4658, 2
      %vm4660 = vcmp.eq.s32.totalorder %v4658, 0
      %v4661 = vxor.u32 %v4655, 2147483648
      %v4662 = vsel %vm4660, %v4647, %v4661
      %vm4663 = vcmp.eq.s32.totalorder %v4658, 2
      %v4664 = vxor.u32 %v4647, 2147483648
      %v4665 = vsel %vm4663, %v4664, %v4655
      %v4666 = vsel %vm4659, %v4662, %v4665
      %v4667 = vsel %vm4656, nan, %v4666
      %v4668 = vand.u32 2147483647, %v785
      %vm4669 = vcmp.le.f32.partialorder %v4668, 0.7853982
      %vm4670 = vcmp.lt.s32.totalorder %v785, 0
      %v4671 = vand.u32 %v785, 2139095040
      %v4672 = vshrl.u32 %v4671, 23
      %v4673 = vsub.s32 %v4672, 127
      %v4674 = vand.u32 2147483647, %v785
      %v4675 = vand.u32 %v4674, 8388607
      %v4676 = vor.u32 %v4675, 8388608
      %v4677 = vsub.s32 0, %v4676
      %v4678 = vadd.s32 %v4673, 1
      %vm4679 = vcmp.gt.s32.totalorder %v4678, 0
      %v4680 = vsel %vm4679, %v4678, 0
      %v4681 = vshrl.u32 %v4680, 5
      %v4682 = vand.u32 %v4680, 31
      %v4683 = vsub.s32 32, %v4682
      %v4684 = vshrl.u32 683565275, %v4683
      %v4685 = vshll.u32 683565275, %v4682
      %v4686 = vshrl.u32 2475754826, %v4683
      %v4687 = vor.u32 %v4685, %v4686
      %v4688 = vshll.u32 2475754826, %v4682
      %v4689 = vshrl.u32 2131351028, %v4683
      %v4690 = vor.u32 %v4688, %v4689
      %v4691 = vshll.u32 2131351028, %v4682
      %v4692 = vshrl.u32 2102212464, %v4683
      %v4693 = vor.u32 %v4691, %v4692
      %v4694 = vshll.u32 2102212464, %v4682
      %v4695 = vshrl.u32 920167782, %v4683
      %v4696 = vor.u32 %v4694, %v4695
      %v4697 = vshll.u32 920167782, %v4682
      %v4698 = vshrl.u32 1326507024, %v4683
      %v4699 = vor.u32 %v4697, %v4698
      %vm4700 = vcmp.lt.s32.totalorder %v4681, 1
      %vm4701 = vcmp.lt.s32.totalorder %v4681, 2
      %vm4702 = vcmp.lt.s32.totalorder %v4681, 3
      %vm4703 = vcmp.lt.s32.totalorder %v4681, 4
      %v4704 = vsel %vm4700, %v4684, %v4687
      %v4705 = vsel %vm4703, %v4693, 2102212464
      %v4706 = vsel %vm4702, %v4690, %v4705
      %v4707 = vsel %vm4701, %v4704, %v4706
      %v4708 = vsel %vm4700, %v4687, %v4690
      %v4709 = vsel %vm4703, %v4696, 920167782
      %v4710 = vsel %vm4702, %v4693, %v4709
      %v4711 = vsel %vm4701, %v4708, %v4710
      %v4712 = vsel %vm4700, %v4690, %v4693
      %v4713 = vsel %vm4703, %v4699, 1326507024
      %v4714 = vsel %vm4702, %v4696, %v4713
      %v4715 = vsel %vm4701, %v4712, %v4714
      %v4716 = vshll.u32 %v4676, 8
      %v4717 = vand.u32 %v4716, 65535
      %v4718 = vshrl.u32 %v4716, 16
      %v4719 = vand.u32 %v4715, 65535
      %v4720 = vshrl.u32 %v4715, 16
      %v4721 = vmul.u32 %v4717, %v4719
      %v4722 = vmul.u32 %v4717, %v4720
      %v4723 = vmul.u32 %v4718, %v4719
      %v4724 = vmul.u32 %v4718, %v4720
      %v4725 = vshll.u32 %v4722, 16
      %v4726 = vshrl.u32 %v4722, 16
      %v4727 = vshll.u32 %v4723, 16
      %v4728 = vshrl.u32 %v4723, 16
      %vm4729 = vc.u32 %v4721, %v4725
      %v4730 = vsel %vm4729, 1, 0
      %v4731 = vadd.s32 %v4721, %v4725
      %v4732 = vadd.s32 %v4724, %v4730
      %vm4733 = vc.u32 %v4731, %v4727
      %v4734 = vsel %vm4733, 1, 0
      %v4735 = vadd.s32 %v4731, %v4727
      %v4736 = vadd.s32 %v4732, %v4734
      %v4737 = vadd.s32 %v4736, %v4726
      %v4738 = vadd.s32 %v4737, %v4728
      %v4739 = vand.u32 %v4716, 65535
      %v4740 = vshrl.u32 %v4716, 16
      %v4741 = vand.u32 %v4711, 65535
      %v4742 = vshrl.u32 %v4711, 16
      %v4743 = vmul.u32 %v4739, %v4741
      %v4744 = vmul.u32 %v4739, %v4742
      %v4745 = vmul.u32 %v4740, %v4741
      %v4746 = vmul.u32 %v4740, %v4742
      %v4747 = vshll.u32 %v4744, 16
      %v4748 = vshrl.u32 %v4744, 16
      %v4749 = vshll.u32 %v4745, 16
      %v4750 = vshrl.u32 %v4745, 16
      %vm4751 = vc.u32 %v4743, %v4747
      %v4752 = vsel %vm4751, 1, 0
      %v4753 = vadd.s32 %v4743, %v4747
      %v4754 = vadd.s32 %v4746, %v4752
      %vm4755 = vc.u32 %v4753, %v4749
      %v4756 = vsel %vm4755, 1, 0
      %v4757 = vadd.s32 %v4753, %v4749
      %v4758 = vadd.s32 %v4754, %v4756
      %v4759 = vadd.s32 %v4758, %v4748
      %v4760 = vadd.s32 %v4759, %v4750
      %v4761 = vmul.u32 %v4716, %v4707
      %v4762 = vadd.s32 %v4738, %v4757
      %vm4763 = vc.u32 %v4738, %v4757
      %v4764 = vadd.s32 %v4760, 1
      %v4765 = vsel %vm4763, %v4764, %v4760
      %v4766 = vadd.s32 %v4761, %v4765
      %v4767 = vadd.s32 %v4766, 536870912
      %v4768 = vshrl.u32 %v4767, 30
      %v4769 = vshll.u32 %v4768, 30
      %v4770 = vsub.s32 %v4766, %v4769
      %vm4771 = vcmp.lt.s32.totalorder %v4770, 0
      %v4772 = vsub.s32 0, %v4770
      %v4773 = vsel %vm4771, %v4772, %v4770
      %v4774 = vclz %v4773
      %v4775 = vsub.s32 %v4774, 2
      %vm4776 = vcmp.gt.s32.totalorder 0, %v4775
      %v4777 = vsel %vm4776, 0, %v4775
      %v4778 = vsub.s32 32, %v4777
      %v4779 = vshll.u32 %v4770, %v4777
      %v4780 = vshrl.u32 %v4762, %v4778
      %v4781 = vor.u32 %v4779, %v4780
      %v4782 = vsub.s32 4294967266, %v4777
      %v4783 = vadd.s32 %v4782, 127
      %v4784 = vshll.u32 %v4783, 23
      %v4785 = vor.u32 4788187, %v4784
      %v4786 = vand.u32 2147483647, %v4785
      %v4788 = vcvt.s32.f32 %v4781
      %v4789 = vmul.f32 %v4788, %v4786
      %v4790 = vxor.u32 %v4789, 2147483648
      %v4791 = vsel %vm4670, %v4790, %v4789
      %v4792 = vsub.s32 4, %v4768
      %v4793 = vsel %vm4670, %v4792, %v4768
      %v4794 = vsel %vm4669, %v785, %v4791
      %v4795 = vsel %vm4669, 0, %v4793
      %v4796 = vmul.f32 %v4794, %v4794
      %v4797 = vmul.f32 %v4796, -0.001358992
      %v4798 = vadd.f32 %v4797, 0.041655596
      %v4799 = vmul.f32 %v4796, %v4798
      %v4800 = vadd.f32 %v4799, -0.4999988
      %v4801 = vmul.f32 %v4796, %v4800
      %v4802 = vadd.f32 1.0, %v4801
      %v4803 = vmul.f32 %v4794, %v4794
      %v4804 = vmul.f32 %v4803, -0.00019511016
      %v4805 = vadd.f32 %v4804, 0.008332121
      %v4806 = vmul.f32 %v4803, %v4805
      %v4807 = vadd.f32 %v4806, -0.16666654
      %v4808 = vmul.f32 %v4803, %v4807
      %v4809 = vadd.f32 %v4808, 1.0
      %v4810 = vmul.f32 %v4809, %v4794
      %vm4811 = vweird.f32 %v785
      %v4812 = vadd.s32 %v4795, 3
      %v4813 = vand.u32 %v4812, 3
      %vm4814 = vcmp.lt.s32.totalorder %v4813, 2
      %vm4815 = vcmp.eq.s32.totalorder %v4813, 0
      %v4816 = vxor.u32 %v4810, 2147483648
      %v4817 = vsel %vm4815, %v4802, %v4816
      %vm4818 = vcmp.eq.s32.totalorder %v4813, 2
      %v4819 = vxor.u32 %v4802, 2147483648
      %v4820 = vsel %vm4818, %v4819, %v4810
      %v4821 = vsel %vm4814, %v4817, %v4820
      %v4822 = vsel %vm4811, nan, %v4821
      %v4823 = vand.u32 2147483647, %v786
      %vm4824 = vcmp.le.f32.partialorder %v4823, 0.7853982
      %vm4825 = vcmp.lt.s32.totalorder %v786, 0
      %v4826 = vand.u32 %v786, 2139095040
      %v4827 = vshrl.u32 %v4826, 23
      %v4828 = vsub.s32 %v4827, 127
      %v4829 = vand.u32 2147483647, %v786
      %v4830 = vand.u32 %v4829, 8388607
      %v4831 = vor.u32 %v4830, 8388608
      %v4832 = vsub.s32 0, %v4831
      %v4833 = vadd.s32 %v4828, 1
      %vm4834 = vcmp.gt.s32.totalorder %v4833, 0
      %v4835 = vsel %vm4834, %v4833, 0
      %v4836 = vshrl.u32 %v4835, 5
      %v4837 = vand.u32 %v4835, 31
      %v4838 = vsub.s32 32, %v4837
      %v4839 = vshrl.u32 683565275, %v4838
      %v4840 = vshll.u32 683565275, %v4837
      %v4841 = vshrl.u32 2475754826, %v4838
      %v4842 = vor.u32 %v4840, %v4841
      %v4843 = vshll.u32 2475754826, %v4837
      %v4844 = vshrl.u32 2131351028, %v4838
      %v4845 = vor.u32 %v4843, %v4844
      %v4846 = vshll.u32 2131351028, %v4837
      %v4847 = vshrl.u32 2102212464, %v4838
      %v4848 = vor.u32 %v4846, %v4847
      %v4849 = vshll.u32 2102212464, %v4837
      %v4850 = vshrl.u32 920167782, %v4838
      %v4851 = vor.u32 %v4849, %v4850
      %v4852 = vshll.u32 920167782, %v4837
      %v4853 = vshrl.u32 1326507024, %v4838
      %v4854 = vor.u32 %v4852, %v4853
      %vm4855 = vcmp.lt.s32.totalorder %v4836, 1
      %vm4856 = vcmp.lt.s32.totalorder %v4836, 2
      %vm4857 = vcmp.lt.s32.totalorder %v4836, 3
      %vm4858 = vcmp.lt.s32.totalorder %v4836, 4
      %v4859 = vsel %vm4855, %v4839, %v4842
      %v4860 = vsel %vm4858, %v4848, 2102212464
      %v4861 = vsel %vm4857, %v4845, %v4860
      %v4862 = vsel %vm4856, %v4859, %v4861
      %v4863 = vsel %vm4855, %v4842, %v4845
      %v4864 = vsel %vm4858, %v4851, 920167782
      %v4865 = vsel %vm4857, %v4848, %v4864
      %v4866 = vsel %vm4856, %v4863, %v4865
      %v4867 = vsel %vm4855, %v4845, %v4848
      %v4868 = vsel %vm4858, %v4854, 1326507024
      %v4869 = vsel %vm4857, %v4851, %v4868
      %v4870 = vsel %vm4856, %v4867, %v4869
      %v4871 = vshll.u32 %v4831, 8
      %v4872 = vand.u32 %v4871, 65535
      %v4873 = vshrl.u32 %v4871, 16
      %v4874 = vand.u32 %v4870, 65535
      %v4875 = vshrl.u32 %v4870, 16
      %v4876 = vmul.u32 %v4872, %v4874
      %v4877 = vmul.u32 %v4872, %v4875
      %v4878 = vmul.u32 %v4873, %v4874
      %v4879 = vmul.u32 %v4873, %v4875
      %v4880 = vshll.u32 %v4877, 16
      %v4881 = vshrl.u32 %v4877, 16
      %v4882 = vshll.u32 %v4878, 16
      %v4883 = vshrl.u32 %v4878, 16
      %vm4884 = vc.u32 %v4876, %v4880
      %v4885 = vsel %vm4884, 1, 0
      %v4886 = vadd.s32 %v4876, %v4880
      %v4887 = vadd.s32 %v4879, %v4885
      %vm4888 = vc.u32 %v4886, %v4882
      %v4889 = vsel %vm4888, 1, 0
      %v4890 = vadd.s32 %v4886, %v4882
      %v4891 = vadd.s32 %v4887, %v4889
      %v4892 = vadd.s32 %v4891, %v4881
      %v4893 = vadd.s32 %v4892, %v4883
      %v4894 = vand.u32 %v4871, 65535
      %v4895 = vshrl.u32 %v4871, 16
      %v4896 = vand.u32 %v4866, 65535
      %v4897 = vshrl.u32 %v4866, 16
      %v4898 = vmul.u32 %v4894, %v4896
      %v4899 = vmul.u32 %v4894, %v4897
      %v4900 = vmul.u32 %v4895, %v4896
      %v4901 = vmul.u32 %v4895, %v4897
      %v4902 = vshll.u32 %v4899, 16
      %v4903 = vshrl.u32 %v4899, 16
      %v4904 = vshll.u32 %v4900, 16
      %v4905 = vshrl.u32 %v4900, 16
      %vm4906 = vc.u32 %v4898, %v4902
      %v4907 = vsel %vm4906, 1, 0
      %v4908 = vadd.s32 %v4898, %v4902
      %v4909 = vadd.s32 %v4901, %v4907
      %vm4910 = vc.u32 %v4908, %v4904
      %v4911 = vsel %vm4910, 1, 0
      %v4912 = vadd.s32 %v4908, %v4904
      %v4913 = vadd.s32 %v4909, %v4911
      %v4914 = vadd.s32 %v4913, %v4903
      %v4915 = vadd.s32 %v4914, %v4905
      %v4916 = vmul.u32 %v4871, %v4862
      %v4917 = vadd.s32 %v4893, %v4912
      %vm4918 = vc.u32 %v4893, %v4912
      %v4919 = vadd.s32 %v4915, 1
      %v4920 = vsel %vm4918, %v4919, %v4915
      %v4921 = vadd.s32 %v4916, %v4920
      %v4922 = vadd.s32 %v4921, 536870912
      %v4923 = vshrl.u32 %v4922, 30
      %v4924 = vshll.u32 %v4923, 30
      %v4925 = vsub.s32 %v4921, %v4924
      %vm4926 = vcmp.lt.s32.totalorder %v4925, 0
      %v4927 = vsub.s32 0, %v4925
      %v4928 = vsel %vm4926, %v4927, %v4925
      %v4929 = vclz %v4928
      %v4930 = vsub.s32 %v4929, 2
      %vm4931 = vcmp.gt.s32.totalorder 0, %v4930
      %v4932 = vsel %vm4931, 0, %v4930
      %v4933 = vsub.s32 32, %v4932
      %v4934 = vshll.u32 %v4925, %v4932
      %v4935 = vshrl.u32 %v4917, %v4933
      %v4936 = vor.u32 %v4934, %v4935
      %v4937 = vsub.s32 4294967266, %v4932
      %v4938 = vadd.s32 %v4937, 127
      %v4939 = vshll.u32 %v4938, 23
      %v4940 = vor.u32 4788187, %v4939
      %v4941 = vand.u32 2147483647, %v4940
      %v4943 = vcvt.s32.f32 %v4936
      %v4944 = vmul.f32 %v4943, %v4941
      %v4945 = vxor.u32 %v4944, 2147483648
      %v4946 = vsel %vm4825, %v4945, %v4944
      %v4947 = vsub.s32 4, %v4923
      %v4948 = vsel %vm4825, %v4947, %v4923
      %v4949 = vsel %vm4824, %v786, %v4946
      %v4950 = vsel %vm4824, 0, %v4948
      %v4951 = vmul.f32 %v4949, %v4949
      %v4952 = vmul.f32 %v4951, -0.001358992
      %v4953 = vadd.f32 %v4952, 0.041655596
      %v4954 = vmul.f32 %v4951, %v4953
      %v4955 = vadd.f32 %v4954, -0.4999988
      %v4956 = vmul.f32 %v4951, %v4955
      %v4957 = vadd.f32 1.0, %v4956
      %v4958 = vmul.f32 %v4949, %v4949
      %v4959 = vmul.f32 %v4958, -0.00019511016
      %v4960 = vadd.f32 %v4959, 0.008332121
      %v4961 = vmul.f32 %v4958, %v4960
      %v4962 = vadd.f32 %v4961, -0.16666654
      %v4963 = vmul.f32 %v4958, %v4962
      %v4964 = vadd.f32 %v4963, 1.0
      %v4965 = vmul.f32 %v4964, %v4949
      %vm4966 = vweird.f32 %v786
      %v4967 = vadd.s32 %v4950, 3
      %v4968 = vand.u32 %v4967, 3
      %vm4969 = vcmp.lt.s32.totalorder %v4968, 2
      %vm4970 = vcmp.eq.s32.totalorder %v4968, 0
      %v4971 = vxor.u32 %v4965, 2147483648
      %v4972 = vsel %vm4970, %v4957, %v4971
      %vm4973 = vcmp.eq.s32.totalorder %v4968, 2
      %v4974 = vxor.u32 %v4957, 2147483648
      %v4975 = vsel %vm4973, %v4974, %v4965
      %v4976 = vsel %vm4969, %v4972, %v4975
      %v4977 = vsel %vm4966, nan, %v4976
      %v4978 = vand.u32 2147483647, %v787
      %vm4979 = vcmp.le.f32.partialorder %v4978, 0.7853982
      %vm4980 = vcmp.lt.s32.totalorder %v787, 0
      %v4981 = vand.u32 %v787, 2139095040
      %v4982 = vshrl.u32 %v4981, 23
      %v4983 = vsub.s32 %v4982, 127
      %v4984 = vand.u32 2147483647, %v787
      %v4985 = vand.u32 %v4984, 8388607
      %v4986 = vor.u32 %v4985, 8388608
      %v4987 = vsub.s32 0, %v4986
      %v4988 = vadd.s32 %v4983, 1
      %vm4989 = vcmp.gt.s32.totalorder %v4988, 0
      %v4990 = vsel %vm4989, %v4988, 0
      %v4991 = vshrl.u32 %v4990, 5
      %v4992 = vand.u32 %v4990, 31
      %v4993 = vsub.s32 32, %v4992
      %v4994 = vshrl.u32 683565275, %v4993
      %v4995 = vshll.u32 683565275, %v4992
      %v4996 = vshrl.u32 2475754826, %v4993
      %v4997 = vor.u32 %v4995, %v4996
      %v4998 = vshll.u32 2475754826, %v4992
      %v4999 = vshrl.u32 2131351028, %v4993
      %v5000 = vor.u32 %v4998, %v4999
      %v5001 = vshll.u32 2131351028, %v4992
      %v5002 = vshrl.u32 2102212464, %v4993
      %v5003 = vor.u32 %v5001, %v5002
      %v5004 = vshll.u32 2102212464, %v4992
      %v5005 = vshrl.u32 920167782, %v4993
      %v5006 = vor.u32 %v5004, %v5005
      %v5007 = vshll.u32 920167782, %v4992
      %v5008 = vshrl.u32 1326507024, %v4993
      %v5009 = vor.u32 %v5007, %v5008
      %vm5010 = vcmp.lt.s32.totalorder %v4991, 1
      %vm5011 = vcmp.lt.s32.totalorder %v4991, 2
      %vm5012 = vcmp.lt.s32.totalorder %v4991, 3
      %vm5013 = vcmp.lt.s32.totalorder %v4991, 4
      %v5014 = vsel %vm5010, %v4994, %v4997
      %v5015 = vsel %vm5013, %v5003, 2102212464
      %v5016 = vsel %vm5012, %v5000, %v5015
      %v5017 = vsel %vm5011, %v5014, %v5016
      %v5018 = vsel %vm5010, %v4997, %v5000
      %v5019 = vsel %vm5013, %v5006, 920167782
      %v5020 = vsel %vm5012, %v5003, %v5019
      %v5021 = vsel %vm5011, %v5018, %v5020
      %v5022 = vsel %vm5010, %v5000, %v5003
      %v5023 = vsel %vm5013, %v5009, 1326507024
      %v5024 = vsel %vm5012, %v5006, %v5023
      %v5025 = vsel %vm5011, %v5022, %v5024
      %v5026 = vshll.u32 %v4986, 8
      %v5027 = vand.u32 %v5026, 65535
      %v5028 = vshrl.u32 %v5026, 16
      %v5029 = vand.u32 %v5025, 65535
      %v5030 = vshrl.u32 %v5025, 16
      %v5031 = vmul.u32 %v5027, %v5029
      %v5032 = vmul.u32 %v5027, %v5030
      %v5033 = vmul.u32 %v5028, %v5029
      %v5034 = vmul.u32 %v5028, %v5030
      %v5035 = vshll.u32 %v5032, 16
      %v5036 = vshrl.u32 %v5032, 16
      %v5037 = vshll.u32 %v5033, 16
      %v5038 = vshrl.u32 %v5033, 16
      %vm5039 = vc.u32 %v5031, %v5035
      %v5040 = vsel %vm5039, 1, 0
      %v5041 = vadd.s32 %v5031, %v5035
      %v5042 = vadd.s32 %v5034, %v5040
      %vm5043 = vc.u32 %v5041, %v5037
      %v5044 = vsel %vm5043, 1, 0
      %v5045 = vadd.s32 %v5041, %v5037
      %v5046 = vadd.s32 %v5042, %v5044
      %v5047 = vadd.s32 %v5046, %v5036
      %v5048 = vadd.s32 %v5047, %v5038
      %v5049 = vand.u32 %v5026, 65535
      %v5050 = vshrl.u32 %v5026, 16
      %v5051 = vand.u32 %v5021, 65535
      %v5052 = vshrl.u32 %v5021, 16
      %v5053 = vmul.u32 %v5049, %v5051
      %v5054 = vmul.u32 %v5049, %v5052
      %v5055 = vmul.u32 %v5050, %v5051
      %v5056 = vmul.u32 %v5050, %v5052
      %v5057 = vshll.u32 %v5054, 16
      %v5058 = vshrl.u32 %v5054, 16
      %v5059 = vshll.u32 %v5055, 16
      %v5060 = vshrl.u32 %v5055, 16
      %vm5061 = vc.u32 %v5053, %v5057
      %v5062 = vsel %vm5061, 1, 0
      %v5063 = vadd.s32 %v5053, %v5057
      %v5064 = vadd.s32 %v5056, %v5062
      %vm5065 = vc.u32 %v5063, %v5059
      %v5066 = vsel %vm5065, 1, 0
      %v5067 = vadd.s32 %v5063, %v5059
      %v5068 = vadd.s32 %v5064, %v5066
      %v5069 = vadd.s32 %v5068, %v5058
      %v5070 = vadd.s32 %v5069, %v5060
      %v5071 = vmul.u32 %v5026, %v5017
      %v5072 = vadd.s32 %v5048, %v5067
      %vm5073 = vc.u32 %v5048, %v5067
      %v5074 = vadd.s32 %v5070, 1
      %v5075 = vsel %vm5073, %v5074, %v5070
      %v5076 = vadd.s32 %v5071, %v5075
      %v5077 = vadd.s32 %v5076, 536870912
      %v5078 = vshrl.u32 %v5077, 30
      %v5079 = vshll.u32 %v5078, 30
      %v5080 = vsub.s32 %v5076, %v5079
      %vm5081 = vcmp.lt.s32.totalorder %v5080, 0
      %v5082 = vsub.s32 0, %v5080
      %v5083 = vsel %vm5081, %v5082, %v5080
      %v5084 = vclz %v5083
      %v5085 = vsub.s32 %v5084, 2
      %vm5086 = vcmp.gt.s32.totalorder 0, %v5085
      %v5087 = vsel %vm5086, 0, %v5085
      %v5088 = vsub.s32 32, %v5087
      %v5089 = vshll.u32 %v5080, %v5087
      %v5090 = vshrl.u32 %v5072, %v5088
      %v5091 = vor.u32 %v5089, %v5090
      %v5092 = vsub.s32 4294967266, %v5087
      %v5093 = vadd.s32 %v5092, 127
      %v5094 = vshll.u32 %v5093, 23
      %v5095 = vor.u32 4788187, %v5094
      %v5096 = vand.u32 2147483647, %v5095
      %v5098 = vcvt.s32.f32 %v5091
      %v5099 = vmul.f32 %v5098, %v5096
      %v5100 = vxor.u32 %v5099, 2147483648
      %v5101 = vsel %vm4980, %v5100, %v5099
      %v5102 = vsub.s32 4, %v5078
      %v5103 = vsel %vm4980, %v5102, %v5078
      %v5104 = vsel %vm4979, %v787, %v5101
      %v5105 = vsel %vm4979, 0, %v5103
      %v5106 = vmul.f32 %v5104, %v5104
      %v5107 = vmul.f32 %v5106, -0.001358992
      %v5108 = vadd.f32 %v5107, 0.041655596
      %v5109 = vmul.f32 %v5106, %v5108
      %v5110 = vadd.f32 %v5109, -0.4999988
      %v5111 = vmul.f32 %v5106, %v5110
      %v5112 = vadd.f32 1.0, %v5111
      %v5113 = vmul.f32 %v5104, %v5104
      %v5114 = vmul.f32 %v5113, -0.00019511016
      %v5115 = vadd.f32 %v5114, 0.008332121
      %v5116 = vmul.f32 %v5113, %v5115
      %v5117 = vadd.f32 %v5116, -0.16666654
      %v5118 = vmul.f32 %v5113, %v5117
      %v5119 = vadd.f32 %v5118, 1.0
      %v5120 = vmul.f32 %v5119, %v5104
      %vm5121 = vweird.f32 %v787
      %v5122 = vadd.s32 %v5105, 3
      %v5123 = vand.u32 %v5122, 3
      %vm5124 = vcmp.lt.s32.totalorder %v5123, 2
      %vm5125 = vcmp.eq.s32.totalorder %v5123, 0
      %v5126 = vxor.u32 %v5120, 2147483648
      %v5127 = vsel %vm5125, %v5112, %v5126
      %vm5128 = vcmp.eq.s32.totalorder %v5123, 2
      %v5129 = vxor.u32 %v5112, 2147483648
      %v5130 = vsel %vm5128, %v5129, %v5120
      %v5131 = vsel %vm5124, %v5127, %v5130
      %v5132 = vsel %vm5121, nan, %v5131
      %v5133 = vand.u32 2147483647, %v788
      %vm5134 = vcmp.le.f32.partialorder %v5133, 0.7853982
      %vm5135 = vcmp.lt.s32.totalorder %v788, 0
      %v5136 = vand.u32 %v788, 2139095040
      %v5137 = vshrl.u32 %v5136, 23
      %v5138 = vsub.s32 %v5137, 127
      %v5139 = vand.u32 2147483647, %v788
      %v5140 = vand.u32 %v5139, 8388607
      %v5141 = vor.u32 %v5140, 8388608
      %v5142 = vsub.s32 0, %v5141
      %v5143 = vadd.s32 %v5138, 1
      %vm5144 = vcmp.gt.s32.totalorder %v5143, 0
      %v5145 = vsel %vm5144, %v5143, 0
      %v5146 = vshrl.u32 %v5145, 5
      %v5147 = vand.u32 %v5145, 31
      %v5148 = vsub.s32 32, %v5147
      %v5149 = vshrl.u32 683565275, %v5148
      %v5150 = vshll.u32 683565275, %v5147
      %v5151 = vshrl.u32 2475754826, %v5148
      %v5152 = vor.u32 %v5150, %v5151
      %v5153 = vshll.u32 2475754826, %v5147
      %v5154 = vshrl.u32 2131351028, %v5148
      %v5155 = vor.u32 %v5153, %v5154
      %v5156 = vshll.u32 2131351028, %v5147
      %v5157 = vshrl.u32 2102212464, %v5148
      %v5158 = vor.u32 %v5156, %v5157
      %v5159 = vshll.u32 2102212464, %v5147
      %v5160 = vshrl.u32 920167782, %v5148
      %v5161 = vor.u32 %v5159, %v5160
      %v5162 = vshll.u32 920167782, %v5147
      %v5163 = vshrl.u32 1326507024, %v5148
      %v5164 = vor.u32 %v5162, %v5163
      %vm5165 = vcmp.lt.s32.totalorder %v5146, 1
      %vm5166 = vcmp.lt.s32.totalorder %v5146, 2
      %vm5167 = vcmp.lt.s32.totalorder %v5146, 3
      %vm5168 = vcmp.lt.s32.totalorder %v5146, 4
      %v5169 = vsel %vm5165, %v5149, %v5152
      %v5170 = vsel %vm5168, %v5158, 2102212464
      %v5171 = vsel %vm5167, %v5155, %v5170
      %v5172 = vsel %vm5166, %v5169, %v5171
      %v5173 = vsel %vm5165, %v5152, %v5155
      %v5174 = vsel %vm5168, %v5161, 920167782
      %v5175 = vsel %vm5167, %v5158, %v5174
      %v5176 = vsel %vm5166, %v5173, %v5175
      %v5177 = vsel %vm5165, %v5155, %v5158
      %v5178 = vsel %vm5168, %v5164, 1326507024
      %v5179 = vsel %vm5167, %v5161, %v5178
      %v5180 = vsel %vm5166, %v5177, %v5179
      %v5181 = vshll.u32 %v5141, 8
      %v5182 = vand.u32 %v5181, 65535
      %v5183 = vshrl.u32 %v5181, 16
      %v5184 = vand.u32 %v5180, 65535
      %v5185 = vshrl.u32 %v5180, 16
      %v5186 = vmul.u32 %v5182, %v5184
      %v5187 = vmul.u32 %v5182, %v5185
      %v5188 = vmul.u32 %v5183, %v5184
      %v5189 = vmul.u32 %v5183, %v5185
      %v5190 = vshll.u32 %v5187, 16
      %v5191 = vshrl.u32 %v5187, 16
      %v5192 = vshll.u32 %v5188, 16
      %v5193 = vshrl.u32 %v5188, 16
      %vm5194 = vc.u32 %v5186, %v5190
      %v5195 = vsel %vm5194, 1, 0
      %v5196 = vadd.s32 %v5186, %v5190
      %v5197 = vadd.s32 %v5189, %v5195
      %vm5198 = vc.u32 %v5196, %v5192
      %v5199 = vsel %vm5198, 1, 0
      %v5200 = vadd.s32 %v5196, %v5192
      %v5201 = vadd.s32 %v5197, %v5199
      %v5202 = vadd.s32 %v5201, %v5191
      %v5203 = vadd.s32 %v5202, %v5193
      %v5204 = vand.u32 %v5181, 65535
      %v5205 = vshrl.u32 %v5181, 16
      %v5206 = vand.u32 %v5176, 65535
      %v5207 = vshrl.u32 %v5176, 16
      %v5208 = vmul.u32 %v5204, %v5206
      %v5209 = vmul.u32 %v5204, %v5207
      %v5210 = vmul.u32 %v5205, %v5206
      %v5211 = vmul.u32 %v5205, %v5207
      %v5212 = vshll.u32 %v5209, 16
      %v5213 = vshrl.u32 %v5209, 16
      %v5214 = vshll.u32 %v5210, 16
      %v5215 = vshrl.u32 %v5210, 16
      %vm5216 = vc.u32 %v5208, %v5212
      %v5217 = vsel %vm5216, 1, 0
      %v5218 = vadd.s32 %v5208, %v5212
      %v5219 = vadd.s32 %v5211, %v5217
      %vm5220 = vc.u32 %v5218, %v5214
      %v5221 = vsel %vm5220, 1, 0
      %v5222 = vadd.s32 %v5218, %v5214
      %v5223 = vadd.s32 %v5219, %v5221
      %v5224 = vadd.s32 %v5223, %v5213
      %v5225 = vadd.s32 %v5224, %v5215
      %v5226 = vmul.u32 %v5181, %v5172
      %v5227 = vadd.s32 %v5203, %v5222
      %vm5228 = vc.u32 %v5203, %v5222
      %v5229 = vadd.s32 %v5225, 1
      %v5230 = vsel %vm5228, %v5229, %v5225
      %v5231 = vadd.s32 %v5226, %v5230
      %v5232 = vadd.s32 %v5231, 536870912
      %v5233 = vshrl.u32 %v5232, 30
      %v5234 = vshll.u32 %v5233, 30
      %v5235 = vsub.s32 %v5231, %v5234
      %vm5236 = vcmp.lt.s32.totalorder %v5235, 0
      %v5237 = vsub.s32 0, %v5235
      %v5238 = vsel %vm5236, %v5237, %v5235
      %v5239 = vclz %v5238
      %v5240 = vsub.s32 %v5239, 2
      %vm5241 = vcmp.gt.s32.totalorder 0, %v5240
      %v5242 = vsel %vm5241, 0, %v5240
      %v5243 = vsub.s32 32, %v5242
      %v5244 = vshll.u32 %v5235, %v5242
      %v5245 = vshrl.u32 %v5227, %v5243
      %v5246 = vor.u32 %v5244, %v5245
      %v5247 = vsub.s32 4294967266, %v5242
      %v5248 = vadd.s32 %v5247, 127
      %v5249 = vshll.u32 %v5248, 23
      %v5250 = vor.u32 4788187, %v5249
      %v5251 = vand.u32 2147483647, %v5250
      %v5253 = vcvt.s32.f32 %v5246
      %v5254 = vmul.f32 %v5253, %v5251
      %v5255 = vxor.u32 %v5254, 2147483648
      %v5256 = vsel %vm5135, %v5255, %v5254
      %v5257 = vsub.s32 4, %v5233
      %v5258 = vsel %vm5135, %v5257, %v5233
      %v5259 = vsel %vm5134, %v788, %v5256
      %v5260 = vsel %vm5134, 0, %v5258
      %v5261 = vmul.f32 %v5259, %v5259
      %v5262 = vmul.f32 %v5261, -0.001358992
      %v5263 = vadd.f32 %v5262, 0.041655596
      %v5264 = vmul.f32 %v5261, %v5263
      %v5265 = vadd.f32 %v5264, -0.4999988
      %v5266 = vmul.f32 %v5261, %v5265
      %v5267 = vadd.f32 1.0, %v5266
      %v5268 = vmul.f32 %v5259, %v5259
      %v5269 = vmul.f32 %v5268, -0.00019511016
      %v5270 = vadd.f32 %v5269, 0.008332121
      %v5271 = vmul.f32 %v5268, %v5270
      %v5272 = vadd.f32 %v5271, -0.16666654
      %v5273 = vmul.f32 %v5268, %v5272
      %v5274 = vadd.f32 %v5273, 1.0
      %v5275 = vmul.f32 %v5274, %v5259
      %vm5276 = vweird.f32 %v788
      %v5277 = vadd.s32 %v5260, 3
      %v5278 = vand.u32 %v5277, 3
      %vm5279 = vcmp.lt.s32.totalorder %v5278, 2
      %vm5280 = vcmp.eq.s32.totalorder %v5278, 0
      %v5281 = vxor.u32 %v5275, 2147483648
      %v5282 = vsel %vm5280, %v5267, %v5281
      %vm5283 = vcmp.eq.s32.totalorder %v5278, 2
      %v5284 = vxor.u32 %v5267, 2147483648
      %v5285 = vsel %vm5283, %v5284, %v5275
      %v5286 = vsel %vm5279, %v5282, %v5285
      %v5287 = vsel %vm5276, nan, %v5286
      %v5288 = vand.u32 2147483647, %v789
      %vm5289 = vcmp.le.f32.partialorder %v5288, 0.7853982
      %vm5290 = vcmp.lt.s32.totalorder %v789, 0
      %v5291 = vand.u32 %v789, 2139095040
      %v5292 = vshrl.u32 %v5291, 23
      %v5293 = vsub.s32 %v5292, 127
      %v5294 = vand.u32 2147483647, %v789
      %v5295 = vand.u32 %v5294, 8388607
      %v5296 = vor.u32 %v5295, 8388608
      %v5297 = vsub.s32 0, %v5296
      %v5298 = vadd.s32 %v5293, 1
      %vm5299 = vcmp.gt.s32.totalorder %v5298, 0
      %v5300 = vsel %vm5299, %v5298, 0
      %v5301 = vshrl.u32 %v5300, 5
      %v5302 = vand.u32 %v5300, 31
      %v5303 = vsub.s32 32, %v5302
      %v5304 = vshrl.u32 683565275, %v5303
      %v5305 = vshll.u32 683565275, %v5302
      %v5306 = vshrl.u32 2475754826, %v5303
      %v5307 = vor.u32 %v5305, %v5306
      %v5308 = vshll.u32 2475754826, %v5302
      %v5309 = vshrl.u32 2131351028, %v5303
      %v5310 = vor.u32 %v5308, %v5309
      %v5311 = vshll.u32 2131351028, %v5302
      %v5312 = vshrl.u32 2102212464, %v5303
      %v5313 = vor.u32 %v5311, %v5312
      %v5314 = vshll.u32 2102212464, %v5302
      %v5315 = vshrl.u32 920167782, %v5303
      %v5316 = vor.u32 %v5314, %v5315
      %v5317 = vshll.u32 920167782, %v5302
      %v5318 = vshrl.u32 1326507024, %v5303
      %v5319 = vor.u32 %v5317, %v5318
      %vm5320 = vcmp.lt.s32.totalorder %v5301, 1
      %vm5321 = vcmp.lt.s32.totalorder %v5301, 2
      %vm5322 = vcmp.lt.s32.totalorder %v5301, 3
      %vm5323 = vcmp.lt.s32.totalorder %v5301, 4
      %v5324 = vsel %vm5320, %v5304, %v5307
      %v5325 = vsel %vm5323, %v5313, 2102212464
      %v5326 = vsel %vm5322, %v5310, %v5325
      %v5327 = vsel %vm5321, %v5324, %v5326
      %v5328 = vsel %vm5320, %v5307, %v5310
      %v5329 = vsel %vm5323, %v5316, 920167782
      %v5330 = vsel %vm5322, %v5313, %v5329
      %v5331 = vsel %vm5321, %v5328, %v5330
      %v5332 = vsel %vm5320, %v5310, %v5313
      %v5333 = vsel %vm5323, %v5319, 1326507024
      %v5334 = vsel %vm5322, %v5316, %v5333
      %v5335 = vsel %vm5321, %v5332, %v5334
      %v5336 = vshll.u32 %v5296, 8
      %v5337 = vand.u32 %v5336, 65535
      %v5338 = vshrl.u32 %v5336, 16
      %v5339 = vand.u32 %v5335, 65535
      %v5340 = vshrl.u32 %v5335, 16
      %v5341 = vmul.u32 %v5337, %v5339
      %v5342 = vmul.u32 %v5337, %v5340
      %v5343 = vmul.u32 %v5338, %v5339
      %v5344 = vmul.u32 %v5338, %v5340
      %v5345 = vshll.u32 %v5342, 16
      %v5346 = vshrl.u32 %v5342, 16
      %v5347 = vshll.u32 %v5343, 16
      %v5348 = vshrl.u32 %v5343, 16
      %vm5349 = vc.u32 %v5341, %v5345
      %v5350 = vsel %vm5349, 1, 0
      %v5351 = vadd.s32 %v5341, %v5345
      %v5352 = vadd.s32 %v5344, %v5350
      %vm5353 = vc.u32 %v5351, %v5347
      %v5354 = vsel %vm5353, 1, 0
      %v5355 = vadd.s32 %v5351, %v5347
      %v5356 = vadd.s32 %v5352, %v5354
      %v5357 = vadd.s32 %v5356, %v5346
      %v5358 = vadd.s32 %v5357, %v5348
      %v5359 = vand.u32 %v5336, 65535
      %v5360 = vshrl.u32 %v5336, 16
      %v5361 = vand.u32 %v5331, 65535
      %v5362 = vshrl.u32 %v5331, 16
      %v5363 = vmul.u32 %v5359, %v5361
      %v5364 = vmul.u32 %v5359, %v5362
      %v5365 = vmul.u32 %v5360, %v5361
      %v5366 = vmul.u32 %v5360, %v5362
      %v5367 = vshll.u32 %v5364, 16
      %v5368 = vshrl.u32 %v5364, 16
      %v5369 = vshll.u32 %v5365, 16
      %v5370 = vshrl.u32 %v5365, 16
      %vm5371 = vc.u32 %v5363, %v5367
      %v5372 = vsel %vm5371, 1, 0
      %v5373 = vadd.s32 %v5363, %v5367
      %v5374 = vadd.s32 %v5366, %v5372
      %vm5375 = vc.u32 %v5373, %v5369
      %v5376 = vsel %vm5375, 1, 0
      %v5377 = vadd.s32 %v5373, %v5369
      %v5378 = vadd.s32 %v5374, %v5376
      %v5379 = vadd.s32 %v5378, %v5368
      %v5380 = vadd.s32 %v5379, %v5370
      %v5381 = vmul.u32 %v5336, %v5327
      %v5382 = vadd.s32 %v5358, %v5377
      %vm5383 = vc.u32 %v5358, %v5377
      %v5384 = vadd.s32 %v5380, 1
      %v5385 = vsel %vm5383, %v5384, %v5380
      %v5386 = vadd.s32 %v5381, %v5385
      %v5387 = vadd.s32 %v5386, 536870912
      %v5388 = vshrl.u32 %v5387, 30
      %v5389 = vshll.u32 %v5388, 30
      %v5390 = vsub.s32 %v5386, %v5389
      %vm5391 = vcmp.lt.s32.totalorder %v5390, 0
      %v5392 = vsub.s32 0, %v5390
      %v5393 = vsel %vm5391, %v5392, %v5390
      %v5394 = vclz %v5393
      %v5395 = vsub.s32 %v5394, 2
      %vm5396 = vcmp.gt.s32.totalorder 0, %v5395
      %v5397 = vsel %vm5396, 0, %v5395
      %v5398 = vsub.s32 32, %v5397
      %v5399 = vshll.u32 %v5390, %v5397
      %v5400 = vshrl.u32 %v5382, %v5398
      %v5401 = vor.u32 %v5399, %v5400
      %v5402 = vsub.s32 4294967266, %v5397
      %v5403 = vadd.s32 %v5402, 127
      %v5404 = vshll.u32 %v5403, 23
      %v5405 = vor.u32 4788187, %v5404
      %v5406 = vand.u32 2147483647, %v5405
      %v5408 = vcvt.s32.f32 %v5401
      %v5409 = vmul.f32 %v5408, %v5406
      %v5410 = vxor.u32 %v5409, 2147483648
      %v5411 = vsel %vm5290, %v5410, %v5409
      %v5412 = vsub.s32 4, %v5388
      %v5413 = vsel %vm5290, %v5412, %v5388
      %v5414 = vsel %vm5289, %v789, %v5411
      %v5415 = vsel %vm5289, 0, %v5413
      %v5416 = vmul.f32 %v5414, %v5414
      %v5417 = vmul.f32 %v5416, -0.001358992
      %v5418 = vadd.f32 %v5417, 0.041655596
      %v5419 = vmul.f32 %v5416, %v5418
      %v5420 = vadd.f32 %v5419, -0.4999988
      %v5421 = vmul.f32 %v5416, %v5420
      %v5422 = vadd.f32 1.0, %v5421
      %v5423 = vmul.f32 %v5414, %v5414
      %v5424 = vmul.f32 %v5423, -0.00019511016
      %v5425 = vadd.f32 %v5424, 0.008332121
      %v5426 = vmul.f32 %v5423, %v5425
      %v5427 = vadd.f32 %v5426, -0.16666654
      %v5428 = vmul.f32 %v5423, %v5427
      %v5429 = vadd.f32 %v5428, 1.0
      %v5430 = vmul.f32 %v5429, %v5414
      %vm5431 = vweird.f32 %v789
      %v5432 = vadd.s32 %v5415, 3
      %v5433 = vand.u32 %v5432, 3
      %vm5434 = vcmp.lt.s32.totalorder %v5433, 2
      %vm5435 = vcmp.eq.s32.totalorder %v5433, 0
      %v5436 = vxor.u32 %v5430, 2147483648
      %v5437 = vsel %vm5435, %v5422, %v5436
      %vm5438 = vcmp.eq.s32.totalorder %v5433, 2
      %v5439 = vxor.u32 %v5422, 2147483648
      %v5440 = vsel %vm5438, %v5439, %v5430
      %v5441 = vsel %vm5434, %v5437, %v5440
      %v5442 = vsel %vm5431, nan, %v5441
      %v5443 = vand.u32 2147483647, %v790
      %vm5444 = vcmp.le.f32.partialorder %v5443, 0.7853982
      %vm5445 = vcmp.lt.s32.totalorder %v790, 0
      %v5446 = vand.u32 %v790, 2139095040
      %v5447 = vshrl.u32 %v5446, 23
      %v5448 = vsub.s32 %v5447, 127
      %v5449 = vand.u32 2147483647, %v790
      %v5450 = vand.u32 %v5449, 8388607
      %v5451 = vor.u32 %v5450, 8388608
      %v5452 = vsub.s32 0, %v5451
      %v5453 = vadd.s32 %v5448, 1
      %vm5454 = vcmp.gt.s32.totalorder %v5453, 0
      %v5455 = vsel %vm5454, %v5453, 0
      %v5456 = vshrl.u32 %v5455, 5
      %v5457 = vand.u32 %v5455, 31
      %v5458 = vsub.s32 32, %v5457
      %v5459 = vshrl.u32 683565275, %v5458
      %v5460 = vshll.u32 683565275, %v5457
      %v5461 = vshrl.u32 2475754826, %v5458
      %v5462 = vor.u32 %v5460, %v5461
      %v5463 = vshll.u32 2475754826, %v5457
      %v5464 = vshrl.u32 2131351028, %v5458
      %v5465 = vor.u32 %v5463, %v5464
      %v5466 = vshll.u32 2131351028, %v5457
      %v5467 = vshrl.u32 2102212464, %v5458
      %v5468 = vor.u32 %v5466, %v5467
      %v5469 = vshll.u32 2102212464, %v5457
      %v5470 = vshrl.u32 920167782, %v5458
      %v5471 = vor.u32 %v5469, %v5470
      %v5472 = vshll.u32 920167782, %v5457
      %v5473 = vshrl.u32 1326507024, %v5458
      %v5474 = vor.u32 %v5472, %v5473
      %vm5475 = vcmp.lt.s32.totalorder %v5456, 1
      %vm5476 = vcmp.lt.s32.totalorder %v5456, 2
      %vm5477 = vcmp.lt.s32.totalorder %v5456, 3
      %vm5478 = vcmp.lt.s32.totalorder %v5456, 4
      %v5479 = vsel %vm5475, %v5459, %v5462
      %v5480 = vsel %vm5478, %v5468, 2102212464
      %v5481 = vsel %vm5477, %v5465, %v5480
      %v5482 = vsel %vm5476, %v5479, %v5481
      %v5483 = vsel %vm5475, %v5462, %v5465
      %v5484 = vsel %vm5478, %v5471, 920167782
      %v5485 = vsel %vm5477, %v5468, %v5484
      %v5486 = vsel %vm5476, %v5483, %v5485
      %v5487 = vsel %vm5475, %v5465, %v5468
      %v5488 = vsel %vm5478, %v5474, 1326507024
      %v5489 = vsel %vm5477, %v5471, %v5488
      %v5490 = vsel %vm5476, %v5487, %v5489
      %v5491 = vshll.u32 %v5451, 8
      %v5492 = vand.u32 %v5491, 65535
      %v5493 = vshrl.u32 %v5491, 16
      %v5494 = vand.u32 %v5490, 65535
      %v5495 = vshrl.u32 %v5490, 16
      %v5496 = vmul.u32 %v5492, %v5494
      %v5497 = vmul.u32 %v5492, %v5495
      %v5498 = vmul.u32 %v5493, %v5494
      %v5499 = vmul.u32 %v5493, %v5495
      %v5500 = vshll.u32 %v5497, 16
      %v5501 = vshrl.u32 %v5497, 16
      %v5502 = vshll.u32 %v5498, 16
      %v5503 = vshrl.u32 %v5498, 16
      %vm5504 = vc.u32 %v5496, %v5500
      %v5505 = vsel %vm5504, 1, 0
      %v5506 = vadd.s32 %v5496, %v5500
      %v5507 = vadd.s32 %v5499, %v5505
      %vm5508 = vc.u32 %v5506, %v5502
      %v5509 = vsel %vm5508, 1, 0
      %v5510 = vadd.s32 %v5506, %v5502
      %v5511 = vadd.s32 %v5507, %v5509
      %v5512 = vadd.s32 %v5511, %v5501
      %v5513 = vadd.s32 %v5512, %v5503
      %v5514 = vand.u32 %v5491, 65535
      %v5515 = vshrl.u32 %v5491, 16
      %v5516 = vand.u32 %v5486, 65535
      %v5517 = vshrl.u32 %v5486, 16
      %v5518 = vmul.u32 %v5514, %v5516
      %v5519 = vmul.u32 %v5514, %v5517
      %v5520 = vmul.u32 %v5515, %v5516
      %v5521 = vmul.u32 %v5515, %v5517
      %v5522 = vshll.u32 %v5519, 16
      %v5523 = vshrl.u32 %v5519, 16
      %v5524 = vshll.u32 %v5520, 16
      %v5525 = vshrl.u32 %v5520, 16
      %vm5526 = vc.u32 %v5518, %v5522
      %v5527 = vsel %vm5526, 1, 0
      %v5528 = vadd.s32 %v5518, %v5522
      %v5529 = vadd.s32 %v5521, %v5527
      %vm5530 = vc.u32 %v5528, %v5524
      %v5531 = vsel %vm5530, 1, 0
      %v5532 = vadd.s32 %v5528, %v5524
      %v5533 = vadd.s32 %v5529, %v5531
      %v5534 = vadd.s32 %v5533, %v5523
      %v5535 = vadd.s32 %v5534, %v5525
      %v5536 = vmul.u32 %v5491, %v5482
      %v5537 = vadd.s32 %v5513, %v5532
      %vm5538 = vc.u32 %v5513, %v5532
      %v5539 = vadd.s32 %v5535, 1
      %v5540 = vsel %vm5538, %v5539, %v5535
      %v5541 = vadd.s32 %v5536, %v5540
      %v5542 = vadd.s32 %v5541, 536870912
      %v5543 = vshrl.u32 %v5542, 30
      %v5544 = vshll.u32 %v5543, 30
      %v5545 = vsub.s32 %v5541, %v5544
      %vm5546 = vcmp.lt.s32.totalorder %v5545, 0
      %v5547 = vsub.s32 0, %v5545
      %v5548 = vsel %vm5546, %v5547, %v5545
      %v5549 = vclz %v5548
      %v5550 = vsub.s32 %v5549, 2
      %vm5551 = vcmp.gt.s32.totalorder 0, %v5550
      %v5552 = vsel %vm5551, 0, %v5550
      %v5553 = vsub.s32 32, %v5552
      %v5554 = vshll.u32 %v5545, %v5552
      %v5555 = vshrl.u32 %v5537, %v5553
      %v5556 = vor.u32 %v5554, %v5555
      %v5557 = vsub.s32 4294967266, %v5552
      %v5558 = vadd.s32 %v5557, 127
      %v5559 = vshll.u32 %v5558, 23
      %v5560 = vor.u32 4788187, %v5559
      %v5561 = vand.u32 2147483647, %v5560
      %v5563 = vcvt.s32.f32 %v5556
      %v5564 = vmul.f32 %v5563, %v5561
      %v5565 = vxor.u32 %v5564, 2147483648
      %v5566 = vsel %vm5445, %v5565, %v5564
      %v5567 = vsub.s32 4, %v5543
      %v5568 = vsel %vm5445, %v5567, %v5543
      %v5569 = vsel %vm5444, %v790, %v5566
      %v5570 = vsel %vm5444, 0, %v5568
      %v5571 = vmul.f32 %v5569, %v5569
      %v5572 = vmul.f32 %v5571, -0.001358992
      %v5573 = vadd.f32 %v5572, 0.041655596
      %v5574 = vmul.f32 %v5571, %v5573
      %v5575 = vadd.f32 %v5574, -0.4999988
      %v5576 = vmul.f32 %v5571, %v5575
      %v5577 = vadd.f32 1.0, %v5576
      %v5578 = vmul.f32 %v5569, %v5569
      %v5579 = vmul.f32 %v5578, -0.00019511016
      %v5580 = vadd.f32 %v5579, 0.008332121
      %v5581 = vmul.f32 %v5578, %v5580
      %v5582 = vadd.f32 %v5581, -0.16666654
      %v5583 = vmul.f32 %v5578, %v5582
      %v5584 = vadd.f32 %v5583, 1.0
      %v5585 = vmul.f32 %v5584, %v5569
      %vm5586 = vweird.f32 %v790
      %v5587 = vadd.s32 %v5570, 3
      %v5588 = vand.u32 %v5587, 3
      %vm5589 = vcmp.lt.s32.totalorder %v5588, 2
      %vm5590 = vcmp.eq.s32.totalorder %v5588, 0
      %v5591 = vxor.u32 %v5585, 2147483648
      %v5592 = vsel %vm5590, %v5577, %v5591
      %vm5593 = vcmp.eq.s32.totalorder %v5588, 2
      %v5594 = vxor.u32 %v5577, 2147483648
      %v5595 = vsel %vm5593, %v5594, %v5585
      %v5596 = vsel %vm5589, %v5592, %v5595
      %v5597 = vsel %vm5586, nan, %v5596
      %v5598 = vand.u32 2147483647, %v791
      %vm5599 = vcmp.le.f32.partialorder %v5598, 0.7853982
      %vm5600 = vcmp.lt.s32.totalorder %v791, 0
      %v5601 = vand.u32 %v791, 2139095040
      %v5602 = vshrl.u32 %v5601, 23
      %v5603 = vsub.s32 %v5602, 127
      %v5604 = vand.u32 2147483647, %v791
      %v5605 = vand.u32 %v5604, 8388607
      %v5606 = vor.u32 %v5605, 8388608
      %v5607 = vsub.s32 0, %v5606
      %v5608 = vadd.s32 %v5603, 1
      %vm5609 = vcmp.gt.s32.totalorder %v5608, 0
      %v5610 = vsel %vm5609, %v5608, 0
      %v5611 = vshrl.u32 %v5610, 5
      %v5612 = vand.u32 %v5610, 31
      %v5613 = vsub.s32 32, %v5612
      %v5614 = vshrl.u32 683565275, %v5613
      %v5615 = vshll.u32 683565275, %v5612
      %v5616 = vshrl.u32 2475754826, %v5613
      %v5617 = vor.u32 %v5615, %v5616
      %v5618 = vshll.u32 2475754826, %v5612
      %v5619 = vshrl.u32 2131351028, %v5613
      %v5620 = vor.u32 %v5618, %v5619
      %v5621 = vshll.u32 2131351028, %v5612
      %v5622 = vshrl.u32 2102212464, %v5613
      %v5623 = vor.u32 %v5621, %v5622
      %v5624 = vshll.u32 2102212464, %v5612
      %v5625 = vshrl.u32 920167782, %v5613
      %v5626 = vor.u32 %v5624, %v5625
      %v5627 = vshll.u32 920167782, %v5612
      %v5628 = vshrl.u32 1326507024, %v5613
      %v5629 = vor.u32 %v5627, %v5628
      %vm5630 = vcmp.lt.s32.totalorder %v5611, 1
      %vm5631 = vcmp.lt.s32.totalorder %v5611, 2
      %vm5632 = vcmp.lt.s32.totalorder %v5611, 3
      %vm5633 = vcmp.lt.s32.totalorder %v5611, 4
      %v5634 = vsel %vm5630, %v5614, %v5617
      %v5635 = vsel %vm5633, %v5623, 2102212464
      %v5636 = vsel %vm5632, %v5620, %v5635
      %v5637 = vsel %vm5631, %v5634, %v5636
      %v5638 = vsel %vm5630, %v5617, %v5620
      %v5639 = vsel %vm5633, %v5626, 920167782
      %v5640 = vsel %vm5632, %v5623, %v5639
      %v5641 = vsel %vm5631, %v5638, %v5640
      %v5642 = vsel %vm5630, %v5620, %v5623
      %v5643 = vsel %vm5633, %v5629, 1326507024
      %v5644 = vsel %vm5632, %v5626, %v5643
      %v5645 = vsel %vm5631, %v5642, %v5644
      %v5646 = vshll.u32 %v5606, 8
      %v5647 = vand.u32 %v5646, 65535
      %v5648 = vshrl.u32 %v5646, 16
      %v5649 = vand.u32 %v5645, 65535
      %v5650 = vshrl.u32 %v5645, 16
      %v5651 = vmul.u32 %v5647, %v5649
      %v5652 = vmul.u32 %v5647, %v5650
      %v5653 = vmul.u32 %v5648, %v5649
      %v5654 = vmul.u32 %v5648, %v5650
      %v5655 = vshll.u32 %v5652, 16
      %v5656 = vshrl.u32 %v5652, 16
      %v5657 = vshll.u32 %v5653, 16
      %v5658 = vshrl.u32 %v5653, 16
      %vm5659 = vc.u32 %v5651, %v5655
      %v5660 = vsel %vm5659, 1, 0
      %v5661 = vadd.s32 %v5651, %v5655
      %v5662 = vadd.s32 %v5654, %v5660
      %vm5663 = vc.u32 %v5661, %v5657
      %v5664 = vsel %vm5663, 1, 0
      %v5665 = vadd.s32 %v5661, %v5657
      %v5666 = vadd.s32 %v5662, %v5664
      %v5667 = vadd.s32 %v5666, %v5656
      %v5668 = vadd.s32 %v5667, %v5658
      %v5669 = vand.u32 %v5646, 65535
      %v5670 = vshrl.u32 %v5646, 16
      %v5671 = vand.u32 %v5641, 65535
      %v5672 = vshrl.u32 %v5641, 16
      %v5673 = vmul.u32 %v5669, %v5671
      %v5674 = vmul.u32 %v5669, %v5672
      %v5675 = vmul.u32 %v5670, %v5671
      %v5676 = vmul.u32 %v5670, %v5672
      %v5677 = vshll.u32 %v5674, 16
      %v5678 = vshrl.u32 %v5674, 16
      %v5679 = vshll.u32 %v5675, 16
      %v5680 = vshrl.u32 %v5675, 16
      %vm5681 = vc.u32 %v5673, %v5677
      %v5682 = vsel %vm5681, 1, 0
      %v5683 = vadd.s32 %v5673, %v5677
      %v5684 = vadd.s32 %v5676, %v5682
      %vm5685 = vc.u32 %v5683, %v5679
      %v5686 = vsel %vm5685, 1, 0
      %v5687 = vadd.s32 %v5683, %v5679
      %v5688 = vadd.s32 %v5684, %v5686
      %v5689 = vadd.s32 %v5688, %v5678
      %v5690 = vadd.s32 %v5689, %v5680
      %v5691 = vmul.u32 %v5646, %v5637
      %v5692 = vadd.s32 %v5668, %v5687
      %vm5693 = vc.u32 %v5668, %v5687
      %v5694 = vadd.s32 %v5690, 1
      %v5695 = vsel %vm5693, %v5694, %v5690
      %v5696 = vadd.s32 %v5691, %v5695
      %v5697 = vadd.s32 %v5696, 536870912
      %v5698 = vshrl.u32 %v5697, 30
      %v5699 = vshll.u32 %v5698, 30
      %v5700 = vsub.s32 %v5696, %v5699
      %vm5701 = vcmp.lt.s32.totalorder %v5700, 0
      %v5702 = vsub.s32 0, %v5700
      %v5703 = vsel %vm5701, %v5702, %v5700
      %v5704 = vclz %v5703
      %v5705 = vsub.s32 %v5704, 2
      %vm5706 = vcmp.gt.s32.totalorder 0, %v5705
      %v5707 = vsel %vm5706, 0, %v5705
      %v5708 = vsub.s32 32, %v5707
      %v5709 = vshll.u32 %v5700, %v5707
      %v5710 = vshrl.u32 %v5692, %v5708
      %v5711 = vor.u32 %v5709, %v5710
      %v5712 = vsub.s32 4294967266, %v5707
      %v5713 = vadd.s32 %v5712, 127
      %v5714 = vshll.u32 %v5713, 23
      %v5715 = vor.u32 4788187, %v5714
      %v5716 = vand.u32 2147483647, %v5715
      %v5718 = vcvt.s32.f32 %v5711
      %v5719 = vmul.f32 %v5718, %v5716
      %v5720 = vxor.u32 %v5719, 2147483648
      %v5721 = vsel %vm5600, %v5720, %v5719
      %v5722 = vsub.s32 4, %v5698
      %v5723 = vsel %vm5600, %v5722, %v5698
      %v5724 = vsel %vm5599, %v791, %v5721
      %v5725 = vsel %vm5599, 0, %v5723
      %v5726 = vmul.f32 %v5724, %v5724
      %v5727 = vmul.f32 %v5726, -0.001358992
      %v5728 = vadd.f32 %v5727, 0.041655596
      %v5729 = vmul.f32 %v5726, %v5728
      %v5730 = vadd.f32 %v5729, -0.4999988
      %v5731 = vmul.f32 %v5726, %v5730
      %v5732 = vadd.f32 1.0, %v5731
      %v5733 = vmul.f32 %v5724, %v5724
      %v5734 = vmul.f32 %v5733, -0.00019511016
      %v5735 = vadd.f32 %v5734, 0.008332121
      %v5736 = vmul.f32 %v5733, %v5735
      %v5737 = vadd.f32 %v5736, -0.16666654
      %v5738 = vmul.f32 %v5733, %v5737
      %v5739 = vadd.f32 %v5738, 1.0
      %v5740 = vmul.f32 %v5739, %v5724
      %vm5741 = vweird.f32 %v791
      %v5742 = vadd.s32 %v5725, 3
      %v5743 = vand.u32 %v5742, 3
      %vm5744 = vcmp.lt.s32.totalorder %v5743, 2
      %vm5745 = vcmp.eq.s32.totalorder %v5743, 0
      %v5746 = vxor.u32 %v5740, 2147483648
      %v5747 = vsel %vm5745, %v5732, %v5746
      %vm5748 = vcmp.eq.s32.totalorder %v5743, 2
      %v5749 = vxor.u32 %v5732, 2147483648
      %v5750 = vsel %vm5748, %v5749, %v5740
      %v5751 = vsel %vm5744, %v5747, %v5750
      %v5752 = vsel %vm5741, nan, %v5751
      %v5753 = vsel %vm792, 1, 0
      %v5754 = vperm.slane %v5753, 4
      %vm5755 = vcmp.eq.s32.totalorder %v5754, 1
      %v5756 = vsel %vm5755, %v727, %v947
      %v5757 = vsel %vm5755, %v728, %v1102
      %v5758 = vsel %vm5755, %v729, %v1257
      %v5759 = vsel %vm5755, %v730, %v1412
      %v5760 = vsel %vm5755, %v731, %v1567
      %v5761 = vsel %vm5755, %v732, %v1722
      %v5762 = vsel %vm5755, %v733, %v1877
      %v5763 = vsel %vm5755, %v734, %v2032
      %v5764 = vsel %vm5755, %v735, %v2187
      %v5765 = vsel %vm5755, %v736, %v2342
      %v5766 = vsel %vm5755, %v737, %v2497
      %v5767 = vsel %vm5755, %v738, %v2652
      %v5768 = vsel %vm5755, %v739, %v2807
      %v5769 = vsel %vm5755, %v740, %v2962
      %v5770 = vsel %vm5755, %v741, %v3117
      %v5771 = vsel %vm5755, %v742, %v3272
      %v5772 = vsel %vm5755, %v743, %v3427
      %v5773 = vsel %vm5755, %v744, %v3582
      %v5774 = vsel %vm5755, %v745, %v3737
      %v5775 = vsel %vm5755, %v746, %v3892
      %v5776 = vsel %vm5755, %v747, %v4047
      %v5777 = vsel %vm5755, %v748, %v4202
      %v5778 = vsel %vm5755, %v749, %v4357
      %v5779 = vsel %vm5755, %v750, %v4512
      %v5780 = vsel %vm5755, %v751, %v4667
      %v5781 = vsel %vm5755, %v752, %v4822
      %v5782 = vsel %vm5755, %v753, %v4977
      %v5783 = vsel %vm5755, %v754, %v5132
      %v5784 = vsel %vm5755, %v755, %v5287
      %v5785 = vsel %vm5755, %v756, %v5442
      %v5786 = vsel %vm5755, %v757, %v5597
      %v5787 = vsel %vm5755, %v758, %v5752
      %vm5788 = vcmask 809984
      %5789 = vst.msk [vmem:[%s145] sm:$0xff] %vm5788, %v5756
      %5790 = vst.msk [vmem:[%s145 + $0x8] sm:$0xff] %vm5788, %v5757
      %5791 = vst.msk [vmem:[%s145 + $0x10] sm:$0xff] %vm5788, %v5758
      %5792 = vst.msk [vmem:[%s145 + $0x18] sm:$0xff] %vm5788, %v5759
      %5793 = vst.msk [vmem:[%s145 + $0x20] sm:$0xff] %vm5788, %v5760
      %5794 = vst.msk [vmem:[%s145 + $0x28] sm:$0xff] %vm5788, %v5761
      %5795 = vst.msk [vmem:[%s145 + $0x30] sm:$0xff] %vm5788, %v5762
      %5796 = vst.msk [vmem:[%s145 + $0x38] sm:$0xff] %vm5788, %v5763
      %5797 = vst.msk [vmem:[%s145 + $0x40] sm:$0xff] %vm5788, %v5764
      %5798 = vst.msk [vmem:[%s145 + $0x48] sm:$0xff] %vm5788, %v5765
      %5799 = vst.msk [vmem:[%s145 + $0x50] sm:$0xff] %vm5788, %v5766
      %5800 = vst.msk [vmem:[%s145 + $0x58] sm:$0xff] %vm5788, %v5767
      %5801 = vst.msk [vmem:[%s145 + $0x60] sm:$0xff] %vm5788, %v5768
      %5802 = vst.msk [vmem:[%s145 + $0x68] sm:$0xff] %vm5788, %v5769
      %5803 = vst.msk [vmem:[%s145 + $0x70] sm:$0xff] %vm5788, %v5770
      %5804 = vst.msk [vmem:[%s145 + $0x78] sm:$0xff] %vm5788, %v5771
      %5805 = vst.msk [vmem:[%s145 + $0x80] sm:$0xff] %vm5788, %v5772
      %5806 = vst.msk [vmem:[%s145 + $0x88] sm:$0xff] %vm5788, %v5773
      %5807 = vst.msk [vmem:[%s145 + $0x90] sm:$0xff] %vm5788, %v5774
      %5808 = vst.msk [vmem:[%s145 + $0x98] sm:$0xff] %vm5788, %v5775
      %5809 = vst.msk [vmem:[%s145 + $0xa0] sm:$0xff] %vm5788, %v5776
      %5810 = vst.msk [vmem:[%s145 + $0xa8] sm:$0xff] %vm5788, %v5777
      %5811 = vst.msk [vmem:[%s145 + $0xb0] sm:$0xff] %vm5788, %v5778
      %5812 = vst.msk [vmem:[%s145 + $0xb8] sm:$0xff] %vm5788, %v5779
      %5813 = vst.msk [vmem:[%s145 + $0xc0] sm:$0xff] %vm5788, %v5780
      %5814 = vst.msk [vmem:[%s145 + $0xc8] sm:$0xff] %vm5788, %v5781
      %5815 = vst.msk [vmem:[%s145 + $0xd0] sm:$0xff] %vm5788, %v5782
      %5816 = vst.msk [vmem:[%s145 + $0xd8] sm:$0xff] %vm5788, %v5783
      %5817 = vst.msk [vmem:[%s145 + $0xe0] sm:$0xff] %vm5788, %v5784
      %5818 = vst.msk [vmem:[%s145 + $0xe8] sm:$0xff] %vm5788, %v5785
      %5819 = vst.msk [vmem:[%s145 + $0xf0] sm:$0xff] %vm5788, %v5786
      %5820 = vst.msk [vmem:[%s145 + $0xf8] sm:$0xff] %vm5788, %v5787
      %s5821 = smul.u32 32, %s13
      %p5822 = scmp.lt.s32.totalorder %s5821, 255
      %s5823 = scalar_select %p5822, %s5821, 255
      %s5824 = smul.addr %s5823, 8
      %s5825 = scalar_lea.vmem %s2, %s5824
      // Predicated region
      $region29: #{tpu_custom_call.1} parent=27 // pred_check
        %p5826 = pneg %p78
      $region30: #{tpu_custom_call.1} parent=27 // pred_check_branch
        %5828 = sbr.rel (%p5826) target = $region32
      $region31: #{tpu_custom_call.1} parent=27 // pred_region
        %s5829 = smul.u32 32, %s13
      $region32: #{tpu_custom_call.1} parent=27 // pred_fallthru
        _
    $region28: #{tpu_custom_call.1} parent=5 // pred_fallthru
      _
    %p5830 = scmp.le.s32.totalorder 2, %s8
    // Predicated region
    $region33: #{tpu_custom_call.1} parent=5 // pred_check
      %p5831 = pneg %p5830
    $region34: #{tpu_custom_call.1} parent=5 // pred_check_branch
      %5833 = sbr.rel (%p5831) target = $region36
    $region35: #{tpu_custom_call.1} parent=5 // pred_region
      %s5834 = ssub.s32 %s8, 2
      // Predicated region
      $region37: #{tpu_custom_call.1} parent=35 // pred_check
        %p5835 = pneg %p84
      $region38: #{tpu_custom_call.1} parent=35 // pred_check_branch
        %5837 = sbr.rel (%p5835) target = $region40
      $region39: #{tpu_custom_call.1} parent=35 // pred_region
        %s5838 = smul.u32 32, %s14
        %p5839 = scmp.lt.s32.totalorder %s5838, 255
        %s5840 = scalar_select %p5839, %s5838, 255
        %s5841 = smul.addr %s5840, 8
        %s5842 = scalar_lea.vmem %s2, %s5841
      $region40: #{tpu_custom_call.1} parent=35 // pred_fallthru
        _
    $region36: #{tpu_custom_call.1} parent=5 // pred_fallthru
      _
  $region6: #{tpu_custom_call.1} parent=0 // loop_footer
    %s12 = sadd.s32 1, %s8
  $region7: #{tpu_custom_call.1} parent=0 // loop_footer_branch
    %7 = sbr.rel target = $region3
  $region8: #{tpu_custom_call.1} parent=0 // loop_exit
    _

</llo_original>
